<compile_context>
chip_gen: v5e
topology: v5e:2x2
jax: 0.10.0
libtpu: 0.0.40
codegen_flags: <defaults>
</compile_context>

<pallas_src>
import functools

import numpy as np
import jax
import jax.numpy as jnp
from jax import lax
from jax.experimental import pallas as pl
from jax.experimental.pallas import tpu as pltpu

MOD_TILE = 128   # lane-dense modifier tile width
LANE = 128
SUB = 8


def _round_up(x, m):
    return ((x + m - 1) // m) * m


# ----------------------------------------------------------------------------
# Fused kernel: BiLSTM encoder + factorized edge projections + score matrix.
# Gate order matches PyTorch nn.LSTM: [i, f, g, o].
# ----------------------------------------------------------------------------
def parser_kernel(x_ref, wih_f_ref, whh_f_ref, b_f_ref,
                  wih_b_ref, whh_b_ref, b_b_ref,
                  w1h_ref, w1mt_ref, b1_ref,
                  w2_ref, b2_ref,
                  s_ref,
                  hid, gin_f, gin_b, bt,
                  *, n_real):
    n_pad = x_ref.shape[0]            # multiple of 8 (sublane aligned)
    Hp = whh_f_ref.shape[0]           # per-gate, lane-aligned hidden width
    Dm = b1_ref.shape[1]              # edge-scorer MLP hidden width
    nc = s_ref.shape[1]               # modifier axis, multiple of 128

    # ---- hoisted input->hidden projections: one (n, D)@(D, 4Hp) per dir ----
    x = x_ref[...].astype(jnp.bfloat16)
    gin_f[...] = (jnp.dot(x, wih_f_ref[...], preferred_element_type=jnp.float32)
                  + b_f_ref[...])
    gin_b[...] = (jnp.dot(x, wih_b_ref[...], preferred_element_type=jnp.float32)
                  + b_b_ref[...])

    whh_f = whh_f_ref[...]            # (Hp, 4Hp) bf16, loop invariant
    whh_b = whh_b_ref[...]

    def cell(g, c_prev):
        # each gate sits in its own 128-lane-aligned Hp slot -> free slices
        i = jax.nn.sigmoid(g[:, 0 * Hp:1 * Hp])
        f = jax.nn.sigmoid(g[:, 1 * Hp:2 * Hp])
        g_hat = jnp.tanh(g[:, 2 * Hp:3 * Hp])
        o = jax.nn.sigmoid(g[:, 3 * Hp:4 * Hp])
        c_new = f * c_prev + i * g_hat
        h_new = o * jnp.tanh(c_new)
        return h_new, c_new

    # Forward & backward chains interleaved; recurrent state lives in the
    # fori_loop carry (vregs).  Hidden rows are staged and flushed as aligned
    # (8, Hp) tiles once per 8 steps.
    def chunk(ci, carry):
        hf, cf, hb, cb = carry
        base = pl.multiple_of(ci * SUB, SUB)
        rows_f = []
        rows_b = []
        for k in range(SUB):
            t = base + k
            tb = n_pad - 1 - t
            # forward direction
            g_f = gin_f[pl.ds(t, 1), :] + jnp.dot(
                hf.astype(jnp.bfloat16), whh_f, preferred_element_type=jnp.float32)
            hf_new, cf_new = cell(g_f, cf)
            ok_f = t < n_real
            hf = jnp.where(ok_f, hf_new, hf)
            cf = jnp.where(ok_f, cf_new, cf)
            rows_f.append(hf)
            # backward direction (padded steps come first -> keep state zero)
            g_b = gin_b[pl.ds(tb, 1), :] + jnp.dot(
                hb.astype(jnp.bfloat16), whh_b, preferred_element_type=jnp.float32)
            hb_new, cb_new = cell(g_b, cb)
            ok_b = tb < n_real
            hb = jnp.where(ok_b, hb_new, hb)
            cb = jnp.where(ok_b, cb_new, cb)
            rows_b.append(hb)
        hid[pl.ds(base, SUB), pl.ds(0, Hp)] = jnp.concatenate(rows_f, axis=0)
        back_base = pl.multiple_of(n_pad - SUB - base, SUB)
        hid[pl.ds(back_base, SUB), pl.ds(Hp, Hp)] = jnp.concatenate(
            rows_b[::-1], axis=0)
        return hf, cf, hb, cb

    z = jnp.zeros((1, Hp), jnp.float32)
    lax.fori_loop(0, n_pad // SUB, chunk, (z, z, z, z))

    # ---- factorized edge-scorer first layer (fc1 split along its 4H dim) ----
    #   fc1(cat(h_head, h_mod)) = h_head @ W1_head + h_mod @ W1_mod + b1
    h_all = hid[...].astype(jnp.bfloat16)                       # (n_pad, 2Hp)
    a_val = (jnp.dot(h_all, w1h_ref[...], preferred_element_type=jnp.float32)
             + b1_ref[...])                                     # (n_pad, Dm)
    # B transposed (mods on lanes), computed directly as W1_mod^T contracted
    # against hidden's last dim (no in-kernel data transpose needed).
    bt[...] = jnp.zeros_like(bt)
    bt_val = lax.dot_general(w1mt_ref[...], h_all,
                             dimension_numbers=(((1,), (1,)), ((), ())),
                             preferred_element_type=jnp.float32)  # (Dm, n_pad)
    bt[:, 0:n_pad] = bt_val

    # ---- edge scores: rank-1 accumulation over d, 128-wide modifier tiles ----
    #   S[h, m] = sum_d tanh(A[h, d] + Bt[d, m]) * w2[d] + b2
    w2_vals = [w2_ref[d] for d in range(Dm)]      # SMEM scalar loads, hoisted
    b2 = b2_ref[0]
    # TODO(synk): for very long sentences also tile the head axis here to
    # bound the per-tile working set on v7x (64 MiB VMEM).
    for j in range(nc // MOD_TILE):
        bt_tile = bt[:, j * MOD_TILE:(j + 1) * MOD_TILE]        # (Dm, 128)
        s = jnp.zeros((n_pad, MOD_TILE), jnp.float32)
        for d in range(Dm):
            s = s + w2_vals[d] * jnp.tanh(a_val[:, d:d + 1] + bt_tile[d:d + 1, :])
        s_ref[:, j * MOD_TILE:(j + 1) * MOD_TILE] = s + b2      # lane-dense store


# ----------------------------------------------------------------------------
# Loss (per-modifier softmax NLL over heads, == reference nll_loss) + greedy
# decode, fully vectorized on the padded score matrix.
# ----------------------------------------------------------------------------
def nll_loss_and_decode(scores, true_heads, n):
    n_rows, n_cols = scores.shape
    r = jnp.arange(n_rows)[:, None]
    c = jnp.arange(n_cols)[None, :]
    valid = (r < n) & (c < n) & (r != c)          # exclude padding and h == m
    masked = jnp.where(valid, scores, -jnp.inf)
    lse = jax.nn.logsumexp(masked, axis=0)        # per modifier, over heads
    mods = jnp.arange(1, n)
    heads = true_heads[1:]
    true_s = scores[heads, mods]
    loss = -(1.0 / (n - 1)) * jnp.sum(true_s - lse[mods])
    # TODO(synk): Chu-Liu/Edmonds MST not implemented; greedy argmax instead.
    pred = jnp.argmax(masked, axis=0)[:n].at[0].set(0)
    return loss, pred


# ----------------------------------------------------------------------------
# Jitted forward for a fixed sentence length.
# ----------------------------------------------------------------------------
def make_forward(meta, n_words):
    Hp, Dm = meta["Hp"], meta["Dm"]
    n_pad = max(SUB, _round_up(n_words, SUB))
    nc = max(MOD_TILE, _round_up(n_words, MOD_TILE))

    vmem = pl.BlockSpec(memory_space=pltpu.MemorySpace.VMEM)
    smem = pl.BlockSpec(memory_space=pltpu.MemorySpace.SMEM)

    score_call = pl.pallas_call(
        functools.partial(parser_kernel, n_real=n_words),
        out_shape=jax.ShapeDtypeStruct((n_pad, nc), jnp.float32),
        in_specs=[vmem] * 10 + [smem, smem],
        out_specs=vmem,
        scratch_shapes=[
            pltpu.VMEM((n_pad, 2 * Hp), jnp.float32),   # hidden (both dirs)
            pltpu.VMEM((n_pad, 4 * Hp), jnp.float32),   # hoisted gates fwd
            pltpu.VMEM((n_pad, 4 * Hp), jnp.float32),   # hoisted gates bwd
            pltpu.VMEM((Dm, nc), jnp.float32),          # B^T (mods on lanes)
        ],
        # explicit VMEM budget (tune per generation; v7x scoped default = 32MiB)
        compiler_params=pltpu.CompilerParams(vmem_limit_bytes=32 * 1024 * 1024),
    )

    @jax.jit
    def forward(p, word_idx, pos_idx, true_heads):
        w_emb = p["word_emb"][word_idx[0]]
        p_emb = p["pos_emb"][pos_idx[0]]
        x = jnp.concatenate([w_emb, p_emb], axis=-1).astype(jnp.float32)
        x = jnp.pad(x, ((0, n_pad - n_words), (0, 0)))
        scores = score_call(x,
                            p["wih_f"], p["whh_f"], p["b_f"],
                            p["wih_b"], p["whh_b"], p["b_b"],
                            p["w1_head"], p["w1_mod_t"], p["mlp_b1"],
                            p["mlp_w2"], p["mlp_b2"])
        loss, pred = nll_loss_and_decode(scores, true_heads, n_words)
        return loss, pred, scores

    return forward


# ----------------------------------------------------------------------------
# Parameter construction (synthetic init, shapes per the PyTorch __init__) and
# one-time preparation into the kernel layout (gate padding, bf16 casts).
# ----------------------------------------------------------------------------
def make_params(key, w_vocab, w_emb_dim, pos_vocab, pos_emb_dim,
                lstm_hid, mlp_hid):
    ks = jax.random.split(key, 13)
    input_dim = w_emb_dim + pos_emb_dim
    H = lstm_hid
    s_lstm = 1.0 / np.sqrt(H)
    s_mlp1 = 1.0 / np.sqrt(4 * H)
    s_mlp2 = 1.0 / np.sqrt(mlp_hid)

    def u(k, shape, scale):
        return jax.random.uniform(k, shape, jnp.float32, -scale, scale)

    return {
        "lstm_hid": H,
        "word_emb": jax.random.normal(ks[0], (w_vocab, w_emb_dim), jnp.float32),
        "pos_emb": jax.random.normal(ks[1], (pos_vocab, pos_emb_dim), jnp.float32),
        # LSTM weights pre-transposed to (in, 4H); b = b_ih + b_hh merged
        # (sum both biases when loading real PyTorch weights).
        "wih_f": u(ks[2], (input_dim, 4 * H), s_lstm),
        "whh_f": u(ks[3], (H, 4 * H), s_lstm),
        "b_f":   u(ks[4], (1, 4 * H), s_lstm),
        "wih_b": u(ks[5], (input_dim, 4 * H), s_lstm),
        "whh_b": u(ks[6], (H, 4 * H), s_lstm),
        "b_b":   u(ks[7], (1, 4 * H), s_lstm),
        # edge scorer fc1 pre-split along its 4H input dim
        "w1_head": u(ks[8], (2 * H, mlp_hid), s_mlp1),
        "w1_mod":  u(ks[9], (2 * H, mlp_hid), s_mlp1),
        "mlp_b1":  u(ks[10], (1, mlp_hid), s_mlp1),
        "mlp_w2":  u(ks[11], (1, mlp_hid), s_mlp2),
        "mlp_b2":  u(ks[12], (1, 1), s_mlp2),
    }


def prepare_params(params):
    """Pad gates to lane-aligned slots, split fc1 rows to the padded hidden
    layout, pre-transpose W1_mod, cast matmul weights to bf16."""
    H = params["lstm_hid"]
    Hp = _round_up(H, LANE)
    Dm = params["w1_head"].shape[1]
    bf = jnp.bfloat16

    def pad_gate_cols(w):             # (..., 4H) -> (..., 4Hp), zeros in pads
        parts = []
        for g in range(4):
            blk = w[..., g * H:(g + 1) * H]
            pad_cfg = [(0, 0)] * (w.ndim - 1) + [(0, Hp - H)]
            parts.append(jnp.pad(blk, pad_cfg))
        return jnp.concatenate(parts, axis=-1)

    def pad_rows_to(w, rows):
        return jnp.pad(w, ((0, rows - w.shape[0]), (0, 0)))

    def split_pad_hidden_rows(w):     # (2H, Dm) -> (2Hp, Dm)
        return jnp.concatenate([pad_rows_to(w[:H], Hp),
                                pad_rows_to(w[H:], Hp)], axis=0)

    prep = {
        "word_emb": params["word_emb"],
        "pos_emb": params["pos_emb"],
        "wih_f": pad_gate_cols(params["wih_f"]).astype(bf),
        "whh_f": pad_rows_to(pad_gate_cols(params["whh_f"]), Hp).astype(bf),
        "b_f":   pad_gate_cols(params["b_f"]),
        "wih_b": pad_gate_cols(params["wih_b"]).astype(bf),
        "whh_b": pad_rows_to(pad_gate_cols(params["whh_b"]), Hp).astype(bf),
        "b_b":   pad_gate_cols(params["b_b"]),
        "w1_head":  split_pad_hidden_rows(params["w1_head"]).astype(bf),
        "w1_mod_t": split_pad_hidden_rows(params["w1_mod"]).T.astype(bf),
        "mlp_b1": params["mlp_b1"],
        "mlp_w2": params["mlp_w2"].reshape(-1),     # (Dm,) for SMEM
        "mlp_b2": params["mlp_b2"].reshape(-1),     # (1,)  for SMEM
    }
    meta = {"H": H, "Hp": Hp, "Dm": Dm, "D": params["wih_f"].shape[0]}
    return prep, meta


# ----------------------------------------------------------------------------
# Pure-JAX reference (same bf16-matmul / f32-accumulate policy) — plumbing
# correctness check only.
# ----------------------------------------------------------------------------
def reference_forward(params, word_idx, pos_idx, true_heads):
    H = params["lstm_hid"]
    bf = jnp.bfloat16
    w_emb = params["word_emb"][word_idx[0]]
    p_emb = params["pos_emb"][pos_idx[0]]
    x = jnp.concatenate([w_emb, p_emb], axis=-1).astype(jnp.float32)
    n = x.shape[0]

    def run_dir(xs, wih, whh, b):
        gin = (jnp.dot(xs.astype(bf), wih.astype(bf),
                       preferred_element_type=jnp.float32) + b)

        def step(carry, g_row):
            h, c = carry
            g = g_row + jnp.dot(h.astype(bf), whh.astype(bf),
                                preferred_element_type=jnp.float32)
            i = jax.nn.sigmoid(g[:, 0 * H:1 * H])
            f = jax.nn.sigmoid(g[:, 1 * H:2 * H])
            gh = jnp.tanh(g[:, 2 * H:3 * H])
            o = jax.nn.sigmoid(g[:, 3 * H:4 * H])
            c = f * c + i * gh
            h = o * jnp.tanh(c)
            return (h, c), h[0]

        init = (jnp.zeros((1, H), jnp.float32), jnp.zeros((1, H), jnp.float32))
        _, hs = lax.scan(step, init, gin[:, None, :])
        return hs

    h_f = run_dir(x, params["wih_f"], params["whh_f"], params["b_f"])
    h_b = run_dir(x[::-1], params["wih_b"], params["whh_b"], params["b_b"])[::-1]
    hid = jnp.concatenate([h_f, h_b], axis=-1)

    a = (jnp.dot(hid.astype(bf), params["w1_head"].astype(bf),
                 preferred_element_type=jnp.float32) + params["mlp_b1"])
    bm = jnp.dot(hid.astype(bf), params["w1_mod"].astype(bf),
                 preferred_element_type=jnp.float32)
    w2 = params["mlp_w2"][0]
    b2 = params["mlp_b2"][0, 0]
    scores = jnp.tensordot(jnp.tanh(a[:, None, :] + bm[None, :, :]), w2,
                           axes=([2], [0])) + b2
    loss, pred = nll_loss_and_decode(scores, true_heads, n)
    return loss, pred, scores


# ----------------------------------------------------------------------------
if __name__ == "__main__":
    key = jax.random.PRNGKey(0)
    k_param, k_word, k_pos = jax.random.split(key, 3)

    # small config
    w_vocab, w_emb_dim = 50, 16
    pos_vocab, pos_emb_dim = 12, 8
    lstm_hid, mlp_hid = 32, 32
    n_words = 8

    params = make_params(k_param, w_vocab, w_emb_dim, pos_vocab, pos_emb_dim,
                         lstm_hid, mlp_hid)
    prep, meta = prepare_params(params)
    forward = make_forward(meta, n_words)

    word_idx = jax.random.randint(k_word, (1, n_words), 0, w_vocab)
    pos_idx = jax.random.randint(k_pos, (1, n_words), 0, pos_vocab)
    # deterministic gold tree: head of word m is m-1 (a chain), root head = 0
    true_tree = jnp.concatenate(
        [jnp.zeros((1,), jnp.int32),
         jnp.arange(0, n_words - 1, dtype=jnp.int32)])

    loss, pred, scores = forward(prep, word_idx, pos_idx, true_tree)
    loss = jax.block_until_ready(loss)

    # plumbing check against a pure-JAX reference with the same dtype policy
    ref_loss, _, ref_scores = reference_forward(params, word_idx, pos_idx,
                                                true_tree)
    kern_scores = np.asarray(scores)[:n_words, :n_words]
    assert np.allclose(kern_scores, np.asarray(ref_scores),
                       rtol=2e-2, atol=2e-2)
    assert np.allclose(float(loss), float(ref_loss), rtol=2e-2, atol=2e-2)

    pred_np = np.asarray(jax.device_get(pred))
    assert np.isfinite(float(loss))
    assert pred_np.shape == (n_words,)
    print("KERNEL_OK")
</pallas_src>

<mosaic_0001>
module attributes {stable_mosaic.version = 11 : i64} {
  func.func @parser_kernel(%arg0: memref<8x24xf32, #tpu.memory_space<vmem>>, %arg1: memref<24x512xbf16, #tpu.memory_space<vmem>>, %arg2: memref<128x512xbf16, #tpu.memory_space<vmem>>, %arg3: memref<1x512xf32, #tpu.memory_space<vmem>>, %arg4: memref<24x512xbf16, #tpu.memory_space<vmem>>, %arg5: memref<128x512xbf16, #tpu.memory_space<vmem>>, %arg6: memref<1x512xf32, #tpu.memory_space<vmem>>, %arg7: memref<256x32xbf16, #tpu.memory_space<vmem>>, %arg8: memref<32x256xbf16, #tpu.memory_space<vmem>>, %arg9: memref<1x32xf32, #tpu.memory_space<vmem>>, %arg10: memref<32xf32, #tpu.memory_space<smem>>, %arg11: memref<1xf32, #tpu.memory_space<smem>>, %arg12: memref<8x128xf32, #tpu.memory_space<vmem>>, %arg13: memref<8x256xf32, #tpu.memory_space<vmem>>, %arg14: memref<8x512xf32, #tpu.memory_space<vmem>>, %arg15: memref<8x512xf32, #tpu.memory_space<vmem>>, %arg16: memref<32x128xf32, #tpu.memory_space<vmem>>) attributes {dimension_semantics = [], scalar_prefetch = 0 : i64, scratch_operands = 4 : i64, tpu.core_type = #tpu.core_type<tc>} {
    %c0 = arith.constant 0 : index
    %c0_0 = arith.constant 0 : index
    %0 = vector.load %arg0[%c0, %c0_0] : memref<8x24xf32, #tpu.memory_space<vmem>>, vector<8x24xf32>
    %1 = arith.truncf %0 : vector<8x24xf32> to vector<8x24xbf16>
    %c0_1 = arith.constant 0 : index
    %c0_2 = arith.constant 0 : index
    %2 = vector.load %arg1[%c0_1, %c0_2] : memref<24x512xbf16, #tpu.memory_space<vmem>>, vector<24x512xbf16>
    %cst = arith.constant dense<0.000000e+00> : vector<8x512xf32>
    %3 = tpu.matmul %1, %2, %cst {dimension_numbers = #tpu.dot_dimension_numbers<[1], [0], [0], [1], [0, 0, 1, 1], [], []>} : vector<8x24xbf16>, vector<24x512xbf16>, vector<8x512xf32> -> vector<8x512xf32>
    %c0_3 = arith.constant 0 : index
    %c0_4 = arith.constant 0 : index
    %4 = vector.load %arg3[%c0_3, %c0_4] : memref<1x512xf32, #tpu.memory_space<vmem>>, vector<1x512xf32>
    %5 = vector.broadcast %4 : vector<1x512xf32> to vector<8x512xf32>
    %6 = arith.addf %3, %5 : vector<8x512xf32>
    %c0_5 = arith.constant 0 : index
    %c0_6 = arith.constant 0 : index
    %7 = vector.load %arg14[%c0_5, %c0_6] : memref<8x512xf32, #tpu.memory_space<vmem>>, vector<8x512xf32>
    tpu.vector_store %arg14[%c0_5, %c0_6], %6 {strides = array<i32>} : memref<8x512xf32, #tpu.memory_space<vmem>>, vector<8x512xf32>,
    %c0_7 = arith.constant 0 : index
    %c0_8 = arith.constant 0 : index
    %8 = vector.load %arg4[%c0_7, %c0_8] : memref<24x512xbf16, #tpu.memory_space<vmem>>, vector<24x512xbf16>
    %cst_9 = arith.constant dense<0.000000e+00> : vector<8x512xf32>
    %9 = tpu.matmul %1, %8, %cst_9 {dimension_numbers = #tpu.dot_dimension_numbers<[1], [0], [0], [1], [0, 0, 1, 1], [], []>} : vector<8x24xbf16>, vector<24x512xbf16>, vector<8x512xf32> -> vector<8x512xf32>
    %c0_10 = arith.constant 0 : index
    %c0_11 = arith.constant 0 : index
    %10 = vector.load %arg6[%c0_10, %c0_11] : memref<1x512xf32, #tpu.memory_space<vmem>>, vector<1x512xf32>
    %11 = vector.broadcast %10 : vector<1x512xf32> to vector<8x512xf32>
    %12 = arith.addf %9, %11 : vector<8x512xf32>
    %c0_12 = arith.constant 0 : index
    %c0_13 = arith.constant 0 : index
    %13 = vector.load %arg15[%c0_12, %c0_13] : memref<8x512xf32, #tpu.memory_space<vmem>>, vector<8x512xf32>
    tpu.vector_store %arg15[%c0_12, %c0_13], %12 {strides = array<i32>} : memref<8x512xf32, #tpu.memory_space<vmem>>, vector<8x512xf32>,
    %c0_14 = arith.constant 0 : index
    %c0_15 = arith.constant 0 : index
    %14 = vector.load %arg2[%c0_14, %c0_15] : memref<128x512xbf16, #tpu.memory_space<vmem>>, vector<128x512xbf16>
    %c0_16 = arith.constant 0 : index
    %c0_17 = arith.constant 0 : index
    %15 = vector.load %arg5[%c0_16, %c0_17] : memref<128x512xbf16, #tpu.memory_space<vmem>>, vector<128x512xbf16>
    %cst_18 = arith.constant 0.000000e+00 : f32
    %16 = vector.broadcast %cst_18 : f32 to vector<1x128xf32>
    %c0_i32 = arith.constant 0 : i32
    %c8_i32 = arith.constant 8 : i32
    %17 = arith.muli %c0_i32, %c8_i32 : i32
    %18 = tpu.assume_multiple %17, 8 : i32
    %c0_i32_19 = arith.constant 0 : i32
    %19 = arith.addi %18, %c0_i32_19 : i32
    %c7_i32 = arith.constant 7 : i32
    %20 = arith.subi %c7_i32, %19 : i32
    %21 = arith.index_cast %19 : i32 to index
    %c0_20 = arith.constant 0 : index
    %22 = vector.load %arg14[%21, %c0_20] : memref<8x512xf32, #tpu.memory_space<vmem>>, vector<1x512xf32>
    %23 = arith.truncf %16 : vector<1x128xf32> to vector<1x128xbf16>
    %cst_21 = arith.constant dense<0.000000e+00> : vector<1x512xf32>
    %24 = tpu.matmul %23, %14, %cst_21 {dimension_numbers = #tpu.dot_dimension_numbers<[1], [0], [0], [1], [0, 0, 1, 1], [], []>} : vector<1x128xbf16>, vector<128x512xbf16>, vector<1x512xf32> -> vector<1x512xf32>
    %25 = arith.addf %22, %24 : vector<1x512xf32>
    %26 = vector.extract_strided_slice %25 {offsets = [0, 0], sizes = [1, 128], strides = [1, 1]} : vector<1x512xf32> to vector<1x128xf32>
    %27 = arith.negf %26 : vector<1x128xf32>
    %28 = math.exp %27 : vector<1x128xf32>
    %cst_22 = arith.constant 1.000000e+00 : f32
    %29 = vector.broadcast %cst_22 : f32 to vector<1x128xf32>
    %30 = arith.addf %29, %28 : vector<1x128xf32>
    %31 = arith.divf %29, %30 : vector<1x128xf32>
    %32 = vector.extract_strided_slice %25 {offsets = [0, 128], sizes = [1, 128], strides = [1, 1]} : vector<1x512xf32> to vector<1x128xf32>
    %33 = arith.negf %32 : vector<1x128xf32>
    %34 = math.exp %33 : vector<1x128xf32>
    %cst_23 = arith.constant 1.000000e+00 : f32
    %35 = vector.broadcast %cst_23 : f32 to vector<1x128xf32>
    %36 = arith.addf %35, %34 : vector<1x128xf32>
    %37 = arith.divf %35, %36 : vector<1x128xf32>
    %38 = vector.extract_strided_slice %25 {offsets = [0, 256], sizes = [1, 128], strides = [1, 1]} : vector<1x512xf32> to vector<1x128xf32>
    %39 = math.tanh %38 : vector<1x128xf32>
    %40 = vector.extract_strided_slice %25 {offsets = [0, 384], sizes = [1, 128], strides = [1, 1]} : vector<1x512xf32> to vector<1x128xf32>
    %41 = arith.negf %40 : vector<1x128xf32>
    %42 = math.exp %41 : vector<1x128xf32>
    %cst_24 = arith.constant 1.000000e+00 : f32
    %43 = vector.broadcast %cst_24 : f32 to vector<1x128xf32>
    %44 = arith.addf %43, %42 : vector<1x128xf32>
    %45 = arith.divf %43, %44 : vector<1x128xf32>
    %46 = arith.mulf %37, %16 : vector<1x128xf32>
    %47 = arith.mulf %31, %39 : vector<1x128xf32>
    %48 = arith.addf %46, %47 : vector<1x128xf32>
    %49 = math.tanh %48 : vector<1x128xf32>
    %50 = arith.mulf %45, %49 : vector<1x128xf32>
    %c8_i32_25 = arith.constant 8 : i32
    %51 = arith.cmpi slt, %19, %c8_i32_25 : i32
    %52 = arith.select %51, %50, %16 : vector<1x128xf32>
    %53 = arith.select %51, %48, %16 : vector<1x128xf32>
    %54 = arith.index_cast %20 : i32 to index
    %c0_26 = arith.constant 0 : index
    %55 = vector.load %arg15[%54, %c0_26] : memref<8x512xf32, #tpu.memory_space<vmem>>, vector<1x512xf32>
    %56 = arith.truncf %16 : vector<1x128xf32> to vector<1x128xbf16>
    %cst_27 = arith.constant dense<0.000000e+00> : vector<1x512xf32>
    %57 = tpu.matmul %56, %15, %cst_27 {dimension_numbers = #tpu.dot_dimension_numbers<[1], [0], [0], [1], [0, 0, 1, 1], [], []>} : vector<1x128xbf16>, vector<128x512xbf16>, vector<1x512xf32> -> vector<1x512xf32>
    %58 = arith.addf %55, %57 : vector<1x512xf32>
    %59 = vector.extract_strided_slice %58 {offsets = [0, 0], sizes = [1, 128], strides = [1, 1]} : vector<1x512xf32> to vector<1x128xf32>
    %60 = arith.negf %59 : vector<1x128xf32>
    %61 = math.exp %60 : vector<1x128xf32>
    %cst_28 = arith.constant 1.000000e+00 : f32
    %62 = vector.broadcast %cst_28 : f32 to vector<1x128xf32>
    %63 = arith.addf %62, %61 : vector<1x128xf32>
    %64 = arith.divf %62, %63 : vector<1x128xf32>
    %65 = vector.extract_strided_slice %58 {offsets = [0, 128], sizes = [1, 128], strides = [1, 1]} : vector<1x512xf32> to vector<1x128xf32>
    %66 = arith.negf %65 : vector<1x128xf32>
    %67 = math.exp %66 : vector<1x128xf32>
    %cst_29 = arith.constant 1.000000e+00 : f32
    %68 = vector.broadcast %cst_29 : f32 to vector<1x128xf32>
    %69 = arith.addf %68, %67 : vector<1x128xf32>
    %70 = arith.divf %68, %69 : vector<1x128xf32>
    %71 = vector.extract_strided_slice %58 {offsets = [0, 256], sizes = [1, 128], strides = [1, 1]} : vector<1x512xf32> to vector<1x128xf32>
    %72 = math.tanh %71 : vector<1x128xf32>
    %73 = vector.extract_strided_slice %58 {offsets = [0, 384], sizes = [1, 128], strides = [1, 1]} : vector<1x512xf32> to vector<1x128xf32>
    %74 = arith.negf %73 : vector<1x128xf32>
    %75 = math.exp %74 : vector<1x128xf32>
    %cst_30 = arith.constant 1.000000e+00 : f32
    %76 = vector.broadcast %cst_30 : f32 to vector<1x128xf32>
    %77 = arith.addf %76, %75 : vector<1x128xf32>
    %78 = arith.divf %76, %77 : vector<1x128xf32>
    %79 = arith.mulf %70, %16 : vector<1x128xf32>
    %80 = arith.mulf %64, %72 : vector<1x128xf32>
    %81 = arith.addf %79, %80 : vector<1x128xf32>
    %82 = math.tanh %81 : vector<1x128xf32>
    %83 = arith.mulf %78, %82 : vector<1x128xf32>
    %c8_i32_31 = arith.constant 8 : i32
    %84 = arith.cmpi slt, %20, %c8_i32_31 : i32
    %85 = arith.select %84, %83, %16 : vector<1x128xf32>
    %86 = arith.select %84, %81, %16 : vector<1x128xf32>
    %c1_i32 = arith.constant 1 : i32
    %87 = arith.addi %18, %c1_i32 : i32
    %c7_i32_32 = arith.constant 7 : i32
    %88 = arith.subi %c7_i32_32, %87 : i32
    %89 = arith.index_cast %87 : i32 to index
    %c0_33 = arith.constant 0 : index
    %90 = vector.load %arg14[%89, %c0_33] : memref<8x512xf32, #tpu.memory_space<vmem>>, vector<1x512xf32>
    %91 = arith.truncf %52 : vector<1x128xf32> to vector<1x128xbf16>
    %cst_34 = arith.constant dense<0.000000e+00> : vector<1x512xf32>
    %92 = tpu.matmul %91, %14, %cst_34 {dimension_numbers = #tpu.dot_dimension_numbers<[1], [0], [0], [1], [0, 0, 1, 1], [], []>} : vector<1x128xbf16>, vector<128x512xbf16>, vector<1x512xf32> -> vector<1x512xf32>
    %93 = arith.addf %90, %92 : vector<1x512xf32>
    %94 = vector.extract_strided_slice %93 {offsets = [0, 0], sizes = [1, 128], strides = [1, 1]} : vector<1x512xf32> to vector<1x128xf32>
    %95 = arith.negf %94 : vector<1x128xf32>
    %96 = math.exp %95 : vector<1x128xf32>
    %cst_35 = arith.constant 1.000000e+00 : f32
    %97 = vector.broadcast %cst_35 : f32 to vector<1x128xf32>
    %98 = arith.addf %97, %96 : vector<1x128xf32>
    %99 = arith.divf %97, %98 : vector<1x128xf32>
    %100 = vector.extract_strided_slice %93 {offsets = [0, 128], sizes = [1, 128], strides = [1, 1]} : vector<1x512xf32> to vector<1x128xf32>
    %101 = arith.negf %100 : vector<1x128xf32>
    %102 = math.exp %101 : vector<1x128xf32>
    %cst_36 = arith.constant 1.000000e+00 : f32
    %103 = vector.broadcast %cst_36 : f32 to vector<1x128xf32>
    %104 = arith.addf %103, %102 : vector<1x128xf32>
    %105 = arith.divf %103, %104 : vector<1x128xf32>
    %106 = vector.extract_strided_slice %93 {offsets = [0, 256], sizes = [1, 128], strides = [1, 1]} : vector<1x512xf32> to vector<1x128xf32>
    %107 = math.tanh %106 : vector<1x128xf32>
    %108 = vector.extract_strided_slice %93 {offsets = [0, 384], sizes = [1, 128], strides = [1, 1]} : vector<1x512xf32> to vector<1x128xf32>
    %109 = arith.negf %108 : vector<1x128xf32>
    %110 = math.exp %109 : vector<1x128xf32>
    %cst_37 = arith.constant 1.000000e+00 : f32
    %111 = vector.broadcast %cst_37 : f32 to vector<1x128xf32>
    %112 = arith.addf %111, %110 : vector<1x128xf32>
    %113 = arith.divf %111, %112 : vector<1x128xf32>
    %114 = arith.mulf %105, %53 : vector<1x128xf32>
    %115 = arith.mulf %99, %107 : vector<1x128xf32>
    %116 = arith.addf %114, %115 : vector<1x128xf32>
    %117 = math.tanh %116 : vector<1x128xf32>
    %118 = arith.mulf %113, %117 : vector<1x128xf32>
    %c8_i32_38 = arith.constant 8 : i32
    %119 = arith.cmpi slt, %87, %c8_i32_38 : i32
    %120 = arith.select %119, %118, %52 : vector<1x128xf32>
    %121 = arith.select %119, %116, %53 : vector<1x128xf32>
    %122 = arith.index_cast %88 : i32 to index
    %c0_39 = arith.constant 0 : index
    %123 = vector.load %arg15[%122, %c0_39] : memref<8x512xf32, #tpu.memory_space<vmem>>, vector<1x512xf32>
    %124 = arith.truncf %85 : vector<1x128xf32> to vector<1x128xbf16>
    %cst_40 = arith.constant dense<0.000000e+00> : vector<1x512xf32>
    %125 = tpu.matmul %124, %15, %cst_40 {dimension_numbers = #tpu.dot_dimension_numbers<[1], [0], [0], [1], [0, 0, 1, 1], [], []>} : vector<1x128xbf16>, vector<128x512xbf16>, vector<1x512xf32> -> vector<1x512xf32>
    %126 = arith.addf %123, %125 : vector<1x512xf32>
    %127 = vector.extract_strided_slice %126 {offsets = [0, 0], sizes = [1, 128], strides = [1, 1]} : vector<1x512xf32> to vector<1x128xf32>
    %128 = arith.negf %127 : vector<1x128xf32>
    %129 = math.exp %128 : vector<1x128xf32>
    %cst_41 = arith.constant 1.000000e+00 : f32
    %130 = vector.broadcast %cst_41 : f32 to vector<1x128xf32>
    %131 = arith.addf %130, %129 : vector<1x128xf32>
    %132 = arith.divf %130, %131 : vector<1x128xf32>
    %133 = vector.extract_strided_slice %126 {offsets = [0, 128], sizes = [1, 128], strides = [1, 1]} : vector<1x512xf32> to vector<1x128xf32>
    %134 = arith.negf %133 : vector<1x128xf32>
    %135 = math.exp %134 : vector<1x128xf32>
    %cst_42 = arith.constant 1.000000e+00 : f32
    %136 = vector.broadcast %cst_42 : f32 to vector<1x128xf32>
    %137 = arith.addf %136, %135 : vector<1x128xf32>
    %138 = arith.divf %136, %137 : vector<1x128xf32>
    %139 = vector.extract_strided_slice %126 {offsets = [0, 256], sizes = [1, 128], strides = [1, 1]} : vector<1x512xf32> to vector<1x128xf32>
    %140 = math.tanh %139 : vector<1x128xf32>
    %141 = vector.extract_strided_slice %126 {offsets = [0, 384], sizes = [1, 128], strides = [1, 1]} : vector<1x512xf32> to vector<1x128xf32>
    %142 = arith.negf %141 : vector<1x128xf32>
    %143 = math.exp %142 : vector<1x128xf32>
    %cst_43 = arith.constant 1.000000e+00 : f32
    %144 = vector.broadcast %cst_43 : f32 to vector<1x128xf32>
    %145 = arith.addf %144, %143 : vector<1x128xf32>
    %146 = arith.divf %144, %145 : vector<1x128xf32>
    %147 = arith.mulf %138, %86 : vector<1x128xf32>
    %148 = arith.mulf %132, %140 : vector<1x128xf32>
    %149 = arith.addf %147, %148 : vector<1x128xf32>
    %150 = math.tanh %149 : vector<1x128xf32>
    %151 = arith.mulf %146, %150 : vector<1x128xf32>
    %c8_i32_44 = arith.constant 8 : i32
    %152 = arith.cmpi slt, %88, %c8_i32_44 : i32
    %153 = arith.select %152, %151, %85 : vector<1x128xf32>
    %154 = arith.select %152, %149, %86 : vector<1x128xf32>
    %c2_i32 = arith.constant 2 : i32
    %155 = arith.addi %18, %c2_i32 : i32
    %c7_i32_45 = arith.constant 7 : i32
    %156 = arith.subi %c7_i32_45, %155 : i32
    %157 = arith.index_cast %155 : i32 to index
    %c0_46 = arith.constant 0 : index
    %158 = vector.load %arg14[%157, %c0_46] : memref<8x512xf32, #tpu.memory_space<vmem>>, vector<1x512xf32>
    %159 = arith.truncf %120 : vector<1x128xf32> to vector<1x128xbf16>
    %cst_47 = arith.constant dense<0.000000e+00> : vector<1x512xf32>
    %160 = tpu.matmul %159, %14, %cst_47 {dimension_numbers = #tpu.dot_dimension_numbers<[1], [0], [0], [1], [0, 0, 1, 1], [], []>} : vector<1x128xbf16>, vector<128x512xbf16>, vector<1x512xf32> -> vector<1x512xf32>
    %161 = arith.addf %158, %160 : vector<1x512xf32>
    %162 = vector.extract_strided_slice %161 {offsets = [0, 0], sizes = [1, 128], strides = [1, 1]} : vector<1x512xf32> to vector<1x128xf32>
    %163 = arith.negf %162 : vector<1x128xf32>
    %164 = math.exp %163 : vector<1x128xf32>
    %cst_48 = arith.constant 1.000000e+00 : f32
    %165 = vector.broadcast %cst_48 : f32 to vector<1x128xf32>
    %166 = arith.addf %165, %164 : vector<1x128xf32>
    %167 = arith.divf %165, %166 : vector<1x128xf32>
    %168 = vector.extract_strided_slice %161 {offsets = [0, 128], sizes = [1, 128], strides = [1, 1]} : vector<1x512xf32> to vector<1x128xf32>
    %169 = arith.negf %168 : vector<1x128xf32>
    %170 = math.exp %169 : vector<1x128xf32>
    %cst_49 = arith.constant 1.000000e+00 : f32
    %171 = vector.broadcast %cst_49 : f32 to vector<1x128xf32>
    %172 = arith.addf %171, %170 : vector<1x128xf32>
    %173 = arith.divf %171, %172 : vector<1x128xf32>
    %174 = vector.extract_strided_slice %161 {offsets = [0, 256], sizes = [1, 128], strides = [1, 1]} : vector<1x512xf32> to vector<1x128xf32>
    %175 = math.tanh %174 : vector<1x128xf32>
    %176 = vector.extract_strided_slice %161 {offsets = [0, 384], sizes = [1, 128], strides = [1, 1]} : vector<1x512xf32> to vector<1x128xf32>
    %177 = arith.negf %176 : vector<1x128xf32>
    %178 = math.exp %177 : vector<1x128xf32>
    %cst_50 = arith.constant 1.000000e+00 : f32
    %179 = vector.broadcast %cst_50 : f32 to vector<1x128xf32>
    %180 = arith.addf %179, %178 : vector<1x128xf32>
    %181 = arith.divf %179, %180 : vector<1x128xf32>
    %182 = arith.mulf %173, %121 : vector<1x128xf32>
    %183 = arith.mulf %167, %175 : vector<1x128xf32>
    %184 = arith.addf %182, %183 : vector<1x128xf32>
    %185 = math.tanh %184 : vector<1x128xf32>
    %186 = arith.mulf %181, %185 : vector<1x128xf32>
    %c8_i32_51 = arith.constant 8 : i32
    %187 = arith.cmpi slt, %155, %c8_i32_51 : i32
    %188 = arith.select %187, %186, %120 : vector<1x128xf32>
    %189 = arith.select %187, %184, %121 : vector<1x128xf32>
    %190 = arith.index_cast %156 : i32 to index
    %c0_52 = arith.constant 0 : index
    %191 = vector.load %arg15[%190, %c0_52] : memref<8x512xf32, #tpu.memory_space<vmem>>, vector<1x512xf32>
    %192 = arith.truncf %153 : vector<1x128xf32> to vector<1x128xbf16>
    %cst_53 = arith.constant dense<0.000000e+00> : vector<1x512xf32>
    %193 = tpu.matmul %192, %15, %cst_53 {dimension_numbers = #tpu.dot_dimension_numbers<[1], [0], [0], [1], [0, 0, 1, 1], [], []>} : vector<1x128xbf16>, vector<128x512xbf16>, vector<1x512xf32> -> vector<1x512xf32>
    %194 = arith.addf %191, %193 : vector<1x512xf32>
    %195 = vector.extract_strided_slice %194 {offsets = [0, 0], sizes = [1, 128], strides = [1, 1]} : vector<1x512xf32> to vector<1x128xf32>
    %196 = arith.negf %195 : vector<1x128xf32>
    %197 = math.exp %196 : vector<1x128xf32>
    %cst_54 = arith.constant 1.000000e+00 : f32
    %198 = vector.broadcast %cst_54 : f32 to vector<1x128xf32>
    %199 = arith.addf %198, %197 : vector<1x128xf32>
    %200 = arith.divf %198, %199 : vector<1x128xf32>
    %201 = vector.extract_strided_slice %194 {offsets = [0, 128], sizes = [1, 128], strides = [1, 1]} : vector<1x512xf32> to vector<1x128xf32>
    %202 = arith.negf %201 : vector<1x128xf32>
    %203 = math.exp %202 : vector<1x128xf32>
    %cst_55 = arith.constant 1.000000e+00 : f32
    %204 = vector.broadcast %cst_55 : f32 to vector<1x128xf32>
    %205 = arith.addf %204, %203 : vector<1x128xf32>
    %206 = arith.divf %204, %205 : vector<1x128xf32>
    %207 = vector.extract_strided_slice %194 {offsets = [0, 256], sizes = [1, 128], strides = [1, 1]} : vector<1x512xf32> to vector<1x128xf32>
    %208 = math.tanh %207 : vector<1x128xf32>
    %209 = vector.extract_strided_slice %194 {offsets = [0, 384], sizes = [1, 128], strides = [1, 1]} : vector<1x512xf32> to vector<1x128xf32>
    %210 = arith.negf %209 : vector<1x128xf32>
    %211 = math.exp %210 : vector<1x128xf32>
    %cst_56 = arith.constant 1.000000e+00 : f32
    %212 = vector.broadcast %cst_56 : f32 to vector<1x128xf32>
    %213 = arith.addf %212, %211 : vector<1x128xf32>
    %214 = arith.divf %212, %213 : vector<1x128xf32>
    %215 = arith.mulf %206, %154 : vector<1x128xf32>
    %216 = arith.mulf %200, %208 : vector<1x128xf32>
    %217 = arith.addf %215, %216 : vector<1x128xf32>
    %218 = math.tanh %217 : vector<1x128xf32>
    %219 = arith.mulf %214, %218 : vector<1x128xf32>
    %c8_i32_57 = arith.constant 8 : i32
    %220 = arith.cmpi slt, %156, %c8_i32_57 : i32
    %221 = arith.select %220, %219, %153 : vector<1x128xf32>
    %222 = arith.select %220, %217, %154 : vector<1x128xf32>
    %c3_i32 = arith.constant 3 : i32
    %223 = arith.addi %18, %c3_i32 : i32
    %c7_i32_58 = arith.constant 7 : i32
    %224 = arith.subi %c7_i32_58, %223 : i32
    %225 = arith.index_cast %223 : i32 to index
    %c0_59 = arith.constant 0 : index
    %226 = vector.load %arg14[%225, %c0_59] : memref<8x512xf32, #tpu.memory_space<vmem>>, vector<1x512xf32>
    %227 = arith.truncf %188 : vector<1x128xf32> to vector<1x128xbf16>
    %cst_60 = arith.constant dense<0.000000e+00> : vector<1x512xf32>
    %228 = tpu.matmul %227, %14, %cst_60 {dimension_numbers = #tpu.dot_dimension_numbers<[1], [0], [0], [1], [0, 0, 1, 1], [], []>} : vector<1x128xbf16>, vector<128x512xbf16>, vector<1x512xf32> -> vector<1x512xf32>
    %229 = arith.addf %226, %228 : vector<1x512xf32>
    %230 = vector.extract_strided_slice %229 {offsets = [0, 0], sizes = [1, 128], strides = [1, 1]} : vector<1x512xf32> to vector<1x128xf32>
    %231 = arith.negf %230 : vector<1x128xf32>
    %232 = math.exp %231 : vector<1x128xf32>
    %cst_61 = arith.constant 1.000000e+00 : f32
    %233 = vector.broadcast %cst_61 : f32 to vector<1x128xf32>
    %234 = arith.addf %233, %232 : vector<1x128xf32>
    %235 = arith.divf %233, %234 : vector<1x128xf32>
    %236 = vector.extract_strided_slice %229 {offsets = [0, 128], sizes = [1, 128], strides = [1, 1]} : vector<1x512xf32> to vector<1x128xf32>
    %237 = arith.negf %236 : vector<1x128xf32>
    %238 = math.exp %237 : vector<1x128xf32>
    %cst_62 = arith.constant 1.000000e+00 : f32
    %239 = vector.broadcast %cst_62 : f32 to vector<1x128xf32>
    %240 = arith.addf %239, %238 : vector<1x128xf32>
    %241 = arith.divf %239, %240 : vector<1x128xf32>
    %242 = vector.extract_strided_slice %229 {offsets = [0, 256], sizes = [1, 128], strides = [1, 1]} : vector<1x512xf32> to vector<1x128xf32>
    %243 = math.tanh %242 : vector<1x128xf32>
    %244 = vector.extract_strided_slice %229 {offsets = [0, 384], sizes = [1, 128], strides = [1, 1]} : vector<1x512xf32> to vector<1x128xf32>
    %245 = arith.negf %244 : vector<1x128xf32>
    %246 = math.exp %245 : vector<1x128xf32>
    %cst_63 = arith.constant 1.000000e+00 : f32
    %247 = vector.broadcast %cst_63 : f32 to vector<1x128xf32>
    %248 = arith.addf %247, %246 : vector<1x128xf32>
    %249 = arith.divf %247, %248 : vector<1x128xf32>
    %250 = arith.mulf %241, %189 : vector<1x128xf32>
    %251 = arith.mulf %235, %243 : vector<1x128xf32>
    %252 = arith.addf %250, %251 : vector<1x128xf32>
    %253 = math.tanh %252 : vector<1x128xf32>
    %254 = arith.mulf %249, %253 : vector<1x128xf32>
    %c8_i32_64 = arith.constant 8 : i32
    %255 = arith.cmpi slt, %223, %c8_i32_64 : i32
    %256 = arith.select %255, %254, %188 : vector<1x128xf32>
    %257 = arith.select %255, %252, %189 : vector<1x128xf32>
    %258 = arith.index_cast %224 : i32 to index
    %c0_65 = arith.constant 0 : index
    %259 = vector.load %arg15[%258, %c0_65] : memref<8x512xf32, #tpu.memory_space<vmem>>, vector<1x512xf32>
    %260 = arith.truncf %221 : vector<1x128xf32> to vector<1x128xbf16>
    %cst_66 = arith.constant dense<0.000000e+00> : vector<1x512xf32>
    %261 = tpu.matmul %260, %15, %cst_66 {dimension_numbers = #tpu.dot_dimension_numbers<[1], [0], [0], [1], [0, 0, 1, 1], [], []>} : vector<1x128xbf16>, vector<128x512xbf16>, vector<1x512xf32> -> vector<1x512xf32>
    %262 = arith.addf %259, %261 : vector<1x512xf32>
    %263 = vector.extract_strided_slice %262 {offsets = [0, 0], sizes = [1, 128], strides = [1, 1]} : vector<1x512xf32> to vector<1x128xf32>
    %264 = arith.negf %263 : vector<1x128xf32>
    %265 = math.exp %264 : vector<1x128xf32>
    %cst_67 = arith.constant 1.000000e+00 : f32
    %266 = vector.broadcast %cst_67 : f32 to vector<1x128xf32>
    %267 = arith.addf %266, %265 : vector<1x128xf32>
    %268 = arith.divf %266, %267 : vector<1x128xf32>
    %269 = vector.extract_strided_slice %262 {offsets = [0, 128], sizes = [1, 128], strides = [1, 1]} : vector<1x512xf32> to vector<1x128xf32>
    %270 = arith.negf %269 : vector<1x128xf32>
    %271 = math.exp %270 : vector<1x128xf32>
    %cst_68 = arith.constant 1.000000e+00 : f32
    %272 = vector.broadcast %cst_68 : f32 to vector<1x128xf32>
    %273 = arith.addf %272, %271 : vector<1x128xf32>
    %274 = arith.divf %272, %273 : vector<1x128xf32>
    %275 = vector.extract_strided_slice %262 {offsets = [0, 256], sizes = [1, 128], strides = [1, 1]} : vector<1x512xf32> to vector<1x128xf32>
    %276 = math.tanh %275 : vector<1x128xf32>
    %277 = vector.extract_strided_slice %262 {offsets = [0, 384], sizes = [1, 128], strides = [1, 1]} : vector<1x512xf32> to vector<1x128xf32>
    %278 = arith.negf %277 : vector<1x128xf32>
    %279 = math.exp %278 : vector<1x128xf32>
    %cst_69 = arith.constant 1.000000e+00 : f32
    %280 = vector.broadcast %cst_69 : f32 to vector<1x128xf32>
    %281 = arith.addf %280, %279 : vector<1x128xf32>
    %282 = arith.divf %280, %281 : vector<1x128xf32>
    %283 = arith.mulf %274, %222 : vector<1x128xf32>
    %284 = arith.mulf %268, %276 : vector<1x128xf32>
    %285 = arith.addf %283, %284 : vector<1x128xf32>
    %286 = math.tanh %285 : vector<1x128xf32>
    %287 = arith.mulf %282, %286 : vector<1x128xf32>
    %c8_i32_70 = arith.constant 8 : i32
    %288 = arith.cmpi slt, %224, %c8_i32_70 : i32
    %289 = arith.select %288, %287, %221 : vector<1x128xf32>
    %290 = arith.select %288, %285, %222 : vector<1x128xf32>
    %c4_i32 = arith.constant 4 : i32
    %291 = arith.addi %18, %c4_i32 : i32
    %c7_i32_71 = arith.constant 7 : i32
    %292 = arith.subi %c7_i32_71, %291 : i32
    %293 = arith.index_cast %291 : i32 to index
    %c0_72 = arith.constant 0 : index
    %294 = vector.load %arg14[%293, %c0_72] : memref<8x512xf32, #tpu.memory_space<vmem>>, vector<1x512xf32>
    %295 = arith.truncf %256 : vector<1x128xf32> to vector<1x128xbf16>
    %cst_73 = arith.constant dense<0.000000e+00> : vector<1x512xf32>
    %296 = tpu.matmul %295, %14, %cst_73 {dimension_numbers = #tpu.dot_dimension_numbers<[1], [0], [0], [1], [0, 0, 1, 1], [], []>} : vector<1x128xbf16>, vector<128x512xbf16>, vector<1x512xf32> -> vector<1x512xf32>
    %297 = arith.addf %294, %296 : vector<1x512xf32>
    %298 = vector.extract_strided_slice %297 {offsets = [0, 0], sizes = [1, 128], strides = [1, 1]} : vector<1x512xf32> to vector<1x128xf32>
    %299 = arith.negf %298 : vector<1x128xf32>
    %300 = math.exp %299 : vector<1x128xf32>
    %cst_74 = arith.constant 1.000000e+00 : f32
    %301 = vector.broadcast %cst_74 : f32 to vector<1x128xf32>
    %302 = arith.addf %301, %300 : vector<1x128xf32>
    %303 = arith.divf %301, %302 : vector<1x128xf32>
    %304 = vector.extract_strided_slice %297 {offsets = [0, 128], sizes = [1, 128], strides = [1, 1]} : vector<1x512xf32> to vector<1x128xf32>
    %305 = arith.negf %304 : vector<1x128xf32>
    %306 = math.exp %305 : vector<1x128xf32>
    %cst_75 = arith.constant 1.000000e+00 : f32
    %307 = vector.broadcast %cst_75 : f32 to vector<1x128xf32>
    %308 = arith.addf %307, %306 : vector<1x128xf32>
    %309 = arith.divf %307, %308 : vector<1x128xf32>
    %310 = vector.extract_strided_slice %297 {offsets = [0, 256], sizes = [1, 128], strides = [1, 1]} : vector<1x512xf32> to vector<1x128xf32>
    %311 = math.tanh %310 : vector<1x128xf32>
    %312 = vector.extract_strided_slice %297 {offsets = [0, 384], sizes = [1, 128], strides = [1, 1]} : vector<1x512xf32> to vector<1x128xf32>
    %313 = arith.negf %312 : vector<1x128xf32>
    %314 = math.exp %313 : vector<1x128xf32>
    %cst_76 = arith.constant 1.000000e+00 : f32
    %315 = vector.broadcast %cst_76 : f32 to vector<1x128xf32>
    %316 = arith.addf %315, %314 : vector<1x128xf32>
    %317 = arith.divf %315, %316 : vector<1x128xf32>
    %318 = arith.mulf %309, %257 : vector<1x128xf32>
    %319 = arith.mulf %303, %311 : vector<1x128xf32>
    %320 = arith.addf %318, %319 : vector<1x128xf32>
    %321 = math.tanh %320 : vector<1x128xf32>
    %322 = arith.mulf %317, %321 : vector<1x128xf32>
    %c8_i32_77 = arith.constant 8 : i32
    %323 = arith.cmpi slt, %291, %c8_i32_77 : i32
    %324 = arith.select %323, %322, %256 : vector<1x128xf32>
    %325 = arith.select %323, %320, %257 : vector<1x128xf32>
    %326 = arith.index_cast %292 : i32 to index
    %c0_78 = arith.constant 0 : index
    %327 = vector.load %arg15[%326, %c0_78] : memref<8x512xf32, #tpu.memory_space<vmem>>, vector<1x512xf32>
    %328 = arith.truncf %289 : vector<1x128xf32> to vector<1x128xbf16>
    %cst_79 = arith.constant dense<0.000000e+00> : vector<1x512xf32>
    %329 = tpu.matmul %328, %15, %cst_79 {dimension_numbers = #tpu.dot_dimension_numbers<[1], [0], [0], [1], [0, 0, 1, 1], [], []>} : vector<1x128xbf16>, vector<128x512xbf16>, vector<1x512xf32> -> vector<1x512xf32>
    %330 = arith.addf %327, %329 : vector<1x512xf32>
    %331 = vector.extract_strided_slice %330 {offsets = [0, 0], sizes = [1, 128], strides = [1, 1]} : vector<1x512xf32> to vector<1x128xf32>
    %332 = arith.negf %331 : vector<1x128xf32>
    %333 = math.exp %332 : vector<1x128xf32>
    %cst_80 = arith.constant 1.000000e+00 : f32
    %334 = vector.broadcast %cst_80 : f32 to vector<1x128xf32>
    %335 = arith.addf %334, %333 : vector<1x128xf32>
    %336 = arith.divf %334, %335 : vector<1x128xf32>
    %337 = vector.extract_strided_slice %330 {offsets = [0, 128], sizes = [1, 128], strides = [1, 1]} : vector<1x512xf32> to vector<1x128xf32>
    %338 = arith.negf %337 : vector<1x128xf32>
    %339 = math.exp %338 : vector<1x128xf32>
    %cst_81 = arith.constant 1.000000e+00 : f32
    %340 = vector.broadcast %cst_81 : f32 to vector<1x128xf32>
    %341 = arith.addf %340, %339 : vector<1x128xf32>
    %342 = arith.divf %340, %341 : vector<1x128xf32>
    %343 = vector.extract_strided_slice %330 {offsets = [0, 256], sizes = [1, 128], strides = [1, 1]} : vector<1x512xf32> to vector<1x128xf32>
    %344 = math.tanh %343 : vector<1x128xf32>
    %345 = vector.extract_strided_slice %330 {offsets = [0, 384], sizes = [1, 128], strides = [1, 1]} : vector<1x512xf32> to vector<1x128xf32>
    %346 = arith.negf %345 : vector<1x128xf32>
    %347 = math.exp %346 : vector<1x128xf32>
    %cst_82 = arith.constant 1.000000e+00 : f32
    %348 = vector.broadcast %cst_82 : f32 to vector<1x128xf32>
    %349 = arith.addf %348, %347 : vector<1x128xf32>
    %350 = arith.divf %348, %349 : vector<1x128xf32>
    %351 = arith.mulf %342, %290 : vector<1x128xf32>
    %352 = arith.mulf %336, %344 : vector<1x128xf32>
    %353 = arith.addf %351, %352 : vector<1x128xf32>
    %354 = math.tanh %353 : vector<1x128xf32>
    %355 = arith.mulf %350, %354 : vector<1x128xf32>
    %c8_i32_83 = arith.constant 8 : i32
    %356 = arith.cmpi slt, %292, %c8_i32_83 : i32
    %357 = arith.select %356, %355, %289 : vector<1x128xf32>
    %358 = arith.select %356, %353, %290 : vector<1x128xf32>
    %c5_i32 = arith.constant 5 : i32
    %359 = arith.addi %18, %c5_i32 : i32
    %c7_i32_84 = arith.constant 7 : i32
    %360 = arith.subi %c7_i32_84, %359 : i32
    %361 = arith.index_cast %359 : i32 to index
    %c0_85 = arith.constant 0 : index
    %362 = vector.load %arg14[%361, %c0_85] : memref<8x512xf32, #tpu.memory_space<vmem>>, vector<1x512xf32>
    %363 = arith.truncf %324 : vector<1x128xf32> to vector<1x128xbf16>
    %cst_86 = arith.constant dense<0.000000e+00> : vector<1x512xf32>
    %364 = tpu.matmul %363, %14, %cst_86 {dimension_numbers = #tpu.dot_dimension_numbers<[1], [0], [0], [1], [0, 0, 1, 1], [], []>} : vector<1x128xbf16>, vector<128x512xbf16>, vector<1x512xf32> -> vector<1x512xf32>
    %365 = arith.addf %362, %364 : vector<1x512xf32>
    %366 = vector.extract_strided_slice %365 {offsets = [0, 0], sizes = [1, 128], strides = [1, 1]} : vector<1x512xf32> to vector<1x128xf32>
    %367 = arith.negf %366 : vector<1x128xf32>
    %368 = math.exp %367 : vector<1x128xf32>
    %cst_87 = arith.constant 1.000000e+00 : f32
    %369 = vector.broadcast %cst_87 : f32 to vector<1x128xf32>
    %370 = arith.addf %369, %368 : vector<1x128xf32>
    %371 = arith.divf %369, %370 : vector<1x128xf32>
    %372 = vector.extract_strided_slice %365 {offsets = [0, 128], sizes = [1, 128], strides = [1, 1]} : vector<1x512xf32> to vector<1x128xf32>
    %373 = arith.negf %372 : vector<1x128xf32>
    %374 = math.exp %373 : vector<1x128xf32>
    %cst_88 = arith.constant 1.000000e+00 : f32
    %375 = vector.broadcast %cst_88 : f32 to vector<1x128xf32>
    %376 = arith.addf %375, %374 : vector<1x128xf32>
    %377 = arith.divf %375, %376 : vector<1x128xf32>
    %378 = vector.extract_strided_slice %365 {offsets = [0, 256], sizes = [1, 128], strides = [1, 1]} : vector<1x512xf32> to vector<1x128xf32>
    %379 = math.tanh %378 : vector<1x128xf32>
    %380 = vector.extract_strided_slice %365 {offsets = [0, 384], sizes = [1, 128], strides = [1, 1]} : vector<1x512xf32> to vector<1x128xf32>
    %381 = arith.negf %380 : vector<1x128xf32>
    %382 = math.exp %381 : vector<1x128xf32>
    %cst_89 = arith.constant 1.000000e+00 : f32
    %383 = vector.broadcast %cst_89 : f32 to vector<1x128xf32>
    %384 = arith.addf %383, %382 : vector<1x128xf32>
    %385 = arith.divf %383, %384 : vector<1x128xf32>
    %386 = arith.mulf %377, %325 : vector<1x128xf32>
    %387 = arith.mulf %371, %379 : vector<1x128xf32>
    %388 = arith.addf %386, %387 : vector<1x128xf32>
    %389 = math.tanh %388 : vector<1x128xf32>
    %390 = arith.mulf %385, %389 : vector<1x128xf32>
    %c8_i32_90 = arith.constant 8 : i32
    %391 = arith.cmpi slt, %359, %c8_i32_90 : i32
    %392 = arith.select %391, %390, %324 : vector<1x128xf32>
    %393 = arith.select %391, %388, %325 : vector<1x128xf32>
    %394 = arith.index_cast %360 : i32 to index
    %c0_91 = arith.constant 0 : index
    %395 = vector.load %arg15[%394, %c0_91] : memref<8x512xf32, #tpu.memory_space<vmem>>, vector<1x512xf32>
    %396 = arith.truncf %357 : vector<1x128xf32> to vector<1x128xbf16>
    %cst_92 = arith.constant dense<0.000000e+00> : vector<1x512xf32>
    %397 = tpu.matmul %396, %15, %cst_92 {dimension_numbers = #tpu.dot_dimension_numbers<[1], [0], [0], [1], [0, 0, 1, 1], [], []>} : vector<1x128xbf16>, vector<128x512xbf16>, vector<1x512xf32> -> vector<1x512xf32>
    %398 = arith.addf %395, %397 : vector<1x512xf32>
    %399 = vector.extract_strided_slice %398 {offsets = [0, 0], sizes = [1, 128], strides = [1, 1]} : vector<1x512xf32> to vector<1x128xf32>
    %400 = arith.negf %399 : vector<1x128xf32>
    %401 = math.exp %400 : vector<1x128xf32>
    %cst_93 = arith.constant 1.000000e+00 : f32
    %402 = vector.broadcast %cst_93 : f32 to vector<1x128xf32>
    %403 = arith.addf %402, %401 : vector<1x128xf32>
    %404 = arith.divf %402, %403 : vector<1x128xf32>
    %405 = vector.extract_strided_slice %398 {offsets = [0, 128], sizes = [1, 128], strides = [1, 1]} : vector<1x512xf32> to vector<1x128xf32>
    %406 = arith.negf %405 : vector<1x128xf32>
    %407 = math.exp %406 : vector<1x128xf32>
    %cst_94 = arith.constant 1.000000e+00 : f32
    %408 = vector.broadcast %cst_94 : f32 to vector<1x128xf32>
    %409 = arith.addf %408, %407 : vector<1x128xf32>
    %410 = arith.divf %408, %409 : vector<1x128xf32>
    %411 = vector.extract_strided_slice %398 {offsets = [0, 256], sizes = [1, 128], strides = [1, 1]} : vector<1x512xf32> to vector<1x128xf32>
    %412 = math.tanh %411 : vector<1x128xf32>
    %413 = vector.extract_strided_slice %398 {offsets = [0, 384], sizes = [1, 128], strides = [1, 1]} : vector<1x512xf32> to vector<1x128xf32>
    %414 = arith.negf %413 : vector<1x128xf32>
    %415 = math.exp %414 : vector<1x128xf32>
    %cst_95 = arith.constant 1.000000e+00 : f32
    %416 = vector.broadcast %cst_95 : f32 to vector<1x128xf32>
    %417 = arith.addf %416, %415 : vector<1x128xf32>
    %418 = arith.divf %416, %417 : vector<1x128xf32>
    %419 = arith.mulf %410, %358 : vector<1x128xf32>
    %420 = arith.mulf %404, %412 : vector<1x128xf32>
    %421 = arith.addf %419, %420 : vector<1x128xf32>
    %422 = math.tanh %421 : vector<1x128xf32>
    %423 = arith.mulf %418, %422 : vector<1x128xf32>
    %c8_i32_96 = arith.constant 8 : i32
    %424 = arith.cmpi slt, %360, %c8_i32_96 : i32
    %425 = arith.select %424, %423, %357 : vector<1x128xf32>
    %426 = arith.select %424, %421, %358 : vector<1x128xf32>
    %c6_i32 = arith.constant 6 : i32
    %427 = arith.addi %18, %c6_i32 : i32
    %c7_i32_97 = arith.constant 7 : i32
    %428 = arith.subi %c7_i32_97, %427 : i32
    %429 = arith.index_cast %427 : i32 to index
    %c0_98 = arith.constant 0 : index
    %430 = vector.load %arg14[%429, %c0_98] : memref<8x512xf32, #tpu.memory_space<vmem>>, vector<1x512xf32>
    %431 = arith.truncf %392 : vector<1x128xf32> to vector<1x128xbf16>
    %cst_99 = arith.constant dense<0.000000e+00> : vector<1x512xf32>
    %432 = tpu.matmul %431, %14, %cst_99 {dimension_numbers = #tpu.dot_dimension_numbers<[1], [0], [0], [1], [0, 0, 1, 1], [], []>} : vector<1x128xbf16>, vector<128x512xbf16>, vector<1x512xf32> -> vector<1x512xf32>
    %433 = arith.addf %430, %432 : vector<1x512xf32>
    %434 = vector.extract_strided_slice %433 {offsets = [0, 0], sizes = [1, 128], strides = [1, 1]} : vector<1x512xf32> to vector<1x128xf32>
    %435 = arith.negf %434 : vector<1x128xf32>
    %436 = math.exp %435 : vector<1x128xf32>
    %cst_100 = arith.constant 1.000000e+00 : f32
    %437 = vector.broadcast %cst_100 : f32 to vector<1x128xf32>
    %438 = arith.addf %437, %436 : vector<1x128xf32>
    %439 = arith.divf %437, %438 : vector<1x128xf32>
    %440 = vector.extract_strided_slice %433 {offsets = [0, 128], sizes = [1, 128], strides = [1, 1]} : vector<1x512xf32> to vector<1x128xf32>
    %441 = arith.negf %440 : vector<1x128xf32>
    %442 = math.exp %441 : vector<1x128xf32>
    %cst_101 = arith.constant 1.000000e+00 : f32
    %443 = vector.broadcast %cst_101 : f32 to vector<1x128xf32>
    %444 = arith.addf %443, %442 : vector<1x128xf32>
    %445 = arith.divf %443, %444 : vector<1x128xf32>
    %446 = vector.extract_strided_slice %433 {offsets = [0, 256], sizes = [1, 128], strides = [1, 1]} : vector<1x512xf32> to vector<1x128xf32>
    %447 = math.tanh %446 : vector<1x128xf32>
    %448 = vector.extract_strided_slice %433 {offsets = [0, 384], sizes = [1, 128], strides = [1, 1]} : vector<1x512xf32> to vector<1x128xf32>
    %449 = arith.negf %448 : vector<1x128xf32>
    %450 = math.exp %449 : vector<1x128xf32>
    %cst_102 = arith.constant 1.000000e+00 : f32
    %451 = vector.broadcast %cst_102 : f32 to vector<1x128xf32>
    %452 = arith.addf %451, %450 : vector<1x128xf32>
    %453 = arith.divf %451, %452 : vector<1x128xf32>
    %454 = arith.mulf %445, %393 : vector<1x128xf32>
    %455 = arith.mulf %439, %447 : vector<1x128xf32>
    %456 = arith.addf %454, %455 : vector<1x128xf32>
    %457 = math.tanh %456 : vector<1x128xf32>
    %458 = arith.mulf %453, %457 : vector<1x128xf32>
    %c8_i32_103 = arith.constant 8 : i32
    %459 = arith.cmpi slt, %427, %c8_i32_103 : i32
    %460 = arith.select %459, %458, %392 : vector<1x128xf32>
    %461 = arith.select %459, %456, %393 : vector<1x128xf32>
    %462 = arith.index_cast %428 : i32 to index
    %c0_104 = arith.constant 0 : index
    %463 = vector.load %arg15[%462, %c0_104] : memref<8x512xf32, #tpu.memory_space<vmem>>, vector<1x512xf32>
    %464 = arith.truncf %425 : vector<1x128xf32> to vector<1x128xbf16>
    %cst_105 = arith.constant dense<0.000000e+00> : vector<1x512xf32>
    %465 = tpu.matmul %464, %15, %cst_105 {dimension_numbers = #tpu.dot_dimension_numbers<[1], [0], [0], [1], [0, 0, 1, 1], [], []>} : vector<1x128xbf16>, vector<128x512xbf16>, vector<1x512xf32> -> vector<1x512xf32>
    %466 = arith.addf %463, %465 : vector<1x512xf32>
    %467 = vector.extract_strided_slice %466 {offsets = [0, 0], sizes = [1, 128], strides = [1, 1]} : vector<1x512xf32> to vector<1x128xf32>
    %468 = arith.negf %467 : vector<1x128xf32>
    %469 = math.exp %468 : vector<1x128xf32>
    %cst_106 = arith.constant 1.000000e+00 : f32
    %470 = vector.broadcast %cst_106 : f32 to vector<1x128xf32>
    %471 = arith.addf %470, %469 : vector<1x128xf32>
    %472 = arith.divf %470, %471 : vector<1x128xf32>
    %473 = vector.extract_strided_slice %466 {offsets = [0, 128], sizes = [1, 128], strides = [1, 1]} : vector<1x512xf32> to vector<1x128xf32>
    %474 = arith.negf %473 : vector<1x128xf32>
    %475 = math.exp %474 : vector<1x128xf32>
    %cst_107 = arith.constant 1.000000e+00 : f32
    %476 = vector.broadcast %cst_107 : f32 to vector<1x128xf32>
    %477 = arith.addf %476, %475 : vector<1x128xf32>
    %478 = arith.divf %476, %477 : vector<1x128xf32>
    %479 = vector.extract_strided_slice %466 {offsets = [0, 256], sizes = [1, 128], strides = [1, 1]} : vector<1x512xf32> to vector<1x128xf32>
    %480 = math.tanh %479 : vector<1x128xf32>
    %481 = vector.extract_strided_slice %466 {offsets = [0, 384], sizes = [1, 128], strides = [1, 1]} : vector<1x512xf32> to vector<1x128xf32>
    %482 = arith.negf %481 : vector<1x128xf32>
    %483 = math.exp %482 : vector<1x128xf32>
    %cst_108 = arith.constant 1.000000e+00 : f32
    %484 = vector.broadcast %cst_108 : f32 to vector<1x128xf32>
    %485 = arith.addf %484, %483 : vector<1x128xf32>
    %486 = arith.divf %484, %485 : vector<1x128xf32>
    %487 = arith.mulf %478, %426 : vector<1x128xf32>
    %488 = arith.mulf %472, %480 : vector<1x128xf32>
    %489 = arith.addf %487, %488 : vector<1x128xf32>
    %490 = math.tanh %489 : vector<1x128xf32>
    %491 = arith.mulf %486, %490 : vector<1x128xf32>
    %c8_i32_109 = arith.constant 8 : i32
    %492 = arith.cmpi slt, %428, %c8_i32_109 : i32
    %493 = arith.select %492, %491, %425 : vector<1x128xf32>
    %494 = arith.select %492, %489, %426 : vector<1x128xf32>
    %c7_i32_110 = arith.constant 7 : i32
    %495 = arith.addi %18, %c7_i32_110 : i32
    %c7_i32_111 = arith.constant 7 : i32
    %496 = arith.subi %c7_i32_111, %495 : i32
    %497 = arith.index_cast %495 : i32 to index
    %c0_112 = arith.constant 0 : index
    %498 = vector.load %arg14[%497, %c0_112] : memref<8x512xf32, #tpu.memory_space<vmem>>, vector<1x512xf32>
    %499 = arith.truncf %460 : vector<1x128xf32> to vector<1x128xbf16>
    %cst_113 = arith.constant dense<0.000000e+00> : vector<1x512xf32>
    %500 = tpu.matmul %499, %14, %cst_113 {dimension_numbers = #tpu.dot_dimension_numbers<[1], [0], [0], [1], [0, 0, 1, 1], [], []>} : vector<1x128xbf16>, vector<128x512xbf16>, vector<1x512xf32> -> vector<1x512xf32>
    %501 = arith.addf %498, %500 : vector<1x512xf32>
    %502 = vector.extract_strided_slice %501 {offsets = [0, 0], sizes = [1, 128], strides = [1, 1]} : vector<1x512xf32> to vector<1x128xf32>
    %503 = arith.negf %502 : vector<1x128xf32>
    %504 = math.exp %503 : vector<1x128xf32>
    %cst_114 = arith.constant 1.000000e+00 : f32
    %505 = vector.broadcast %cst_114 : f32 to vector<1x128xf32>
    %506 = arith.addf %505, %504 : vector<1x128xf32>
    %507 = arith.divf %505, %506 : vector<1x128xf32>
    %508 = vector.extract_strided_slice %501 {offsets = [0, 128], sizes = [1, 128], strides = [1, 1]} : vector<1x512xf32> to vector<1x128xf32>
    %509 = arith.negf %508 : vector<1x128xf32>
    %510 = math.exp %509 : vector<1x128xf32>
    %cst_115 = arith.constant 1.000000e+00 : f32
    %511 = vector.broadcast %cst_115 : f32 to vector<1x128xf32>
    %512 = arith.addf %511, %510 : vector<1x128xf32>
    %513 = arith.divf %511, %512 : vector<1x128xf32>
    %514 = vector.extract_strided_slice %501 {offsets = [0, 256], sizes = [1, 128], strides = [1, 1]} : vector<1x512xf32> to vector<1x128xf32>
    %515 = math.tanh %514 : vector<1x128xf32>
    %516 = vector.extract_strided_slice %501 {offsets = [0, 384], sizes = [1, 128], strides = [1, 1]} : vector<1x512xf32> to vector<1x128xf32>
    %517 = arith.negf %516 : vector<1x128xf32>
    %518 = math.exp %517 : vector<1x128xf32>
    %cst_116 = arith.constant 1.000000e+00 : f32
    %519 = vector.broadcast %cst_116 : f32 to vector<1x128xf32>
    %520 = arith.addf %519, %518 : vector<1x128xf32>
    %521 = arith.divf %519, %520 : vector<1x128xf32>
    %522 = arith.mulf %513, %461 : vector<1x128xf32>
    %523 = arith.mulf %507, %515 : vector<1x128xf32>
    %524 = arith.addf %522, %523 : vector<1x128xf32>
    %525 = math.tanh %524 : vector<1x128xf32>
    %526 = arith.mulf %521, %525 : vector<1x128xf32>
    %c8_i32_117 = arith.constant 8 : i32
    %527 = arith.cmpi slt, %495, %c8_i32_117 : i32
    %528 = arith.select %527, %526, %460 : vector<1x128xf32>
    %529 = arith.select %527, %524, %461 : vector<1x128xf32>
    %530 = arith.index_cast %496 : i32 to index
    %c0_118 = arith.constant 0 : index
    %531 = vector.load %arg15[%530, %c0_118] : memref<8x512xf32, #tpu.memory_space<vmem>>, vector<1x512xf32>
    %532 = arith.truncf %493 : vector<1x128xf32> to vector<1x128xbf16>
    %cst_119 = arith.constant dense<0.000000e+00> : vector<1x512xf32>
    %533 = tpu.matmul %532, %15, %cst_119 {dimension_numbers = #tpu.dot_dimension_numbers<[1], [0], [0], [1], [0, 0, 1, 1], [], []>} : vector<1x128xbf16>, vector<128x512xbf16>, vector<1x512xf32> -> vector<1x512xf32>
    %534 = arith.addf %531, %533 : vector<1x512xf32>
    %535 = vector.extract_strided_slice %534 {offsets = [0, 0], sizes = [1, 128], strides = [1, 1]} : vector<1x512xf32> to vector<1x128xf32>
    %536 = arith.negf %535 : vector<1x128xf32>
    %537 = math.exp %536 : vector<1x128xf32>
    %cst_120 = arith.constant 1.000000e+00 : f32
    %538 = vector.broadcast %cst_120 : f32 to vector<1x128xf32>
    %539 = arith.addf %538, %537 : vector<1x128xf32>
    %540 = arith.divf %538, %539 : vector<1x128xf32>
    %541 = vector.extract_strided_slice %534 {offsets = [0, 128], sizes = [1, 128], strides = [1, 1]} : vector<1x512xf32> to vector<1x128xf32>
    %542 = arith.negf %541 : vector<1x128xf32>
    %543 = math.exp %542 : vector<1x128xf32>
    %cst_121 = arith.constant 1.000000e+00 : f32
    %544 = vector.broadcast %cst_121 : f32 to vector<1x128xf32>
    %545 = arith.addf %544, %543 : vector<1x128xf32>
    %546 = arith.divf %544, %545 : vector<1x128xf32>
    %547 = vector.extract_strided_slice %534 {offsets = [0, 256], sizes = [1, 128], strides = [1, 1]} : vector<1x512xf32> to vector<1x128xf32>
    %548 = math.tanh %547 : vector<1x128xf32>
    %549 = vector.extract_strided_slice %534 {offsets = [0, 384], sizes = [1, 128], strides = [1, 1]} : vector<1x512xf32> to vector<1x128xf32>
    %550 = arith.negf %549 : vector<1x128xf32>
    %551 = math.exp %550 : vector<1x128xf32>
    %cst_122 = arith.constant 1.000000e+00 : f32
    %552 = vector.broadcast %cst_122 : f32 to vector<1x128xf32>
    %553 = arith.addf %552, %551 : vector<1x128xf32>
    %554 = arith.divf %552, %553 : vector<1x128xf32>
    %555 = arith.mulf %546, %494 : vector<1x128xf32>
    %556 = arith.mulf %540, %548 : vector<1x128xf32>
    %557 = arith.addf %555, %556 : vector<1x128xf32>
    %558 = math.tanh %557 : vector<1x128xf32>
    %559 = arith.mulf %554, %558 : vector<1x128xf32>
    %c8_i32_123 = arith.constant 8 : i32
    %560 = arith.cmpi slt, %496, %c8_i32_123 : i32
    %561 = arith.select %560, %559, %493 : vector<1x128xf32>
    %562 = arith.select %560, %557, %494 : vector<1x128xf32>
    %563 = tpu.concatenate %52, %120, %188, %256, %324, %392, %460, %528 in 0 : vector<1x128xf32>, vector<1x128xf32>, vector<1x128xf32>, vector<1x128xf32>, vector<1x128xf32>, vector<1x128xf32>, vector<1x128xf32>, vector<1x128xf32> -> vector<8x128xf32>
    %564 = arith.index_cast %18 : i32 to index
    %c0_124 = arith.constant 0 : index
    %565 = vector.load %arg13[%564, %c0_124] : memref<8x256xf32, #tpu.memory_space<vmem>>, vector<8x128xf32>
    tpu.vector_store %arg13[%564, %c0_124], %563 {strides = array<i32>} : memref<8x256xf32, #tpu.memory_space<vmem>>, vector<8x128xf32>,
    %c0_i32_125 = arith.constant 0 : i32
    %566 = arith.subi %c0_i32_125, %18 : i32
    %567 = tpu.assume_multiple %566, 8 : i32
    %568 = tpu.concatenate %561, %493, %425, %357, %289, %221, %153, %85 in 0 : vector<1x128xf32>, vector<1x128xf32>, vector<1x128xf32>, vector<1x128xf32>, vector<1x128xf32>, vector<1x128xf32>, vector<1x128xf32>, vector<1x128xf32> -> vector<8x128xf32>
    %569 = arith.index_cast %567 : i32 to index
    %c128 = arith.constant 128 : index
    %570 = vector.load %arg13[%569, %c128] : memref<8x256xf32, #tpu.memory_space<vmem>>, vector<8x128xf32>
    tpu.vector_store %arg13[%569, %c128], %568 {strides = array<i32>} : memref<8x256xf32, #tpu.memory_space<vmem>>, vector<8x128xf32>,
    %c1_i32_126 = arith.constant 1 : i32
    %c0_127 = arith.constant 0 : index
    %c0_128 = arith.constant 0 : index
    %571 = vector.load %arg13[%c0_127, %c0_128] : memref<8x256xf32, #tpu.memory_space<vmem>>, vector<8x256xf32>
    %572 = arith.truncf %571 : vector<8x256xf32> to vector<8x256xbf16>
    %c0_129 = arith.constant 0 : index
    %c0_130 = arith.constant 0 : index
    %573 = vector.load %arg7[%c0_129, %c0_130] : memref<256x32xbf16, #tpu.memory_space<vmem>>, vector<256x32xbf16>
    %cst_131 = arith.constant dense<0.000000e+00> : vector<8x32xf32>
    %574 = tpu.matmul %572, %573, %cst_131 {dimension_numbers = #tpu.dot_dimension_numbers<[1], [0], [0], [1], [0, 0, 1, 1], [], []>} : vector<8x256xbf16>, vector<256x32xbf16>, vector<8x32xf32> -> vector<8x32xf32>
    %c0_132 = arith.constant 0 : index
    %c0_133 = arith.constant 0 : index
    %575 = vector.load %arg9[%c0_132, %c0_133] : memref<1x32xf32, #tpu.memory_space<vmem>>, vector<1x32xf32>
    %576 = vector.broadcast %575 : vector<1x32xf32> to vector<8x32xf32>
    %577 = arith.addf %574, %576 : vector<8x32xf32>
    %cst_134 = arith.constant 0.000000e+00 : f32
    %578 = vector.broadcast %cst_134 : f32 to vector<32x128xf32>
    %c0_135 = arith.constant 0 : index
    %c0_136 = arith.constant 0 : index
    %579 = vector.load %arg16[%c0_135, %c0_136] : memref<32x128xf32, #tpu.memory_space<vmem>>, vector<32x128xf32>
    tpu.vector_store %arg16[%c0_135, %c0_136], %578 {strides = array<i32>} : memref<32x128xf32, #tpu.memory_space<vmem>>, vector<32x128xf32>,
    %c0_137 = arith.constant 0 : index
    %c0_138 = arith.constant 0 : index
    %580 = vector.load %arg8[%c0_137, %c0_138] : memref<32x256xbf16, #tpu.memory_space<vmem>>, vector<32x256xbf16>
    %cst_139 = arith.constant dense<0.000000e+00> : vector<32x8xf32>
    %581 = tpu.matmul %580, %572, %cst_139 {dimension_numbers = #tpu.dot_dimension_numbers<[1], [1], [0], [0], [0, 0, 1, 0], [], []>} : vector<32x256xbf16>, vector<8x256xbf16>, vector<32x8xf32> -> vector<32x8xf32>
    %c0_140 = arith.constant 0 : index
    %c0_141 = arith.constant 0 : index
    %582 = vector.load %arg16[%c0_140, %c0_141] : memref<32x128xf32, #tpu.memory_space<vmem>>, vector<32x8xf32>
    tpu.vector_store %arg16[%c0_140, %c0_141], %581 {strides = array<i32>} : memref<32x128xf32, #tpu.memory_space<vmem>>, vector<32x8xf32>,
    %c0_142 = arith.constant 0 : index
    %583 = memref.load %arg10[%c0_142] : memref<32xf32, #tpu.memory_space<smem>>
    %c1 = arith.constant 1 : index
    %584 = memref.load %arg10[%c1] : memref<32xf32, #tpu.memory_space<smem>>
    %c2 = arith.constant 2 : index
    %585 = memref.load %arg10[%c2] : memref<32xf32, #tpu.memory_space<smem>>
    %c3 = arith.constant 3 : index
    %586 = memref.load %arg10[%c3] : memref<32xf32, #tpu.memory_space<smem>>
    %c4 = arith.constant 4 : index
    %587 = memref.load %arg10[%c4] : memref<32xf32, #tpu.memory_space<smem>>
    %c5 = arith.constant 5 : index
    %588 = memref.load %arg10[%c5] : memref<32xf32, #tpu.memory_space<smem>>
    %c6 = arith.constant 6 : index
    %589 = memref.load %arg10[%c6] : memref<32xf32, #tpu.memory_space<smem>>
    %c7 = arith.constant 7 : index
    %590 = memref.load %arg10[%c7] : memref<32xf32, #tpu.memory_space<smem>>
    %c8 = arith.constant 8 : index
    %591 = memref.load %arg10[%c8] : memref<32xf32, #tpu.memory_space<smem>>
    %c9 = arith.constant 9 : index
    %592 = memref.load %arg10[%c9] : memref<32xf32, #tpu.memory_space<smem>>
    %c10 = arith.constant 10 : index
    %593 = memref.load %arg10[%c10] : memref<32xf32, #tpu.memory_space<smem>>
    %c11 = arith.constant 11 : index
    %594 = memref.load %arg10[%c11] : memref<32xf32, #tpu.memory_space<smem>>
    %c12 = arith.constant 12 : index
    %595 = memref.load %arg10[%c12] : memref<32xf32, #tpu.memory_space<smem>>
    %c13 = arith.constant 13 : index
    %596 = memref.load %arg10[%c13] : memref<32xf32, #tpu.memory_space<smem>>
    %c14 = arith.constant 14 : index
    %597 = memref.load %arg10[%c14] : memref<32xf32, #tpu.memory_space<smem>>
    %c15 = arith.constant 15 : index
    %598 = memref.load %arg10[%c15] : memref<32xf32, #tpu.memory_space<smem>>
    %c16 = arith.constant 16 : index
    %599 = memref.load %arg10[%c16] : memref<32xf32, #tpu.memory_space<smem>>
    %c17 = arith.constant 17 : index
    %600 = memref.load %arg10[%c17] : memref<32xf32, #tpu.memory_space<smem>>
    %c18 = arith.constant 18 : index
    %601 = memref.load %arg10[%c18] : memref<32xf32, #tpu.memory_space<smem>>
    %c19 = arith.constant 19 : index
    %602 = memref.load %arg10[%c19] : memref<32xf32, #tpu.memory_space<smem>>
    %c20 = arith.constant 20 : index
    %603 = memref.load %arg10[%c20] : memref<32xf32, #tpu.memory_space<smem>>
    %c21 = arith.constant 21 : index
    %604 = memref.load %arg10[%c21] : memref<32xf32, #tpu.memory_space<smem>>
    %c22 = arith.constant 22 : index
    %605 = memref.load %arg10[%c22] : memref<32xf32, #tpu.memory_space<smem>>
    %c23 = arith.constant 23 : index
    %606 = memref.load %arg10[%c23] : memref<32xf32, #tpu.memory_space<smem>>
    %c24 = arith.constant 24 : index
    %607 = memref.load %arg10[%c24] : memref<32xf32, #tpu.memory_space<smem>>
    %c25 = arith.constant 25 : index
    %608 = memref.load %arg10[%c25] : memref<32xf32, #tpu.memory_space<smem>>
    %c26 = arith.constant 26 : index
    %609 = memref.load %arg10[%c26] : memref<32xf32, #tpu.memory_space<smem>>
    %c27 = arith.constant 27 : index
    %610 = memref.load %arg10[%c27] : memref<32xf32, #tpu.memory_space<smem>>
    %c28 = arith.constant 28 : index
    %611 = memref.load %arg10[%c28] : memref<32xf32, #tpu.memory_space<smem>>
    %c29 = arith.constant 29 : index
    %612 = memref.load %arg10[%c29] : memref<32xf32, #tpu.memory_space<smem>>
    %c30 = arith.constant 30 : index
    %613 = memref.load %arg10[%c30] : memref<32xf32, #tpu.memory_space<smem>>
    %c31 = arith.constant 31 : index
    %614 = memref.load %arg10[%c31] : memref<32xf32, #tpu.memory_space<smem>>
    %c0_143 = arith.constant 0 : index
    %615 = memref.load %arg11[%c0_143] : memref<1xf32, #tpu.memory_space<smem>>
    %c0_144 = arith.constant 0 : index
    %c0_145 = arith.constant 0 : index
    %616 = vector.load %arg16[%c0_144, %c0_145] : memref<32x128xf32, #tpu.memory_space<vmem>>, vector<32x128xf32>
    %cst_146 = arith.constant 0.000000e+00 : f32
    %617 = vector.broadcast %cst_146 : f32 to vector<8x128xf32>
    %618 = vector.extract_strided_slice %577 {offsets = [0, 0], sizes = [8, 1], strides = [1, 1]} : vector<8x32xf32> to vector<8x1xf32>
    %619 = vector.extract_strided_slice %616 {offsets = [0, 0], sizes = [1, 128], strides = [1, 1]} : vector<32x128xf32> to vector<1x128xf32>
    %620 = vector.broadcast %618 : vector<8x1xf32> to vector<8x128xf32>
    %621 = vector.broadcast %619 : vector<1x128xf32> to vector<8x128xf32>
    %622 = arith.addf %620, %621 : vector<8x128xf32>
    %623 = math.tanh %622 : vector<8x128xf32>
    %624 = vector.broadcast %583 : f32 to vector<8x128xf32>
    %625 = arith.mulf %624, %623 : vector<8x128xf32>
    %626 = arith.addf %617, %625 : vector<8x128xf32>
    %627 = vector.extract_strided_slice %577 {offsets = [0, 1], sizes = [8, 1], strides = [1, 1]} : vector<8x32xf32> to vector<8x1xf32>
    %628 = vector.extract_strided_slice %616 {offsets = [1, 0], sizes = [1, 128], strides = [1, 1]} : vector<32x128xf32> to vector<1x128xf32>
    %629 = vector.broadcast %627 : vector<8x1xf32> to vector<8x128xf32>
    %630 = vector.broadcast %628 : vector<1x128xf32> to vector<8x128xf32>
    %631 = arith.addf %629, %630 : vector<8x128xf32>
    %632 = math.tanh %631 : vector<8x128xf32>
    %633 = vector.broadcast %584 : f32 to vector<8x128xf32>
    %634 = arith.mulf %633, %632 : vector<8x128xf32>
    %635 = arith.addf %626, %634 : vector<8x128xf32>
    %636 = vector.extract_strided_slice %577 {offsets = [0, 2], sizes = [8, 1], strides = [1, 1]} : vector<8x32xf32> to vector<8x1xf32>
    %637 = vector.extract_strided_slice %616 {offsets = [2, 0], sizes = [1, 128], strides = [1, 1]} : vector<32x128xf32> to vector<1x128xf32>
    %638 = vector.broadcast %636 : vector<8x1xf32> to vector<8x128xf32>
    %639 = vector.broadcast %637 : vector<1x128xf32> to vector<8x128xf32>
    %640 = arith.addf %638, %639 : vector<8x128xf32>
    %641 = math.tanh %640 : vector<8x128xf32>
    %642 = vector.broadcast %585 : f32 to vector<8x128xf32>
    %643 = arith.mulf %642, %641 : vector<8x128xf32>
    %644 = arith.addf %635, %643 : vector<8x128xf32>
    %645 = vector.extract_strided_slice %577 {offsets = [0, 3], sizes = [8, 1], strides = [1, 1]} : vector<8x32xf32> to vector<8x1xf32>
    %646 = vector.extract_strided_slice %616 {offsets = [3, 0], sizes = [1, 128], strides = [1, 1]} : vector<32x128xf32> to vector<1x128xf32>
    %647 = vector.broadcast %645 : vector<8x1xf32> to vector<8x128xf32>
    %648 = vector.broadcast %646 : vector<1x128xf32> to vector<8x128xf32>
    %649 = arith.addf %647, %648 : vector<8x128xf32>
    %650 = math.tanh %649 : vector<8x128xf32>
    %651 = vector.broadcast %586 : f32 to vector<8x128xf32>
    %652 = arith.mulf %651, %650 : vector<8x128xf32>
    %653 = arith.addf %644, %652 : vector<8x128xf32>
    %654 = vector.extract_strided_slice %577 {offsets = [0, 4], sizes = [8, 1], strides = [1, 1]} : vector<8x32xf32> to vector<8x1xf32>
    %655 = vector.extract_strided_slice %616 {offsets = [4, 0], sizes = [1, 128], strides = [1, 1]} : vector<32x128xf32> to vector<1x128xf32>
    %656 = vector.broadcast %654 : vector<8x1xf32> to vector<8x128xf32>
    %657 = vector.broadcast %655 : vector<1x128xf32> to vector<8x128xf32>
    %658 = arith.addf %656, %657 : vector<8x128xf32>
    %659 = math.tanh %658 : vector<8x128xf32>
    %660 = vector.broadcast %587 : f32 to vector<8x128xf32>
    %661 = arith.mulf %660, %659 : vector<8x128xf32>
    %662 = arith.addf %653, %661 : vector<8x128xf32>
    %663 = vector.extract_strided_slice %577 {offsets = [0, 5], sizes = [8, 1], strides = [1, 1]} : vector<8x32xf32> to vector<8x1xf32>
    %664 = vector.extract_strided_slice %616 {offsets = [5, 0], sizes = [1, 128], strides = [1, 1]} : vector<32x128xf32> to vector<1x128xf32>
    %665 = vector.broadcast %663 : vector<8x1xf32> to vector<8x128xf32>
    %666 = vector.broadcast %664 : vector<1x128xf32> to vector<8x128xf32>
    %667 = arith.addf %665, %666 : vector<8x128xf32>
    %668 = math.tanh %667 : vector<8x128xf32>
    %669 = vector.broadcast %588 : f32 to vector<8x128xf32>
    %670 = arith.mulf %669, %668 : vector<8x128xf32>
    %671 = arith.addf %662, %670 : vector<8x128xf32>
    %672 = vector.extract_strided_slice %577 {offsets = [0, 6], sizes = [8, 1], strides = [1, 1]} : vector<8x32xf32> to vector<8x1xf32>
    %673 = vector.extract_strided_slice %616 {offsets = [6, 0], sizes = [1, 128], strides = [1, 1]} : vector<32x128xf32> to vector<1x128xf32>
    %674 = vector.broadcast %672 : vector<8x1xf32> to vector<8x128xf32>
    %675 = vector.broadcast %673 : vector<1x128xf32> to vector<8x128xf32>
    %676 = arith.addf %674, %675 : vector<8x128xf32>
    %677 = math.tanh %676 : vector<8x128xf32>
    %678 = vector.broadcast %589 : f32 to vector<8x128xf32>
    %679 = arith.mulf %678, %677 : vector<8x128xf32>
    %680 = arith.addf %671, %679 : vector<8x128xf32>
    %681 = vector.extract_strided_slice %577 {offsets = [0, 7], sizes = [8, 1], strides = [1, 1]} : vector<8x32xf32> to vector<8x1xf32>
    %682 = vector.extract_strided_slice %616 {offsets = [7, 0], sizes = [1, 128], strides = [1, 1]} : vector<32x128xf32> to vector<1x128xf32>
    %683 = vector.broadcast %681 : vector<8x1xf32> to vector<8x128xf32>
    %684 = vector.broadcast %682 : vector<1x128xf32> to vector<8x128xf32>
    %685 = arith.addf %683, %684 : vector<8x128xf32>
    %686 = math.tanh %685 : vector<8x128xf32>
    %687 = vector.broadcast %590 : f32 to vector<8x128xf32>
    %688 = arith.mulf %687, %686 : vector<8x128xf32>
    %689 = arith.addf %680, %688 : vector<8x128xf32>
    %690 = vector.extract_strided_slice %577 {offsets = [0, 8], sizes = [8, 1], strides = [1, 1]} : vector<8x32xf32> to vector<8x1xf32>
    %691 = vector.extract_strided_slice %616 {offsets = [8, 0], sizes = [1, 128], strides = [1, 1]} : vector<32x128xf32> to vector<1x128xf32>
    %692 = vector.broadcast %690 : vector<8x1xf32> to vector<8x128xf32>
    %693 = vector.broadcast %691 : vector<1x128xf32> to vector<8x128xf32>
    %694 = arith.addf %692, %693 : vector<8x128xf32>
    %695 = math.tanh %694 : vector<8x128xf32>
    %696 = vector.broadcast %591 : f32 to vector<8x128xf32>
    %697 = arith.mulf %696, %695 : vector<8x128xf32>
    %698 = arith.addf %689, %697 : vector<8x128xf32>
    %699 = vector.extract_strided_slice %577 {offsets = [0, 9], sizes = [8, 1], strides = [1, 1]} : vector<8x32xf32> to vector<8x1xf32>
    %700 = vector.extract_strided_slice %616 {offsets = [9, 0], sizes = [1, 128], strides = [1, 1]} : vector<32x128xf32> to vector<1x128xf32>
    %701 = vector.broadcast %699 : vector<8x1xf32> to vector<8x128xf32>
    %702 = vector.broadcast %700 : vector<1x128xf32> to vector<8x128xf32>
    %703 = arith.addf %701, %702 : vector<8x128xf32>
    %704 = math.tanh %703 : vector<8x128xf32>
    %705 = vector.broadcast %592 : f32 to vector<8x128xf32>
    %706 = arith.mulf %705, %704 : vector<8x128xf32>
    %707 = arith.addf %698, %706 : vector<8x128xf32>
    %708 = vector.extract_strided_slice %577 {offsets = [0, 10], sizes = [8, 1], strides = [1, 1]} : vector<8x32xf32> to vector<8x1xf32>
    %709 = vector.extract_strided_slice %616 {offsets = [10, 0], sizes = [1, 128], strides = [1, 1]} : vector<32x128xf32> to vector<1x128xf32>
    %710 = vector.broadcast %708 : vector<8x1xf32> to vector<8x128xf32>
    %711 = vector.broadcast %709 : vector<1x128xf32> to vector<8x128xf32>
    %712 = arith.addf %710, %711 : vector<8x128xf32>
    %713 = math.tanh %712 : vector<8x128xf32>
    %714 = vector.broadcast %593 : f32 to vector<8x128xf32>
    %715 = arith.mulf %714, %713 : vector<8x128xf32>
    %716 = arith.addf %707, %715 : vector<8x128xf32>
    %717 = vector.extract_strided_slice %577 {offsets = [0, 11], sizes = [8, 1], strides = [1, 1]} : vector<8x32xf32> to vector<8x1xf32>
    %718 = vector.extract_strided_slice %616 {offsets = [11, 0], sizes = [1, 128], strides = [1, 1]} : vector<32x128xf32> to vector<1x128xf32>
    %719 = vector.broadcast %717 : vector<8x1xf32> to vector<8x128xf32>
    %720 = vector.broadcast %718 : vector<1x128xf32> to vector<8x128xf32>
    %721 = arith.addf %719, %720 : vector<8x128xf32>
    %722 = math.tanh %721 : vector<8x128xf32>
    %723 = vector.broadcast %594 : f32 to vector<8x128xf32>
    %724 = arith.mulf %723, %722 : vector<8x128xf32>
    %725 = arith.addf %716, %724 : vector<8x128xf32>
    %726 = vector.extract_strided_slice %577 {offsets = [0, 12], sizes = [8, 1], strides = [1, 1]} : vector<8x32xf32> to vector<8x1xf32>
    %727 = vector.extract_strided_slice %616 {offsets = [12, 0], sizes = [1, 128], strides = [1, 1]} : vector<32x128xf32> to vector<1x128xf32>
    %728 = vector.broadcast %726 : vector<8x1xf32> to vector<8x128xf32>
    %729 = vector.broadcast %727 : vector<1x128xf32> to vector<8x128xf32>
    %730 = arith.addf %728, %729 : vector<8x128xf32>
    %731 = math.tanh %730 : vector<8x128xf32>
    %732 = vector.broadcast %595 : f32 to vector<8x128xf32>
    %733 = arith.mulf %732, %731 : vector<8x128xf32>
    %734 = arith.addf %725, %733 : vector<8x128xf32>
    %735 = vector.extract_strided_slice %577 {offsets = [0, 13], sizes = [8, 1], strides = [1, 1]} : vector<8x32xf32> to vector<8x1xf32>
    %736 = vector.extract_strided_slice %616 {offsets = [13, 0], sizes = [1, 128], strides = [1, 1]} : vector<32x128xf32> to vector<1x128xf32>
    %737 = vector.broadcast %735 : vector<8x1xf32> to vector<8x128xf32>
    %738 = vector.broadcast %736 : vector<1x128xf32> to vector<8x128xf32>
    %739 = arith.addf %737, %738 : vector<8x128xf32>
    %740 = math.tanh %739 : vector<8x128xf32>
    %741 = vector.broadcast %596 : f32 to vector<8x128xf32>
    %742 = arith.mulf %741, %740 : vector<8x128xf32>
    %743 = arith.addf %734, %742 : vector<8x128xf32>
    %744 = vector.extract_strided_slice %577 {offsets = [0, 14], sizes = [8, 1], strides = [1, 1]} : vector<8x32xf32> to vector<8x1xf32>
    %745 = vector.extract_strided_slice %616 {offsets = [14, 0], sizes = [1, 128], strides = [1, 1]} : vector<32x128xf32> to vector<1x128xf32>
    %746 = vector.broadcast %744 : vector<8x1xf32> to vector<8x128xf32>
    %747 = vector.broadcast %745 : vector<1x128xf32> to vector<8x128xf32>
    %748 = arith.addf %746, %747 : vector<8x128xf32>
    %749 = math.tanh %748 : vector<8x128xf32>
    %750 = vector.broadcast %597 : f32 to vector<8x128xf32>
    %751 = arith.mulf %750, %749 : vector<8x128xf32>
    %752 = arith.addf %743, %751 : vector<8x128xf32>
    %753 = vector.extract_strided_slice %577 {offsets = [0, 15], sizes = [8, 1], strides = [1, 1]} : vector<8x32xf32> to vector<8x1xf32>
    %754 = vector.extract_strided_slice %616 {offsets = [15, 0], sizes = [1, 128], strides = [1, 1]} : vector<32x128xf32> to vector<1x128xf32>
    %755 = vector.broadcast %753 : vector<8x1xf32> to vector<8x128xf32>
    %756 = vector.broadcast %754 : vector<1x128xf32> to vector<8x128xf32>
    %757 = arith.addf %755, %756 : vector<8x128xf32>
    %758 = math.tanh %757 : vector<8x128xf32>
    %759 = vector.broadcast %598 : f32 to vector<8x128xf32>
    %760 = arith.mulf %759, %758 : vector<8x128xf32>
    %761 = arith.addf %752, %760 : vector<8x128xf32>
    %762 = vector.extract_strided_slice %577 {offsets = [0, 16], sizes = [8, 1], strides = [1, 1]} : vector<8x32xf32> to vector<8x1xf32>
    %763 = vector.extract_strided_slice %616 {offsets = [16, 0], sizes = [1, 128], strides = [1, 1]} : vector<32x128xf32> to vector<1x128xf32>
    %764 = vector.broadcast %762 : vector<8x1xf32> to vector<8x128xf32>
    %765 = vector.broadcast %763 : vector<1x128xf32> to vector<8x128xf32>
    %766 = arith.addf %764, %765 : vector<8x128xf32>
    %767 = math.tanh %766 : vector<8x128xf32>
    %768 = vector.broadcast %599 : f32 to vector<8x128xf32>
    %769 = arith.mulf %768, %767 : vector<8x128xf32>
    %770 = arith.addf %761, %769 : vector<8x128xf32>
    %771 = vector.extract_strided_slice %577 {offsets = [0, 17], sizes = [8, 1], strides = [1, 1]} : vector<8x32xf32> to vector<8x1xf32>
    %772 = vector.extract_strided_slice %616 {offsets = [17, 0], sizes = [1, 128], strides = [1, 1]} : vector<32x128xf32> to vector<1x128xf32>
    %773 = vector.broadcast %771 : vector<8x1xf32> to vector<8x128xf32>
    %774 = vector.broadcast %772 : vector<1x128xf32> to vector<8x128xf32>
    %775 = arith.addf %773, %774 : vector<8x128xf32>
    %776 = math.tanh %775 : vector<8x128xf32>
    %777 = vector.broadcast %600 : f32 to vector<8x128xf32>
    %778 = arith.mulf %777, %776 : vector<8x128xf32>
    %779 = arith.addf %770, %778 : vector<8x128xf32>
    %780 = vector.extract_strided_slice %577 {offsets = [0, 18], sizes = [8, 1], strides = [1, 1]} : vector<8x32xf32> to vector<8x1xf32>
    %781 = vector.extract_strided_slice %616 {offsets = [18, 0], sizes = [1, 128], strides = [1, 1]} : vector<32x128xf32> to vector<1x128xf32>
    %782 = vector.broadcast %780 : vector<8x1xf32> to vector<8x128xf32>
    %783 = vector.broadcast %781 : vector<1x128xf32> to vector<8x128xf32>
    %784 = arith.addf %782, %783 : vector<8x128xf32>
    %785 = math.tanh %784 : vector<8x128xf32>
    %786 = vector.broadcast %601 : f32 to vector<8x128xf32>
    %787 = arith.mulf %786, %785 : vector<8x128xf32>
    %788 = arith.addf %779, %787 : vector<8x128xf32>
    %789 = vector.extract_strided_slice %577 {offsets = [0, 19], sizes = [8, 1], strides = [1, 1]} : vector<8x32xf32> to vector<8x1xf32>
    %790 = vector.extract_strided_slice %616 {offsets = [19, 0], sizes = [1, 128], strides = [1, 1]} : vector<32x128xf32> to vector<1x128xf32>
    %791 = vector.broadcast %789 : vector<8x1xf32> to vector<8x128xf32>
    %792 = vector.broadcast %790 : vector<1x128xf32> to vector<8x128xf32>
    %793 = arith.addf %791, %792 : vector<8x128xf32>
    %794 = math.tanh %793 : vector<8x128xf32>
    %795 = vector.broadcast %602 : f32 to vector<8x128xf32>
    %796 = arith.mulf %795, %794 : vector<8x128xf32>
    %797 = arith.addf %788, %796 : vector<8x128xf32>
    %798 = vector.extract_strided_slice %577 {offsets = [0, 20], sizes = [8, 1], strides = [1, 1]} : vector<8x32xf32> to vector<8x1xf32>
    %799 = vector.extract_strided_slice %616 {offsets = [20, 0], sizes = [1, 128], strides = [1, 1]} : vector<32x128xf32> to vector<1x128xf32>
    %800 = vector.broadcast %798 : vector<8x1xf32> to vector<8x128xf32>
    %801 = vector.broadcast %799 : vector<1x128xf32> to vector<8x128xf32>
    %802 = arith.addf %800, %801 : vector<8x128xf32>
    %803 = math.tanh %802 : vector<8x128xf32>
    %804 = vector.broadcast %603 : f32 to vector<8x128xf32>
    %805 = arith.mulf %804, %803 : vector<8x128xf32>
    %806 = arith.addf %797, %805 : vector<8x128xf32>
    %807 = vector.extract_strided_slice %577 {offsets = [0, 21], sizes = [8, 1], strides = [1, 1]} : vector<8x32xf32> to vector<8x1xf32>
    %808 = vector.extract_strided_slice %616 {offsets = [21, 0], sizes = [1, 128], strides = [1, 1]} : vector<32x128xf32> to vector<1x128xf32>
    %809 = vector.broadcast %807 : vector<8x1xf32> to vector<8x128xf32>
    %810 = vector.broadcast %808 : vector<1x128xf32> to vector<8x128xf32>
    %811 = arith.addf %809, %810 : vector<8x128xf32>
    %812 = math.tanh %811 : vector<8x128xf32>
    %813 = vector.broadcast %604 : f32 to vector<8x128xf32>
    %814 = arith.mulf %813, %812 : vector<8x128xf32>
    %815 = arith.addf %806, %814 : vector<8x128xf32>
    %816 = vector.extract_strided_slice %577 {offsets = [0, 22], sizes = [8, 1], strides = [1, 1]} : vector<8x32xf32> to vector<8x1xf32>
    %817 = vector.extract_strided_slice %616 {offsets = [22, 0], sizes = [1, 128], strides = [1, 1]} : vector<32x128xf32> to vector<1x128xf32>
    %818 = vector.broadcast %816 : vector<8x1xf32> to vector<8x128xf32>
    %819 = vector.broadcast %817 : vector<1x128xf32> to vector<8x128xf32>
    %820 = arith.addf %818, %819 : vector<8x128xf32>
    %821 = math.tanh %820 : vector<8x128xf32>
    %822 = vector.broadcast %605 : f32 to vector<8x128xf32>
    %823 = arith.mulf %822, %821 : vector<8x128xf32>
    %824 = arith.addf %815, %823 : vector<8x128xf32>
    %825 = vector.extract_strided_slice %577 {offsets = [0, 23], sizes = [8, 1], strides = [1, 1]} : vector<8x32xf32> to vector<8x1xf32>
    %826 = vector.extract_strided_slice %616 {offsets = [23, 0], sizes = [1, 128], strides = [1, 1]} : vector<32x128xf32> to vector<1x128xf32>
    %827 = vector.broadcast %825 : vector<8x1xf32> to vector<8x128xf32>
    %828 = vector.broadcast %826 : vector<1x128xf32> to vector<8x128xf32>
    %829 = arith.addf %827, %828 : vector<8x128xf32>
    %830 = math.tanh %829 : vector<8x128xf32>
    %831 = vector.broadcast %606 : f32 to vector<8x128xf32>
    %832 = arith.mulf %831, %830 : vector<8x128xf32>
    %833 = arith.addf %824, %832 : vector<8x128xf32>
    %834 = vector.extract_strided_slice %577 {offsets = [0, 24], sizes = [8, 1], strides = [1, 1]} : vector<8x32xf32> to vector<8x1xf32>
    %835 = vector.extract_strided_slice %616 {offsets = [24, 0], sizes = [1, 128], strides = [1, 1]} : vector<32x128xf32> to vector<1x128xf32>
    %836 = vector.broadcast %834 : vector<8x1xf32> to vector<8x128xf32>
    %837 = vector.broadcast %835 : vector<1x128xf32> to vector<8x128xf32>
    %838 = arith.addf %836, %837 : vector<8x128xf32>
    %839 = math.tanh %838 : vector<8x128xf32>
    %840 = vector.broadcast %607 : f32 to vector<8x128xf32>
    %841 = arith.mulf %840, %839 : vector<8x128xf32>
    %842 = arith.addf %833, %841 : vector<8x128xf32>
    %843 = vector.extract_strided_slice %577 {offsets = [0, 25], sizes = [8, 1], strides = [1, 1]} : vector<8x32xf32> to vector<8x1xf32>
    %844 = vector.extract_strided_slice %616 {offsets = [25, 0], sizes = [1, 128], strides = [1, 1]} : vector<32x128xf32> to vector<1x128xf32>
    %845 = vector.broadcast %843 : vector<8x1xf32> to vector<8x128xf32>
    %846 = vector.broadcast %844 : vector<1x128xf32> to vector<8x128xf32>
    %847 = arith.addf %845, %846 : vector<8x128xf32>
    %848 = math.tanh %847 : vector<8x128xf32>
    %849 = vector.broadcast %608 : f32 to vector<8x128xf32>
    %850 = arith.mulf %849, %848 : vector<8x128xf32>
    %851 = arith.addf %842, %850 : vector<8x128xf32>
    %852 = vector.extract_strided_slice %577 {offsets = [0, 26], sizes = [8, 1], strides = [1, 1]} : vector<8x32xf32> to vector<8x1xf32>
    %853 = vector.extract_strided_slice %616 {offsets = [26, 0], sizes = [1, 128], strides = [1, 1]} : vector<32x128xf32> to vector<1x128xf32>
    %854 = vector.broadcast %852 : vector<8x1xf32> to vector<8x128xf32>
    %855 = vector.broadcast %853 : vector<1x128xf32> to vector<8x128xf32>
    %856 = arith.addf %854, %855 : vector<8x128xf32>
    %857 = math.tanh %856 : vector<8x128xf32>
    %858 = vector.broadcast %609 : f32 to vector<8x128xf32>
    %859 = arith.mulf %858, %857 : vector<8x128xf32>
    %860 = arith.addf %851, %859 : vector<8x128xf32>
    %861 = vector.extract_strided_slice %577 {offsets = [0, 27], sizes = [8, 1], strides = [1, 1]} : vector<8x32xf32> to vector<8x1xf32>
    %862 = vector.extract_strided_slice %616 {offsets = [27, 0], sizes = [1, 128], strides = [1, 1]} : vector<32x128xf32> to vector<1x128xf32>
    %863 = vector.broadcast %861 : vector<8x1xf32> to vector<8x128xf32>
    %864 = vector.broadcast %862 : vector<1x128xf32> to vector<8x128xf32>
    %865 = arith.addf %863, %864 : vector<8x128xf32>
    %866 = math.tanh %865 : vector<8x128xf32>
    %867 = vector.broadcast %610 : f32 to vector<8x128xf32>
    %868 = arith.mulf %867, %866 : vector<8x128xf32>
    %869 = arith.addf %860, %868 : vector<8x128xf32>
    %870 = vector.extract_strided_slice %577 {offsets = [0, 28], sizes = [8, 1], strides = [1, 1]} : vector<8x32xf32> to vector<8x1xf32>
    %871 = vector.extract_strided_slice %616 {offsets = [28, 0], sizes = [1, 128], strides = [1, 1]} : vector<32x128xf32> to vector<1x128xf32>
    %872 = vector.broadcast %870 : vector<8x1xf32> to vector<8x128xf32>
    %873 = vector.broadcast %871 : vector<1x128xf32> to vector<8x128xf32>
    %874 = arith.addf %872, %873 : vector<8x128xf32>
    %875 = math.tanh %874 : vector<8x128xf32>
    %876 = vector.broadcast %611 : f32 to vector<8x128xf32>
    %877 = arith.mulf %876, %875 : vector<8x128xf32>
    %878 = arith.addf %869, %877 : vector<8x128xf32>
    %879 = vector.extract_strided_slice %577 {offsets = [0, 29], sizes = [8, 1], strides = [1, 1]} : vector<8x32xf32> to vector<8x1xf32>
    %880 = vector.extract_strided_slice %616 {offsets = [29, 0], sizes = [1, 128], strides = [1, 1]} : vector<32x128xf32> to vector<1x128xf32>
    %881 = vector.broadcast %879 : vector<8x1xf32> to vector<8x128xf32>
    %882 = vector.broadcast %880 : vector<1x128xf32> to vector<8x128xf32>
    %883 = arith.addf %881, %882 : vector<8x128xf32>
    %884 = math.tanh %883 : vector<8x128xf32>
    %885 = vector.broadcast %612 : f32 to vector<8x128xf32>
    %886 = arith.mulf %885, %884 : vector<8x128xf32>
    %887 = arith.addf %878, %886 : vector<8x128xf32>
    %888 = vector.extract_strided_slice %577 {offsets = [0, 30], sizes = [8, 1], strides = [1, 1]} : vector<8x32xf32> to vector<8x1xf32>
    %889 = vector.extract_strided_slice %616 {offsets = [30, 0], sizes = [1, 128], strides = [1, 1]} : vector<32x128xf32> to vector<1x128xf32>
    %890 = vector.broadcast %888 : vector<8x1xf32> to vector<8x128xf32>
    %891 = vector.broadcast %889 : vector<1x128xf32> to vector<8x128xf32>
    %892 = arith.addf %890, %891 : vector<8x128xf32>
    %893 = math.tanh %892 : vector<8x128xf32>
    %894 = vector.broadcast %613 : f32 to vector<8x128xf32>
    %895 = arith.mulf %894, %893 : vector<8x128xf32>
    %896 = arith.addf %887, %895 : vector<8x128xf32>
    %897 = vector.extract_strided_slice %577 {offsets = [0, 31], sizes = [8, 1], strides = [1, 1]} : vector<8x32xf32> to vector<8x1xf32>
    %898 = vector.extract_strided_slice %616 {offsets = [31, 0], sizes = [1, 128], strides = [1, 1]} : vector<32x128xf32> to vector<1x128xf32>
    %899 = vector.broadcast %897 : vector<8x1xf32> to vector<8x128xf32>
    %900 = vector.broadcast %898 : vector<1x128xf32> to vector<8x128xf32>
    %901 = arith.addf %899, %900 : vector<8x128xf32>
    %902 = math.tanh %901 : vector<8x128xf32>
    %903 = vector.broadcast %614 : f32 to vector<8x128xf32>
    %904 = arith.mulf %903, %902 : vector<8x128xf32>
    %905 = arith.addf %896, %904 : vector<8x128xf32>
    %906 = vector.broadcast %615 : f32 to vector<8x128xf32>
    %907 = arith.addf %905, %906 : vector<8x128xf32>
    %c0_147 = arith.constant 0 : index
    %c0_148 = arith.constant 0 : index
    %908 = vector.load %arg12[%c0_147, %c0_148] : memref<8x128xf32, #tpu.memory_space<vmem>>, vector<8x128xf32>
    tpu.vector_store %arg12[%c0_147, %c0_148], %907 {strides = array<i32>} : memref<8x128xf32, #tpu.memory_space<vmem>>, vector<8x128xf32>,
    return
  }
}

</mosaic_0001>

<llo_original>
// kernel: forward.1
$region0: #{forward.1}
  #allocation0 [shape = 'u32[]', space=smem, size = 0x4, offset = 0x4, fixed_abs, tag = 'smem constant byte address 0x4 - core index']
  #allocation1 [shape = 'u32[72,128]{1,0:T(1,128)}', space=vmem, size = 0x9000, scoped, tag = 'internal scratch']
  #allocation2 [shape = 'f32[8,256]{1,0:T(8,128)}', space=vmem, size = 0x2000, scoped, tag = 'scratch operand']
  #allocation3 [shape = 'f32[8,512]{1,0:T(8,128)}', space=vmem, size = 0x4000, scoped, tag = 'scratch operand']
  #allocation4 [shape = 'f32[8,512]{1,0:T(8,128)}', space=vmem, size = 0x4000, scoped, tag = 'scratch operand']
  #allocation5 [shape = 'f32[32,128]{1,0:T(8,128)}', space=vmem, size = 0x4000, scoped, tag = 'scratch operand']
  #allocation6 [shape = 'f32[1]{0:T(128)S(6)}', space=smem, size = 0x200, scoped, tag = 'scoped memory for forward.1']
  %s0 = inlined_call_operand.vmem [shape: f32[8,24], index: 0, kind: input, shape index: {}]
  %s1 = inlined_call_operand.vmem [shape: bf16[24,512], index: 1, kind: input, shape index: {}]
  %s2 = inlined_call_operand.hbm [shape: bf16[128,512], index: 2, kind: input, shape index: {}]
  %s3 = inlined_call_operand.vmem [shape: f32[1,512], index: 3, kind: input, shape index: {}]
  %s4 = inlined_call_operand.vmem [shape: bf16[24,512], index: 4, kind: input, shape index: {}]
  %s5 = inlined_call_operand.hbm [shape: bf16[128,512], index: 5, kind: input, shape index: {}]
  %s6 = inlined_call_operand.vmem [shape: f32[1,512], index: 6, kind: input, shape index: {}]
  %s7 = inlined_call_operand.vmem [shape: bf16[256,32], index: 7, kind: input, shape index: {}]
  %s8 = inlined_call_operand.vmem [shape: bf16[32,256], index: 8, kind: input, shape index: {}]
  %s9 = inlined_call_operand.vmem [shape: f32[1,32], index: 9, kind: input, shape index: {}]
  %s10 = inlined_call_operand.vmem [shape: f32[32], index: 10, kind: input, shape index: {}]
  %s11 = inlined_call_operand.<no memory space> [shape: f32[1], index: 11, kind: input, shape index: {}]
  %s12 = inlined_call_operand.vmem [shape: f32[8,128], index: 12, kind: output, shape index: {}]
  %s13 = sld [smem:[#allocation0]]
  $region70: #{forward.1} parent=0
    _
  %s15 = ssub.s32 1, %s13
  %s16 = scalar_select 0, %s15, %s13
  %17 = sst [smem:[#allocation6]] %s11
  $region1: #{forward.1} parent=0
    #allocation7 [shape = 'u8[131072]{0}', space=vmem, size = 0x20000, scoped, tag = 'input window, operand 2, single buffered']
    #allocation8 [shape = 's32[1]{0}', space=sflag, size = 0x4, scoped, tag = 'scoped memory for forward.1']
    #allocation9 [shape = 's32[1]{0}', space=sflag, size = 0x4, scoped, tag = 'scoped memory for forward.1']
    #allocation10 [shape = 'u8[131072]{0}', space=vmem, size = 0x20000, scoped, tag = 'input window, operand 5, single buffered']
    #allocation11 [shape = 's32[1]{0}', space=sflag, size = 0x4, scoped, tag = 'scoped memory for forward.1']
    #allocation12 [shape = 'u8[512]{0}', space=smem, size = 0x200, scoped, tag = 'input window, operand 10, single buffered']
    %18 = vsyncpa [#allocation8], 0
    %19 = vsyncpa [#allocation11], 0
    %20 = vsyncpa [#allocation9], 0
    // Predicated region
    $region2: #{forward.1} parent=1 // pred_check
      _
    $region3: #{forward.1} parent=1 // pred_check_branch
      %22 = sbr.rel (0) target = $region5
    $region4: #{forward.1} parent=1 // pred_region
      _
    $region5: #{forward.1} parent=1 // pred_fallthru
      _
    // Predicated region
    $region6: #{forward.1} parent=1 // pred_check
      _
    $region7: #{forward.1} parent=1 // pred_check_branch
      %24 = sbr.rel (0) target = $region9
    $region8: #{forward.1} parent=1 // pred_region
      _
    $region9: #{forward.1} parent=1 // pred_fallthru
      _
    // Predicated region
    $region10: #{forward.1} parent=1 // pred_check
      _
    $region11: #{forward.1} parent=1 // pred_check_branch
      %26 = sbr.rel (0) target = $region13
    $region12: #{forward.1} parent=1 // pred_region
      %28 = vsyncadd [#allocation8], 0
      %s29 = sshll.u32 %s2, 4
      %s30 = int_to_ptr.hbm [resolvable:$true] %s29
      %s31 = sshll.u32 [#allocation7], 4
      %s32 = int_to_ptr.vmem [resolvable:$true] %s31
      %37 = dma.hbm_to_vmem [thread:$0]  %s30, 4096, %s32, [#allocation8], 256, 256, 16
    $region13: #{forward.1} parent=1 // pred_fallthru
      _
    // Predicated region
    $region14: #{forward.1} parent=1 // pred_check
      _
    $region15: #{forward.1} parent=1 // pred_check_branch
      %39 = sbr.rel (0) target = $region17
    $region16: #{forward.1} parent=1 // pred_region
      _
    $region17: #{forward.1} parent=1 // pred_fallthru
      _
    // Predicated region
    $region18: #{forward.1} parent=1 // pred_check
      _
    $region19: #{forward.1} parent=1 // pred_check_branch
      %41 = sbr.rel (0) target = $region21
    $region20: #{forward.1} parent=1 // pred_region
      _
    $region21: #{forward.1} parent=1 // pred_fallthru
      _
    // Predicated region
    $region22: #{forward.1} parent=1 // pred_check
      _
    $region23: #{forward.1} parent=1 // pred_check_branch
      %43 = sbr.rel (0) target = $region25
    $region24: #{forward.1} parent=1 // pred_region
      %45 = vsyncadd [#allocation11], 0
      %s46 = sshll.u32 %s5, 4
      %s47 = int_to_ptr.hbm [resolvable:$true] %s46
      %s48 = sshll.u32 [#allocation10], 4
      %s49 = int_to_ptr.vmem [resolvable:$true] %s48
      %54 = dma.hbm_to_vmem [thread:$0]  %s47, 4096, %s49, [#allocation11], 256, 256, 16
    $region25: #{forward.1} parent=1 // pred_fallthru
      _
    // Predicated region
    $region26: #{forward.1} parent=1 // pred_check
      _
    $region27: #{forward.1} parent=1 // pred_check_branch
      %56 = sbr.rel (0) target = $region29
    $region28: #{forward.1} parent=1 // pred_region
      _
    $region29: #{forward.1} parent=1 // pred_fallthru
      _
    // Predicated region
    $region30: #{forward.1} parent=1 // pred_check
      _
    $region31: #{forward.1} parent=1 // pred_check_branch
      %58 = sbr.rel (0) target = $region33
    $region32: #{forward.1} parent=1 // pred_region
      _
    $region33: #{forward.1} parent=1 // pred_fallthru
      _
    // Predicated region
    $region34: #{forward.1} parent=1 // pred_check
      _
    $region35: #{forward.1} parent=1 // pred_check_branch
      %60 = sbr.rel (0) target = $region37
    $region36: #{forward.1} parent=1 // pred_region
      _
    $region37: #{forward.1} parent=1 // pred_fallthru
      _
    // Predicated region
    $region38: #{forward.1} parent=1 // pred_check
      _
    $region39: #{forward.1} parent=1 // pred_check_branch
      %62 = sbr.rel (0) target = $region41
    $region40: #{forward.1} parent=1 // pred_region
      _
    $region41: #{forward.1} parent=1 // pred_fallthru
      _
    // Predicated region
    $region42: #{forward.1} parent=1 // pred_check
      _
    $region43: #{forward.1} parent=1 // pred_check_branch
      %64 = sbr.rel (0) target = $region45
    $region44: #{forward.1} parent=1 // pred_region
      %66 = vsyncadd [#allocation9], 0
      %s68 = sshll.u32 %s10, 4
      %s69 = int_to_ptr.vmem [resolvable:$true] %s68
      %71 = dma.vmem_to_smem %s69, 16, [#allocation12], [#allocation9]
    $region45: #{forward.1} parent=1 // pred_fallthru
      _
    // Predicated region
    $region46: #{forward.1} parent=1 // pred_check
      _
    $region47: #{forward.1} parent=1 // pred_check_branch
      %73 = sbr.rel (0) target = $region49
    $region48: #{forward.1} parent=1 // pred_region
      _
    $region49: #{forward.1} parent=1 // pred_fallthru
      _
    // Predicated region
    $region50: #{forward.1} parent=1 // pred_check
      _
    $region51: #{forward.1} parent=1 // pred_check_branch
      %75 = sbr.rel (0) target = $region53
    $region52: #{forward.1} parent=1 // pred_region
      %77 = dma.done [#allocation8], 4096
    $region53: #{forward.1} parent=1 // pred_fallthru
      _
    // Predicated region
    $region54: #{forward.1} parent=1 // pred_check
      _
    $region55: #{forward.1} parent=1 // pred_check_branch
      %79 = sbr.rel (0) target = $region57
    $region56: #{forward.1} parent=1 // pred_region
      %81 = dma.done [#allocation11], 4096
    $region57: #{forward.1} parent=1 // pred_fallthru
      _
    // Predicated region
    $region58: #{forward.1} parent=1 // pred_check
      _
    $region59: #{forward.1} parent=1 // pred_check_branch
      %83 = sbr.rel (0) target = $region61
    $region60: #{forward.1} parent=1 // pred_region
      %85 = dma.done [#allocation9], 16
    $region61: #{forward.1} parent=1 // pred_fallthru
      _
    %86 = sfence
    %v88 = vld [vmem:[%s0] sm:$0xff]
    %v89 = vpack.c.bf16 %v88, %v88
    %v90 = vld [vmem:[%s1] sm:$0xff]
    %v91 = vld [vmem:[%s1 + $0x8] sm:$0xff]
    %v92 = vld [vmem:[%s1 + $0x10] sm:$0xff]
    %v93 = vld [vmem:[%s1 + $0x18] sm:$0xff]
    %v94 = vld [vmem:[%s1 + $0x20] sm:$0xff]
    %v95 = vld [vmem:[%s1 + $0x28] sm:$0xff]
    %v96 = vld [vmem:[%s3] sm:$0xf]
    %v98 = vperm.slane %v96, 0
    %v99 = vperm.slane %v96, 1
    %v100 = vperm.slane %v96, 2
    %v101 = vperm.slane %v96, 3
    %v112 = vunpack.c.l.b16 %v90
    %v113 = vunpack.c.h.b16 %v90
    %v114 = vunpack.c.l.b16 %v91
    %v115 = vunpack.c.h.b16 %v91
    %v116 = vunpack.c.l.b16 %v92
    %v117 = vunpack.c.h.b16 %v92
    %v118 = vunpack.c.l.b16 %v93
    %v119 = vunpack.c.h.b16 %v93
    %v120 = vunpack.c.l.b16 %v94
    %v121 = vunpack.c.h.b16 %v94
    %v122 = vunpack.c.l.b16 %v95
    %v123 = vunpack.c.h.b16 %v95
    %v124 = vpack.c.b16 %v116, %v112
    %v125 = vpack.c.b16 %v117, %v113
    %v126 = vpack.c.b16 %v118, %v114
    %v127 = vpack.c.b16 %v119, %v115
    %v128 = vpack.c.b16 %v120, %v120
    %v129 = vpack.c.b16 %v121, %v121
    %v130 = vpack.c.b16 %v122, %v122
    %v131 = vpack.c.b16 %v123, %v123
    %vm136 = vcmask 195584
    %v138 = vsel %vm136, %v89, 0
    %vm140 = vcmask 1043456
    %v142 = vsel %vm140, %v128, 0
    %v145 = vsel %vm140, %v129, 0
    %v148 = vsel %vm140, %v130, 0
    %v151 = vsel %vm140, %v131, 0
    %153 = vmatpush.bf16.msra.mxu0 0
    %154 = vmatpush.bf16.msra.mxu0 0
    %155 = vmatpush.bf16.msra.mxu0 0
    %156 = vmatpush.bf16.msra.mxu0 0
    %157 = vmatpush.bf16.msra.mxu0 0
    %158 = vmatpush.bf16.msra.mxu0 0
    %159 = vmatpush.bf16.msra.mxu0 %v142
    %160 = vmatpush.bf16.msra.mxu0 %v124
    %161 = vmatmul.bf16.gmra.mxu0 %v138
    %v162 = vpop.f32.mrf.mxu0
    %v163 = vadd.f32 %v98, %v162
    %v164 = vpop.f32.mrf.mxu0
    %165 = vdwg.mxu0
    %166 = vmatpush.bf16.msra.mxu0 0
    %167 = vmatpush.bf16.msra.mxu0 0
    %168 = vmatpush.bf16.msra.mxu0 0
    %169 = vmatpush.bf16.msra.mxu0 0
    %170 = vmatpush.bf16.msra.mxu0 0
    %171 = vmatpush.bf16.msra.mxu0 0
    %172 = vmatpush.bf16.msra.mxu0 %v145
    %173 = vmatpush.bf16.msra.mxu0 %v125
    %174 = vmatmul.bf16.gmra.mxu0 %v138
    %v175 = vpop.f32.mrf.mxu0
    %v176 = vadd.f32 %v99, %v175
    %v177 = vpop.f32.mrf.mxu0
    %178 = vdwg.mxu0
    %179 = vmatpush.bf16.msra.mxu0 0
    %180 = vmatpush.bf16.msra.mxu0 0
    %181 = vmatpush.bf16.msra.mxu0 0
    %182 = vmatpush.bf16.msra.mxu0 0
    %183 = vmatpush.bf16.msra.mxu0 0
    %184 = vmatpush.bf16.msra.mxu0 0
    %185 = vmatpush.bf16.msra.mxu0 %v148
    %186 = vmatpush.bf16.msra.mxu0 %v126
    %187 = vmatmul.bf16.gmra.mxu0 %v138
    %v188 = vpop.f32.mrf.mxu0
    %v189 = vadd.f32 %v100, %v188
    %v190 = vpop.f32.mrf.mxu0
    %191 = vdwg.mxu0
    %192 = vmatpush.bf16.msra.mxu0 0
    %193 = vmatpush.bf16.msra.mxu0 0
    %194 = vmatpush.bf16.msra.mxu0 0
    %195 = vmatpush.bf16.msra.mxu0 0
    %196 = vmatpush.bf16.msra.mxu0 0
    %197 = vmatpush.bf16.msra.mxu0 0
    %198 = vmatpush.bf16.msra.mxu0 %v151
    %199 = vmatpush.bf16.msra.mxu0 %v127
    %200 = vmatmul.bf16.gmra.mxu0 %v138
    %v201 = vpop.f32.mrf.mxu0
    %v202 = vadd.f32 %v101, %v201
    %v203 = vpop.f32.mrf.mxu0
    %204 = vdwg.mxu0
    %205 = vst [vmem:[#allocation3] sm:$0xff] %v163
    %206 = vst [vmem:[#allocation3 + $0x8] sm:$0xff] %v176
    %207 = vst [vmem:[#allocation3 + $0x10] sm:$0xff] %v189
    %208 = vst [vmem:[#allocation3 + $0x18] sm:$0xff] %v202
    %v209 = vld [vmem:[%s4] sm:$0xff]
    %v210 = vld [vmem:[%s4 + $0x8] sm:$0xff]
    %v211 = vld [vmem:[%s4 + $0x10] sm:$0xff]
    %v212 = vld [vmem:[%s4 + $0x18] sm:$0xff]
    %v213 = vld [vmem:[%s4 + $0x20] sm:$0xff]
    %v214 = vld [vmem:[%s4 + $0x28] sm:$0xff]
    %v215 = vld [vmem:[%s6] sm:$0xf]
    %v217 = vperm.slane %v215, 0
    %v218 = vperm.slane %v215, 1
    %v219 = vperm.slane %v215, 2
    %v220 = vperm.slane %v215, 3
    %v231 = vunpack.c.l.b16 %v209
    %v232 = vunpack.c.h.b16 %v209
    %v233 = vunpack.c.l.b16 %v210
    %v234 = vunpack.c.h.b16 %v210
    %v235 = vunpack.c.l.b16 %v211
    %v236 = vunpack.c.h.b16 %v211
    %v237 = vunpack.c.l.b16 %v212
    %v238 = vunpack.c.h.b16 %v212
    %v239 = vunpack.c.l.b16 %v213
    %v240 = vunpack.c.h.b16 %v213
    %v241 = vunpack.c.l.b16 %v214
    %v242 = vunpack.c.h.b16 %v214
    %v243 = vpack.c.b16 %v235, %v231
    %v244 = vpack.c.b16 %v236, %v232
    %v245 = vpack.c.b16 %v237, %v233
    %v246 = vpack.c.b16 %v238, %v234
    %v247 = vpack.c.b16 %v239, %v239
    %v248 = vpack.c.b16 %v240, %v240
    %v249 = vpack.c.b16 %v241, %v241
    %v250 = vpack.c.b16 %v242, %v242
    %v256 = vsel %vm140, %v247, 0
    %v259 = vsel %vm140, %v248, 0
    %v262 = vsel %vm140, %v249, 0
    %v265 = vsel %vm140, %v250, 0
    %267 = vmatpush.bf16.msra.mxu0 0
    %268 = vmatpush.bf16.msra.mxu0 0
    %269 = vmatpush.bf16.msra.mxu0 0
    %270 = vmatpush.bf16.msra.mxu0 0
    %271 = vmatpush.bf16.msra.mxu0 0
    %272 = vmatpush.bf16.msra.mxu0 0
    %273 = vmatpush.bf16.msra.mxu0 %v256
    %274 = vmatpush.bf16.msra.mxu0 %v243
    %275 = vmatmul.bf16.gmra.mxu0 %v138
    %v276 = vpop.f32.mrf.mxu0
    %v277 = vadd.f32 %v217, %v276
    %v278 = vpop.f32.mrf.mxu0
    %279 = vdwg.mxu0
    %280 = vmatpush.bf16.msra.mxu0 0
    %281 = vmatpush.bf16.msra.mxu0 0
    %282 = vmatpush.bf16.msra.mxu0 0
    %283 = vmatpush.bf16.msra.mxu0 0
    %284 = vmatpush.bf16.msra.mxu0 0
    %285 = vmatpush.bf16.msra.mxu0 0
    %286 = vmatpush.bf16.msra.mxu0 %v259
    %287 = vmatpush.bf16.msra.mxu0 %v244
    %288 = vmatmul.bf16.gmra.mxu0 %v138
    %v289 = vpop.f32.mrf.mxu0
    %v290 = vadd.f32 %v218, %v289
    %v291 = vpop.f32.mrf.mxu0
    %292 = vdwg.mxu0
    %293 = vmatpush.bf16.msra.mxu0 0
    %294 = vmatpush.bf16.msra.mxu0 0
    %295 = vmatpush.bf16.msra.mxu0 0
    %296 = vmatpush.bf16.msra.mxu0 0
    %297 = vmatpush.bf16.msra.mxu0 0
    %298 = vmatpush.bf16.msra.mxu0 0
    %299 = vmatpush.bf16.msra.mxu0 %v262
    %300 = vmatpush.bf16.msra.mxu0 %v245
    %301 = vmatmul.bf16.gmra.mxu0 %v138
    %v302 = vpop.f32.mrf.mxu0
    %v303 = vadd.f32 %v219, %v302
    %v304 = vpop.f32.mrf.mxu0
    %305 = vdwg.mxu0
    %306 = vmatpush.bf16.msra.mxu0 0
    %307 = vmatpush.bf16.msra.mxu0 0
    %308 = vmatpush.bf16.msra.mxu0 0
    %309 = vmatpush.bf16.msra.mxu0 0
    %310 = vmatpush.bf16.msra.mxu0 0
    %311 = vmatpush.bf16.msra.mxu0 0
    %312 = vmatpush.bf16.msra.mxu0 %v265
    %313 = vmatpush.bf16.msra.mxu0 %v246
    %314 = vmatmul.bf16.gmra.mxu0 %v138
    %v315 = vpop.f32.mrf.mxu0
    %v316 = vadd.f32 %v220, %v315
    %v317 = vpop.f32.mrf.mxu0
    %318 = vdwg.mxu0
    %319 = vst [vmem:[#allocation4] sm:$0xff] %v277
    %320 = vst [vmem:[#allocation4 + $0x8] sm:$0xff] %v290
    %321 = vst [vmem:[#allocation4 + $0x10] sm:$0xff] %v303
    %322 = vst [vmem:[#allocation4 + $0x18] sm:$0xff] %v316
    %v323 = vld [vmem:[#allocation7] sm:$0xff]
    %v324 = vld [vmem:[#allocation7 + $0x8] sm:$0xff]
    %v325 = vld [vmem:[#allocation7 + $0x10] sm:$0xff]
    %v326 = vld [vmem:[#allocation7 + $0x18] sm:$0xff]
    %v327 = vld [vmem:[#allocation7 + $0x20] sm:$0xff]
    %v328 = vld [vmem:[#allocation7 + $0x28] sm:$0xff]
    %v329 = vld [vmem:[#allocation7 + $0x30] sm:$0xff]
    %v330 = vld [vmem:[#allocation7 + $0x38] sm:$0xff]
    %v331 = vld [vmem:[#allocation7 + $0x40] sm:$0xff]
    %v332 = vld [vmem:[#allocation7 + $0x48] sm:$0xff]
    %v333 = vld [vmem:[#allocation7 + $0x50] sm:$0xff]
    %v334 = vld [vmem:[#allocation7 + $0x58] sm:$0xff]
    %v335 = vld [vmem:[#allocation7 + $0x60] sm:$0xff]
    %v336 = vld [vmem:[#allocation7 + $0x68] sm:$0xff]
    %v337 = vld [vmem:[#allocation7 + $0x70] sm:$0xff]
    %v338 = vld [vmem:[#allocation7 + $0x78] sm:$0xff]
    %v339 = vld [vmem:[#allocation7 + $0x80] sm:$0xff]
    %v340 = vld [vmem:[#allocation7 + $0x88] sm:$0xff]
    %v341 = vld [vmem:[#allocation7 + $0x90] sm:$0xff]
    %v342 = vld [vmem:[#allocation7 + $0x98] sm:$0xff]
    %v343 = vld [vmem:[#allocation7 + $0xa0] sm:$0xff]
    %v344 = vld [vmem:[#allocation7 + $0xa8] sm:$0xff]
    %v345 = vld [vmem:[#allocation7 + $0xb0] sm:$0xff]
    %v346 = vld [vmem:[#allocation7 + $0xb8] sm:$0xff]
    %v347 = vld [vmem:[#allocation7 + $0xc0] sm:$0xff]
    %v348 = vld [vmem:[#allocation7 + $0xc8] sm:$0xff]
    %v349 = vld [vmem:[#allocation7 + $0xd0] sm:$0xff]
    %v350 = vld [vmem:[#allocation7 + $0xd8] sm:$0xff]
    %v351 = vld [vmem:[#allocation7 + $0xe0] sm:$0xff]
    %v352 = vld [vmem:[#allocation7 + $0xe8] sm:$0xff]
    %v353 = vld [vmem:[#allocation7 + $0xf0] sm:$0xff]
    %v354 = vld [vmem:[#allocation7 + $0xf8] sm:$0xff]
    %v355 = vld [vmem:[#allocation10] sm:$0xff]
    %v356 = vld [vmem:[#allocation10 + $0x8] sm:$0xff]
    %v357 = vld [vmem:[#allocation10 + $0x10] sm:$0xff]
    %v358 = vld [vmem:[#allocation10 + $0x18] sm:$0xff]
    %v359 = vld [vmem:[#allocation10 + $0x20] sm:$0xff]
    %v360 = vld [vmem:[#allocation10 + $0x28] sm:$0xff]
    %v361 = vld [vmem:[#allocation10 + $0x30] sm:$0xff]
    %v362 = vld [vmem:[#allocation10 + $0x38] sm:$0xff]
    %v363 = vld [vmem:[#allocation10 + $0x40] sm:$0xff]
    %v364 = vld [vmem:[#allocation10 + $0x48] sm:$0xff]
    %v365 = vld [vmem:[#allocation10 + $0x50] sm:$0xff]
    %v366 = vld [vmem:[#allocation10 + $0x58] sm:$0xff]
    %v367 = vld [vmem:[#allocation10 + $0x60] sm:$0xff]
    %v368 = vld [vmem:[#allocation10 + $0x68] sm:$0xff]
    %v369 = vld [vmem:[#allocation10 + $0x70] sm:$0xff]
    %v370 = vld [vmem:[#allocation10 + $0x78] sm:$0xff]
    %v371 = vld [vmem:[#allocation10 + $0x80] sm:$0xff]
    %v372 = vld [vmem:[#allocation10 + $0x88] sm:$0xff]
    %v373 = vld [vmem:[#allocation10 + $0x90] sm:$0xff]
    %v374 = vld [vmem:[#allocation10 + $0x98] sm:$0xff]
    %v375 = vld [vmem:[#allocation10 + $0xa0] sm:$0xff]
    %v376 = vld [vmem:[#allocation10 + $0xa8] sm:$0xff]
    %v377 = vld [vmem:[#allocation10 + $0xb0] sm:$0xff]
    %v378 = vld [vmem:[#allocation10 + $0xb8] sm:$0xff]
    %v379 = vld [vmem:[#allocation10 + $0xc0] sm:$0xff]
    %v380 = vld [vmem:[#allocation10 + $0xc8] sm:$0xff]
    %v381 = vld [vmem:[#allocation10 + $0xd0] sm:$0xff]
    %v382 = vld [vmem:[#allocation10 + $0xd8] sm:$0xff]
    %v383 = vld [vmem:[#allocation10 + $0xe0] sm:$0xff]
    %v384 = vld [vmem:[#allocation10 + $0xe8] sm:$0xff]
    %v385 = vld [vmem:[#allocation10 + $0xf0] sm:$0xff]
    %v386 = vld [vmem:[#allocation10 + $0xf8] sm:$0xff]
    %s387 = ssub.s32 7, 0
    %s388 = smul.u32 0, 4
    %s389 = smul.addr %s388, 8
    %s390 = scalar_lea.vmem [#allocation3], %s389
    %v391 = vld [vmem:[%s390] ss:$8 sm:$0xf]
    %v424 = vunpack.c.l.b16 %v323
    %v425 = vunpack.c.h.b16 %v323
    %v426 = vunpack.c.l.b16 %v324
    %v427 = vunpack.c.h.b16 %v324
    %v428 = vunpack.c.l.b16 %v325
    %v429 = vunpack.c.h.b16 %v325
    %v430 = vunpack.c.l.b16 %v326
    %v431 = vunpack.c.h.b16 %v326
    %v432 = vunpack.c.l.b16 %v327
    %v433 = vunpack.c.h.b16 %v327
    %v434 = vunpack.c.l.b16 %v328
    %v435 = vunpack.c.h.b16 %v328
    %v436 = vunpack.c.l.b16 %v329
    %v437 = vunpack.c.h.b16 %v329
    %v438 = vunpack.c.l.b16 %v330
    %v439 = vunpack.c.h.b16 %v330
    %v440 = vunpack.c.l.b16 %v331
    %v441 = vunpack.c.h.b16 %v331
    %v442 = vunpack.c.l.b16 %v332
    %v443 = vunpack.c.h.b16 %v332
    %v444 = vunpack.c.l.b16 %v333
    %v445 = vunpack.c.h.b16 %v333
    %v446 = vunpack.c.l.b16 %v334
    %v447 = vunpack.c.h.b16 %v334
    %v448 = vunpack.c.l.b16 %v335
    %v449 = vunpack.c.h.b16 %v335
    %v450 = vunpack.c.l.b16 %v336
    %v451 = vunpack.c.h.b16 %v336
    %v452 = vunpack.c.l.b16 %v337
    %v453 = vunpack.c.h.b16 %v337
    %v454 = vunpack.c.l.b16 %v338
    %v455 = vunpack.c.h.b16 %v338
    %v456 = vunpack.c.l.b16 %v339
    %v457 = vunpack.c.h.b16 %v339
    %v458 = vunpack.c.l.b16 %v340
    %v459 = vunpack.c.h.b16 %v340
    %v460 = vunpack.c.l.b16 %v341
    %v461 = vunpack.c.h.b16 %v341
    %v462 = vunpack.c.l.b16 %v342
    %v463 = vunpack.c.h.b16 %v342
    %v464 = vunpack.c.l.b16 %v343
    %v465 = vunpack.c.h.b16 %v343
    %v466 = vunpack.c.l.b16 %v344
    %v467 = vunpack.c.h.b16 %v344
    %v468 = vunpack.c.l.b16 %v345
    %v469 = vunpack.c.h.b16 %v345
    %v470 = vunpack.c.l.b16 %v346
    %v471 = vunpack.c.h.b16 %v346
    %v472 = vunpack.c.l.b16 %v347
    %v473 = vunpack.c.h.b16 %v347
    %v474 = vunpack.c.l.b16 %v348
    %v475 = vunpack.c.h.b16 %v348
    %v476 = vunpack.c.l.b16 %v349
    %v477 = vunpack.c.h.b16 %v349
    %v478 = vunpack.c.l.b16 %v350
    %v479 = vunpack.c.h.b16 %v350
    %v480 = vunpack.c.l.b16 %v351
    %v481 = vunpack.c.h.b16 %v351
    %v482 = vunpack.c.l.b16 %v352
    %v483 = vunpack.c.h.b16 %v352
    %v484 = vunpack.c.l.b16 %v353
    %v485 = vunpack.c.h.b16 %v353
    %v486 = vunpack.c.l.b16 %v354
    %v487 = vunpack.c.h.b16 %v354
    %v488 = vpack.c.b16 %v428, %v424
    %v489 = vpack.c.b16 %v429, %v425
    %v490 = vpack.c.b16 %v430, %v426
    %v491 = vpack.c.b16 %v431, %v427
    %v492 = vpack.c.b16 %v436, %v432
    %v493 = vpack.c.b16 %v437, %v433
    %v494 = vpack.c.b16 %v438, %v434
    %v495 = vpack.c.b16 %v439, %v435
    %v496 = vpack.c.b16 %v444, %v440
    %v497 = vpack.c.b16 %v445, %v441
    %v498 = vpack.c.b16 %v446, %v442
    %v499 = vpack.c.b16 %v447, %v443
    %v500 = vpack.c.b16 %v452, %v448
    %v501 = vpack.c.b16 %v453, %v449
    %v502 = vpack.c.b16 %v454, %v450
    %v503 = vpack.c.b16 %v455, %v451
    %v504 = vpack.c.b16 %v460, %v456
    %v505 = vpack.c.b16 %v461, %v457
    %v506 = vpack.c.b16 %v462, %v458
    %v507 = vpack.c.b16 %v463, %v459
    %v508 = vpack.c.b16 %v468, %v464
    %v509 = vpack.c.b16 %v469, %v465
    %v510 = vpack.c.b16 %v470, %v466
    %v511 = vpack.c.b16 %v471, %v467
    %v512 = vpack.c.b16 %v476, %v472
    %v513 = vpack.c.b16 %v477, %v473
    %v514 = vpack.c.b16 %v478, %v474
    %v515 = vpack.c.b16 %v479, %v475
    %v516 = vpack.c.b16 %v484, %v480
    %v517 = vpack.c.b16 %v485, %v481
    %v518 = vpack.c.b16 %v486, %v482
    %v519 = vpack.c.b16 %v487, %v483
    %552 = vmatpush.bf16.msra.mxu0 %v516
    %553 = vmatpush.bf16.msra.mxu0 %v512
    %554 = vmatpush.bf16.msra.mxu0 %v508
    %555 = vmatpush.bf16.msra.mxu0 %v504
    %556 = vmatpush.bf16.msra.mxu0 %v500
    %557 = vmatpush.bf16.msra.mxu0 %v496
    %558 = vmatpush.bf16.msra.mxu0 %v492
    %559 = vmatpush.bf16.msra.mxu0 %v488
    %560 = vmatmul.bf16.gmra.mxu0 0
    %v561 = vpop.f32.mrf.mxu0
    %v562 = vadd.f32 0.0, %v561
    %v563 = vpop.f32.mrf.mxu0
    %564 = vdwg.mxu0
    %565 = vmatpush.bf16.msra.mxu0 %v517
    %566 = vmatpush.bf16.msra.mxu0 %v513
    %567 = vmatpush.bf16.msra.mxu0 %v509
    %568 = vmatpush.bf16.msra.mxu0 %v505
    %569 = vmatpush.bf16.msra.mxu0 %v501
    %570 = vmatpush.bf16.msra.mxu0 %v497
    %571 = vmatpush.bf16.msra.mxu0 %v493
    %572 = vmatpush.bf16.msra.mxu0 %v489
    %573 = vmatmul.bf16.gmra.mxu0 0
    %v574 = vpop.f32.mrf.mxu0
    %v575 = vadd.f32 0.0, %v574
    %v576 = vpop.f32.mrf.mxu0
    %577 = vdwg.mxu0
    %578 = vmatpush.bf16.msra.mxu0 %v518
    %579 = vmatpush.bf16.msra.mxu0 %v514
    %580 = vmatpush.bf16.msra.mxu0 %v510
    %581 = vmatpush.bf16.msra.mxu0 %v506
    %582 = vmatpush.bf16.msra.mxu0 %v502
    %583 = vmatpush.bf16.msra.mxu0 %v498
    %584 = vmatpush.bf16.msra.mxu0 %v494
    %585 = vmatpush.bf16.msra.mxu0 %v490
    %586 = vmatmul.bf16.gmra.mxu0 0
    %v587 = vpop.f32.mrf.mxu0
    %v588 = vadd.f32 0.0, %v587
    %v589 = vpop.f32.mrf.mxu0
    %590 = vdwg.mxu0
    %591 = vmatpush.bf16.msra.mxu0 %v519
    %592 = vmatpush.bf16.msra.mxu0 %v515
    %593 = vmatpush.bf16.msra.mxu0 %v511
    %594 = vmatpush.bf16.msra.mxu0 %v507
    %595 = vmatpush.bf16.msra.mxu0 %v503
    %596 = vmatpush.bf16.msra.mxu0 %v499
    %597 = vmatpush.bf16.msra.mxu0 %v495
    %598 = vmatpush.bf16.msra.mxu0 %v491
    %599 = vmatmul.bf16.gmra.mxu0 0
    %v600 = vpop.f32.mrf.mxu0
    %v601 = vadd.f32 0.0, %v600
    %v602 = vpop.f32.mrf.mxu0
    %603 = vdwg.mxu0
    %v608 = vrot.slane %v575, 7
    %v609 = vrot.slane %v588, 6
    %v610 = vrot.slane %v601, 5
    %vm611 = vcmask 1040384
    %v612 = vsel %vm611, %v562, %v608
    %vm613 = vcmask 1042434
    %v614 = vsel %vm613, %v609, %v610
    %vm615 = vcmask 1041408
    %v616 = vsel %vm615, %v612, %v614
    %v618 = vadd.f32 %v391, %v616
    %v619 = vxor.u32 %v618, 2147483648
    %v620 = vmul.f32 %v619, 1.442695
    %v621 = vpow.pop %v620
    %v622 = vadd.f32 %v621, 1.0
    %v623 = vrcp.pop %v622
    %v624 = vmul.f32 %v622, %v623
    %v625 = vsub.f32 1.0, %v624
    %v626 = vmul.f32 %v623, %v625
    %v627 = vadd.f32 %v623, %v626
    %vm628 = vweird.f32 %v622
    %vm629 = vweird.f32 %v623
    %vm630 = vmor %vm628, %vm629
    %v631 = vsel %vm630, %v623, %v627
    %v632 = vand.u32 2147483647, %v622
    %vm633 = vcmp.eq.f32.partialorder %v632, 8.507059e+37
    %v634 = vand.u32 %v622, 2147483648
    %v635 = vor.u32 1.1754944e-38, %v634
    %v636 = vsel %vm633, %v635, %v631
    %v637 = vmul.f32 1.0, %v636
    %v639 = vrot.slane %v618, 1
    %v641 = vxor.u32 %v639, 2147483648
    %v642 = vmul.f32 %v641, 1.442695
    %v643 = vpow.pop %v642
    %v644 = vadd.f32 %v643, 1.0
    %v645 = vrcp.pop %v644
    %v646 = vmul.f32 %v644, %v645
    %v647 = vsub.f32 1.0, %v646
    %v648 = vmul.f32 %v645, %v647
    %v649 = vadd.f32 %v645, %v648
    %vm650 = vweird.f32 %v644
    %vm651 = vweird.f32 %v645
    %vm652 = vmor %vm650, %vm651
    %v653 = vsel %vm652, %v645, %v649
    %v654 = vand.u32 2147483647, %v644
    %vm655 = vcmp.eq.f32.partialorder %v654, 8.507059e+37
    %v656 = vand.u32 %v644, 2147483648
    %v657 = vor.u32 1.1754944e-38, %v656
    %v658 = vsel %vm655, %v657, %v653
    %v659 = vmul.f32 1.0, %v658
    %v660 = vrot.slane %v618, 2
    %v662 = vtanh.pop %v660
    %v663 = vrot.slane %v618, 3
    %v665 = vxor.u32 %v663, 2147483648
    %v666 = vmul.f32 %v665, 1.442695
    %v667 = vpow.pop %v666
    %v668 = vadd.f32 %v667, 1.0
    %v669 = vrcp.pop %v668
    %v670 = vmul.f32 %v668, %v669
    %v671 = vsub.f32 1.0, %v670
    %v672 = vmul.f32 %v669, %v671
    %v673 = vadd.f32 %v669, %v672
    %vm674 = vweird.f32 %v668
    %vm675 = vweird.f32 %v669
    %vm676 = vmor %vm674, %vm675
    %v677 = vsel %vm676, %v669, %v673
    %v678 = vand.u32 2147483647, %v668
    %vm679 = vcmp.eq.f32.partialorder %v678, 8.507059e+37
    %v680 = vand.u32 %v668, 2147483648
    %v681 = vor.u32 1.1754944e-38, %v680
    %v682 = vsel %vm679, %v681, %v677
    %v683 = vmul.f32 1.0, %v682
    %v684 = vmul.f32 %v659, 0.0
    %v685 = vmul.f32 %v637, %v662
    %v686 = vadd.f32 %v684, %v685
    %v687 = vtanh.pop %v686
    %v688 = vmul.f32 %v683, %v687
    %p689 = scmp.lt.s32.totalorder 0, 8
    %s690 = scalar_select %p689, 1, 0
    %v691 = vstv %s690
    %vm692 = vcmp.eq.s32.totalorder %v691, 1
    %v693 = vsel %vm692, %v688, 0.0
    %v694 = vsel %vm692, %v686, 0.0
    %s695 = sshra.s32 %s387, 3
    %s696 = sand.u32 %s387, 7
    %s697 = sshra.s32 %s387, 3
    %s698 = sand.u32 %s387, 7
    %s699 = smul.u32 %s695, 4
    %s700 = smul.u32 %s699, 8
    %s701 = sadd.s32 %s700, %s698
    %s702 = scalar_lea.vmem [#allocation4], %s701
    %v703 = vld [vmem:[%s702] ss:$8 sm:$0xf]
    %v736 = vunpack.c.l.b16 %v355
    %v737 = vunpack.c.h.b16 %v355
    %v738 = vunpack.c.l.b16 %v356
    %v739 = vunpack.c.h.b16 %v356
    %v740 = vunpack.c.l.b16 %v357
    %v741 = vunpack.c.h.b16 %v357
    %v742 = vunpack.c.l.b16 %v358
    %v743 = vunpack.c.h.b16 %v358
    %v744 = vunpack.c.l.b16 %v359
    %v745 = vunpack.c.h.b16 %v359
    %v746 = vunpack.c.l.b16 %v360
    %v747 = vunpack.c.h.b16 %v360
    %v748 = vunpack.c.l.b16 %v361
    %v749 = vunpack.c.h.b16 %v361
    %v750 = vunpack.c.l.b16 %v362
    %v751 = vunpack.c.h.b16 %v362
    %v752 = vunpack.c.l.b16 %v363
    %v753 = vunpack.c.h.b16 %v363
    %v754 = vunpack.c.l.b16 %v364
    %v755 = vunpack.c.h.b16 %v364
    %v756 = vunpack.c.l.b16 %v365
    %v757 = vunpack.c.h.b16 %v365
    %v758 = vunpack.c.l.b16 %v366
    %v759 = vunpack.c.h.b16 %v366
    %v760 = vunpack.c.l.b16 %v367
    %v761 = vunpack.c.h.b16 %v367
    %v762 = vunpack.c.l.b16 %v368
    %v763 = vunpack.c.h.b16 %v368
    %v764 = vunpack.c.l.b16 %v369
    %v765 = vunpack.c.h.b16 %v369
    %v766 = vunpack.c.l.b16 %v370
    %v767 = vunpack.c.h.b16 %v370
    %v768 = vunpack.c.l.b16 %v371
    %v769 = vunpack.c.h.b16 %v371
    %v770 = vunpack.c.l.b16 %v372
    %v771 = vunpack.c.h.b16 %v372
    %v772 = vunpack.c.l.b16 %v373
    %v773 = vunpack.c.h.b16 %v373
    %v774 = vunpack.c.l.b16 %v374
    %v775 = vunpack.c.h.b16 %v374
    %v776 = vunpack.c.l.b16 %v375
    %v777 = vunpack.c.h.b16 %v375
    %v778 = vunpack.c.l.b16 %v376
    %v779 = vunpack.c.h.b16 %v376
    %v780 = vunpack.c.l.b16 %v377
    %v781 = vunpack.c.h.b16 %v377
    %v782 = vunpack.c.l.b16 %v378
    %v783 = vunpack.c.h.b16 %v378
    %v784 = vunpack.c.l.b16 %v379
    %v785 = vunpack.c.h.b16 %v379
    %v786 = vunpack.c.l.b16 %v380
    %v787 = vunpack.c.h.b16 %v380
    %v788 = vunpack.c.l.b16 %v381
    %v789 = vunpack.c.h.b16 %v381
    %v790 = vunpack.c.l.b16 %v382
    %v791 = vunpack.c.h.b16 %v382
    %v792 = vunpack.c.l.b16 %v383
    %v793 = vunpack.c.h.b16 %v383
    %v794 = vunpack.c.l.b16 %v384
    %v795 = vunpack.c.h.b16 %v384
    %v796 = vunpack.c.l.b16 %v385
    %v797 = vunpack.c.h.b16 %v385
    %v798 = vunpack.c.l.b16 %v386
    %v799 = vunpack.c.h.b16 %v386
    %v800 = vpack.c.b16 %v740, %v736
    %v801 = vpack.c.b16 %v741, %v737
    %v802 = vpack.c.b16 %v742, %v738
    %v803 = vpack.c.b16 %v743, %v739
    %v804 = vpack.c.b16 %v748, %v744
    %v805 = vpack.c.b16 %v749, %v745
    %v806 = vpack.c.b16 %v750, %v746
    %v807 = vpack.c.b16 %v751, %v747
    %v808 = vpack.c.b16 %v756, %v752
    %v809 = vpack.c.b16 %v757, %v753
    %v810 = vpack.c.b16 %v758, %v754
    %v811 = vpack.c.b16 %v759, %v755
    %v812 = vpack.c.b16 %v764, %v760
    %v813 = vpack.c.b16 %v765, %v761
    %v814 = vpack.c.b16 %v766, %v762
    %v815 = vpack.c.b16 %v767, %v763
    %v816 = vpack.c.b16 %v772, %v768
    %v817 = vpack.c.b16 %v773, %v769
    %v818 = vpack.c.b16 %v774, %v770
    %v819 = vpack.c.b16 %v775, %v771
    %v820 = vpack.c.b16 %v780, %v776
    %v821 = vpack.c.b16 %v781, %v777
    %v822 = vpack.c.b16 %v782, %v778
    %v823 = vpack.c.b16 %v783, %v779
    %v824 = vpack.c.b16 %v788, %v784
    %v825 = vpack.c.b16 %v789, %v785
    %v826 = vpack.c.b16 %v790, %v786
    %v827 = vpack.c.b16 %v791, %v787
    %v828 = vpack.c.b16 %v796, %v792
    %v829 = vpack.c.b16 %v797, %v793
    %v830 = vpack.c.b16 %v798, %v794
    %v831 = vpack.c.b16 %v799, %v795
    %864 = vmatpush.bf16.msra.mxu0 %v828
    %865 = vmatpush.bf16.msra.mxu0 %v824
    %866 = vmatpush.bf16.msra.mxu0 %v820
    %867 = vmatpush.bf16.msra.mxu0 %v816
    %868 = vmatpush.bf16.msra.mxu0 %v812
    %869 = vmatpush.bf16.msra.mxu0 %v808
    %870 = vmatpush.bf16.msra.mxu0 %v804
    %871 = vmatpush.bf16.msra.mxu0 %v800
    %872 = vmatmul.bf16.gmra.mxu0 0
    %v873 = vpop.f32.mrf.mxu0
    %v874 = vadd.f32 0.0, %v873
    %v875 = vpop.f32.mrf.mxu0
    %876 = vdwg.mxu0
    %877 = vmatpush.bf16.msra.mxu0 %v829
    %878 = vmatpush.bf16.msra.mxu0 %v825
    %879 = vmatpush.bf16.msra.mxu0 %v821
    %880 = vmatpush.bf16.msra.mxu0 %v817
    %881 = vmatpush.bf16.msra.mxu0 %v813
    %882 = vmatpush.bf16.msra.mxu0 %v809
    %883 = vmatpush.bf16.msra.mxu0 %v805
    %884 = vmatpush.bf16.msra.mxu0 %v801
    %885 = vmatmul.bf16.gmra.mxu0 0
    %v886 = vpop.f32.mrf.mxu0
    %v887 = vadd.f32 0.0, %v886
    %v888 = vpop.f32.mrf.mxu0
    %889 = vdwg.mxu0
    %890 = vmatpush.bf16.msra.mxu0 %v830
    %891 = vmatpush.bf16.msra.mxu0 %v826
    %892 = vmatpush.bf16.msra.mxu0 %v822
    %893 = vmatpush.bf16.msra.mxu0 %v818
    %894 = vmatpush.bf16.msra.mxu0 %v814
    %895 = vmatpush.bf16.msra.mxu0 %v810
    %896 = vmatpush.bf16.msra.mxu0 %v806
    %897 = vmatpush.bf16.msra.mxu0 %v802
    %898 = vmatmul.bf16.gmra.mxu0 0
    %v899 = vpop.f32.mrf.mxu0
    %v900 = vadd.f32 0.0, %v899
    %v901 = vpop.f32.mrf.mxu0
    %902 = vdwg.mxu0
    %903 = vmatpush.bf16.msra.mxu0 %v831
    %904 = vmatpush.bf16.msra.mxu0 %v827
    %905 = vmatpush.bf16.msra.mxu0 %v823
    %906 = vmatpush.bf16.msra.mxu0 %v819
    %907 = vmatpush.bf16.msra.mxu0 %v815
    %908 = vmatpush.bf16.msra.mxu0 %v811
    %909 = vmatpush.bf16.msra.mxu0 %v807
    %910 = vmatpush.bf16.msra.mxu0 %v803
    %911 = vmatmul.bf16.gmra.mxu0 0
    %v912 = vpop.f32.mrf.mxu0
    %v913 = vadd.f32 0.0, %v912
    %v914 = vpop.f32.mrf.mxu0
    %915 = vdwg.mxu0
    %v920 = vrot.slane %v887, 7
    %v921 = vrot.slane %v900, 6
    %v922 = vrot.slane %v913, 5
    %v923 = vsel %vm611, %v874, %v920
    %v924 = vsel %vm613, %v921, %v922
    %v925 = vsel %vm615, %v923, %v924
    %v927 = vadd.f32 %v703, %v925
    %v928 = vxor.u32 %v927, 2147483648
    %v929 = vmul.f32 %v928, 1.442695
    %v930 = vpow.pop %v929
    %v931 = vadd.f32 %v930, 1.0
    %v932 = vrcp.pop %v931
    %v933 = vmul.f32 %v931, %v932
    %v934 = vsub.f32 1.0, %v933
    %v935 = vmul.f32 %v932, %v934
    %v936 = vadd.f32 %v932, %v935
    %vm937 = vweird.f32 %v931
    %vm938 = vweird.f32 %v932
    %vm939 = vmor %vm937, %vm938
    %v940 = vsel %vm939, %v932, %v936
    %v941 = vand.u32 2147483647, %v931
    %vm942 = vcmp.eq.f32.partialorder %v941, 8.507059e+37
    %v943 = vand.u32 %v931, 2147483648
    %v944 = vor.u32 1.1754944e-38, %v943
    %v945 = vsel %vm942, %v944, %v940
    %v946 = vmul.f32 1.0, %v945
    %v948 = vrot.slane %v927, 1
    %v950 = vxor.u32 %v948, 2147483648
    %v951 = vmul.f32 %v950, 1.442695
    %v952 = vpow.pop %v951
    %v953 = vadd.f32 %v952, 1.0
    %v954 = vrcp.pop %v953
    %v955 = vmul.f32 %v953, %v954
    %v956 = vsub.f32 1.0, %v955
    %v957 = vmul.f32 %v954, %v956
    %v958 = vadd.f32 %v954, %v957
    %vm959 = vweird.f32 %v953
    %vm960 = vweird.f32 %v954
    %vm961 = vmor %vm959, %vm960
    %v962 = vsel %vm961, %v954, %v958
    %v963 = vand.u32 2147483647, %v953
    %vm964 = vcmp.eq.f32.partialorder %v963, 8.507059e+37
    %v965 = vand.u32 %v953, 2147483648
    %v966 = vor.u32 1.1754944e-38, %v965
    %v967 = vsel %vm964, %v966, %v962
    %v968 = vmul.f32 1.0, %v967
    %v969 = vrot.slane %v927, 2
    %v971 = vtanh.pop %v969
    %v972 = vrot.slane %v927, 3
    %v974 = vxor.u32 %v972, 2147483648
    %v975 = vmul.f32 %v974, 1.442695
    %v976 = vpow.pop %v975
    %v977 = vadd.f32 %v976, 1.0
    %v978 = vrcp.pop %v977
    %v979 = vmul.f32 %v977, %v978
    %v980 = vsub.f32 1.0, %v979
    %v981 = vmul.f32 %v978, %v980
    %v982 = vadd.f32 %v978, %v981
    %vm983 = vweird.f32 %v977
    %vm984 = vweird.f32 %v978
    %vm985 = vmor %vm983, %vm984
    %v986 = vsel %vm985, %v978, %v982
    %v987 = vand.u32 2147483647, %v977
    %vm988 = vcmp.eq.f32.partialorder %v987, 8.507059e+37
    %v989 = vand.u32 %v977, 2147483648
    %v990 = vor.u32 1.1754944e-38, %v989
    %v991 = vsel %vm988, %v990, %v986
    %v992 = vmul.f32 1.0, %v991
    %v993 = vmul.f32 %v968, 0.0
    %v994 = vmul.f32 %v946, %v971
    %v995 = vadd.f32 %v993, %v994
    %v996 = vtanh.pop %v995
    %v997 = vmul.f32 %v992, %v996
    %p998 = scmp.lt.s32.totalorder %s387, 8
    %s999 = scalar_select %p998, 1, 0
    %v1000 = vstv %s999
    %vm1001 = vcmp.eq.s32.totalorder %v1000, 1
    %v1002 = vsel %vm1001, %v997, 0.0
    %v1003 = vsel %vm1001, %v995, 0.0
    %s1004 = sadd.s32 0, 1
    %s1005 = ssub.s32 6, 0
    %s1006 = sshra.s32 %s1004, 3
    %s1007 = sand.u32 %s1004, 7
    %s1008 = sshra.s32 %s1004, 3
    %s1009 = sand.u32 %s1004, 7
    %s1010 = smul.u32 %s1006, 4
    %s1011 = smul.u32 %s1010, 8
    %s1012 = sadd.s32 %s1011, %s1009
    %s1013 = scalar_lea.vmem [#allocation3], %s1012
    %v1014 = vld [vmem:[%s1013] ss:$8 sm:$0xf]
    %v1015 = vpack.c.bf16 %v693, %v693
    %1016 = vmatpush.bf16.msra.mxu0 %v516
    %1017 = vmatpush.bf16.msra.mxu0 %v512
    %1018 = vmatpush.bf16.msra.mxu0 %v508
    %1019 = vmatpush.bf16.msra.mxu0 %v504
    %1020 = vmatpush.bf16.msra.mxu0 %v500
    %1021 = vmatpush.bf16.msra.mxu0 %v496
    %1022 = vmatpush.bf16.msra.mxu0 %v492
    %1023 = vmatpush.bf16.msra.mxu0 %v488
    %1024 = vmatmul.bf16.gmra.mxu0 %v1015
    %v1025 = vpop.f32.mrf.mxu0
    %v1026 = vadd.f32 0.0, %v1025
    %v1027 = vpop.f32.mrf.mxu0
    %1028 = vdwg.mxu0
    %1029 = vmatpush.bf16.msra.mxu0 %v517
    %1030 = vmatpush.bf16.msra.mxu0 %v513
    %1031 = vmatpush.bf16.msra.mxu0 %v509
    %1032 = vmatpush.bf16.msra.mxu0 %v505
    %1033 = vmatpush.bf16.msra.mxu0 %v501
    %1034 = vmatpush.bf16.msra.mxu0 %v497
    %1035 = vmatpush.bf16.msra.mxu0 %v493
    %1036 = vmatpush.bf16.msra.mxu0 %v489
    %1037 = vmatmul.bf16.gmra.mxu0 %v1015
    %v1038 = vpop.f32.mrf.mxu0
    %v1039 = vadd.f32 0.0, %v1038
    %v1040 = vpop.f32.mrf.mxu0
    %1041 = vdwg.mxu0
    %1042 = vmatpush.bf16.msra.mxu0 %v518
    %1043 = vmatpush.bf16.msra.mxu0 %v514
    %1044 = vmatpush.bf16.msra.mxu0 %v510
    %1045 = vmatpush.bf16.msra.mxu0 %v506
    %1046 = vmatpush.bf16.msra.mxu0 %v502
    %1047 = vmatpush.bf16.msra.mxu0 %v498
    %1048 = vmatpush.bf16.msra.mxu0 %v494
    %1049 = vmatpush.bf16.msra.mxu0 %v490
    %1050 = vmatmul.bf16.gmra.mxu0 %v1015
    %v1051 = vpop.f32.mrf.mxu0
    %v1052 = vadd.f32 0.0, %v1051
    %v1053 = vpop.f32.mrf.mxu0
    %1054 = vdwg.mxu0
    %1055 = vmatpush.bf16.msra.mxu0 %v519
    %1056 = vmatpush.bf16.msra.mxu0 %v515
    %1057 = vmatpush.bf16.msra.mxu0 %v511
    %1058 = vmatpush.bf16.msra.mxu0 %v507
    %1059 = vmatpush.bf16.msra.mxu0 %v503
    %1060 = vmatpush.bf16.msra.mxu0 %v499
    %1061 = vmatpush.bf16.msra.mxu0 %v495
    %1062 = vmatpush.bf16.msra.mxu0 %v491
    %1063 = vmatmul.bf16.gmra.mxu0 %v1015
    %v1064 = vpop.f32.mrf.mxu0
    %v1065 = vadd.f32 0.0, %v1064
    %v1066 = vpop.f32.mrf.mxu0
    %1067 = vdwg.mxu0
    %v1072 = vrot.slane %v1039, 7
    %v1073 = vrot.slane %v1052, 6
    %v1074 = vrot.slane %v1065, 5
    %v1075 = vsel %vm611, %v1026, %v1072
    %v1076 = vsel %vm613, %v1073, %v1074
    %v1077 = vsel %vm615, %v1075, %v1076
    %v1079 = vadd.f32 %v1014, %v1077
    %v1080 = vxor.u32 %v1079, 2147483648
    %v1081 = vmul.f32 %v1080, 1.442695
    %v1082 = vpow.pop %v1081
    %v1083 = vadd.f32 %v1082, 1.0
    %v1084 = vrcp.pop %v1083
    %v1085 = vmul.f32 %v1083, %v1084
    %v1086 = vsub.f32 1.0, %v1085
    %v1087 = vmul.f32 %v1084, %v1086
    %v1088 = vadd.f32 %v1084, %v1087
    %vm1089 = vweird.f32 %v1083
    %vm1090 = vweird.f32 %v1084
    %vm1091 = vmor %vm1089, %vm1090
    %v1092 = vsel %vm1091, %v1084, %v1088
    %v1093 = vand.u32 2147483647, %v1083
    %vm1094 = vcmp.eq.f32.partialorder %v1093, 8.507059e+37
    %v1095 = vand.u32 %v1083, 2147483648
    %v1096 = vor.u32 1.1754944e-38, %v1095
    %v1097 = vsel %vm1094, %v1096, %v1092
    %v1098 = vmul.f32 1.0, %v1097
    %v1100 = vrot.slane %v1079, 1
    %v1102 = vxor.u32 %v1100, 2147483648
    %v1103 = vmul.f32 %v1102, 1.442695
    %v1104 = vpow.pop %v1103
    %v1105 = vadd.f32 %v1104, 1.0
    %v1106 = vrcp.pop %v1105
    %v1107 = vmul.f32 %v1105, %v1106
    %v1108 = vsub.f32 1.0, %v1107
    %v1109 = vmul.f32 %v1106, %v1108
    %v1110 = vadd.f32 %v1106, %v1109
    %vm1111 = vweird.f32 %v1105
    %vm1112 = vweird.f32 %v1106
    %vm1113 = vmor %vm1111, %vm1112
    %v1114 = vsel %vm1113, %v1106, %v1110
    %v1115 = vand.u32 2147483647, %v1105
    %vm1116 = vcmp.eq.f32.partialorder %v1115, 8.507059e+37
    %v1117 = vand.u32 %v1105, 2147483648
    %v1118 = vor.u32 1.1754944e-38, %v1117
    %v1119 = vsel %vm1116, %v1118, %v1114
    %v1120 = vmul.f32 1.0, %v1119
    %v1121 = vrot.slane %v1079, 2
    %v1123 = vtanh.pop %v1121
    %v1124 = vrot.slane %v1079, 3
    %v1126 = vxor.u32 %v1124, 2147483648
    %v1127 = vmul.f32 %v1126, 1.442695
    %v1128 = vpow.pop %v1127
    %v1129 = vadd.f32 %v1128, 1.0
    %v1130 = vrcp.pop %v1129
    %v1131 = vmul.f32 %v1129, %v1130
    %v1132 = vsub.f32 1.0, %v1131
    %v1133 = vmul.f32 %v1130, %v1132
    %v1134 = vadd.f32 %v1130, %v1133
    %vm1135 = vweird.f32 %v1129
    %vm1136 = vweird.f32 %v1130
    %vm1137 = vmor %vm1135, %vm1136
    %v1138 = vsel %vm1137, %v1130, %v1134
    %v1139 = vand.u32 2147483647, %v1129
    %vm1140 = vcmp.eq.f32.partialorder %v1139, 8.507059e+37
    %v1141 = vand.u32 %v1129, 2147483648
    %v1142 = vor.u32 1.1754944e-38, %v1141
    %v1143 = vsel %vm1140, %v1142, %v1138
    %v1144 = vmul.f32 1.0, %v1143
    %v1145 = vmul.f32 %v1120, %v694
    %v1146 = vmul.f32 %v1098, %v1123
    %v1147 = vadd.f32 %v1145, %v1146
    %v1148 = vtanh.pop %v1147
    %v1149 = vmul.f32 %v1144, %v1148
    %p1150 = scmp.lt.s32.totalorder %s1004, 8
    %s1151 = scalar_select %p1150, 1, 0
    %v1152 = vstv %s1151
    %vm1153 = vcmp.eq.s32.totalorder %v1152, 1
    %v1154 = vsel %vm1153, %v1149, %v693
    %v1155 = vsel %vm1153, %v1147, %v694
    %s1156 = sshra.s32 %s1005, 3
    %s1157 = sand.u32 %s1005, 7
    %s1158 = sshra.s32 %s1005, 3
    %s1159 = sand.u32 %s1005, 7
    %s1160 = smul.u32 %s1156, 4
    %s1161 = smul.u32 %s1160, 8
    %s1162 = sadd.s32 %s1161, %s1159
    %s1163 = scalar_lea.vmem [#allocation4], %s1162
    %v1164 = vld [vmem:[%s1163] ss:$8 sm:$0xf]
    %v1165 = vpack.c.bf16 %v1002, %v1002
    %1166 = vmatpush.bf16.msra.mxu0 %v828
    %1167 = vmatpush.bf16.msra.mxu0 %v824
    %1168 = vmatpush.bf16.msra.mxu0 %v820
    %1169 = vmatpush.bf16.msra.mxu0 %v816
    %1170 = vmatpush.bf16.msra.mxu0 %v812
    %1171 = vmatpush.bf16.msra.mxu0 %v808
    %1172 = vmatpush.bf16.msra.mxu0 %v804
    %1173 = vmatpush.bf16.msra.mxu0 %v800
    %1174 = vmatmul.bf16.gmra.mxu0 %v1165
    %v1175 = vpop.f32.mrf.mxu0
    %v1176 = vadd.f32 0.0, %v1175
    %v1177 = vpop.f32.mrf.mxu0
    %1178 = vdwg.mxu0
    %1179 = vmatpush.bf16.msra.mxu0 %v829
    %1180 = vmatpush.bf16.msra.mxu0 %v825
    %1181 = vmatpush.bf16.msra.mxu0 %v821
    %1182 = vmatpush.bf16.msra.mxu0 %v817
    %1183 = vmatpush.bf16.msra.mxu0 %v813
    %1184 = vmatpush.bf16.msra.mxu0 %v809
    %1185 = vmatpush.bf16.msra.mxu0 %v805
    %1186 = vmatpush.bf16.msra.mxu0 %v801
    %1187 = vmatmul.bf16.gmra.mxu0 %v1165
    %v1188 = vpop.f32.mrf.mxu0
    %v1189 = vadd.f32 0.0, %v1188
    %v1190 = vpop.f32.mrf.mxu0
    %1191 = vdwg.mxu0
    %1192 = vmatpush.bf16.msra.mxu0 %v830
    %1193 = vmatpush.bf16.msra.mxu0 %v826
    %1194 = vmatpush.bf16.msra.mxu0 %v822
    %1195 = vmatpush.bf16.msra.mxu0 %v818
    %1196 = vmatpush.bf16.msra.mxu0 %v814
    %1197 = vmatpush.bf16.msra.mxu0 %v810
    %1198 = vmatpush.bf16.msra.mxu0 %v806
    %1199 = vmatpush.bf16.msra.mxu0 %v802
    %1200 = vmatmul.bf16.gmra.mxu0 %v1165
    %v1201 = vpop.f32.mrf.mxu0
    %v1202 = vadd.f32 0.0, %v1201
    %v1203 = vpop.f32.mrf.mxu0
    %1204 = vdwg.mxu0
    %1205 = vmatpush.bf16.msra.mxu0 %v831
    %1206 = vmatpush.bf16.msra.mxu0 %v827
    %1207 = vmatpush.bf16.msra.mxu0 %v823
    %1208 = vmatpush.bf16.msra.mxu0 %v819
    %1209 = vmatpush.bf16.msra.mxu0 %v815
    %1210 = vmatpush.bf16.msra.mxu0 %v811
    %1211 = vmatpush.bf16.msra.mxu0 %v807
    %1212 = vmatpush.bf16.msra.mxu0 %v803
    %1213 = vmatmul.bf16.gmra.mxu0 %v1165
    %v1214 = vpop.f32.mrf.mxu0
    %v1215 = vadd.f32 0.0, %v1214
    %v1216 = vpop.f32.mrf.mxu0
    %1217 = vdwg.mxu0
    %v1222 = vrot.slane %v1189, 7
    %v1223 = vrot.slane %v1202, 6
    %v1224 = vrot.slane %v1215, 5
    %v1225 = vsel %vm611, %v1176, %v1222
    %v1226 = vsel %vm613, %v1223, %v1224
    %v1227 = vsel %vm615, %v1225, %v1226
    %v1229 = vadd.f32 %v1164, %v1227
    %v1230 = vxor.u32 %v1229, 2147483648
    %v1231 = vmul.f32 %v1230, 1.442695
    %v1232 = vpow.pop %v1231
    %v1233 = vadd.f32 %v1232, 1.0
    %v1234 = vrcp.pop %v1233
    %v1235 = vmul.f32 %v1233, %v1234
    %v1236 = vsub.f32 1.0, %v1235
    %v1237 = vmul.f32 %v1234, %v1236
    %v1238 = vadd.f32 %v1234, %v1237
    %vm1239 = vweird.f32 %v1233
    %vm1240 = vweird.f32 %v1234
    %vm1241 = vmor %vm1239, %vm1240
    %v1242 = vsel %vm1241, %v1234, %v1238
    %v1243 = vand.u32 2147483647, %v1233
    %vm1244 = vcmp.eq.f32.partialorder %v1243, 8.507059e+37
    %v1245 = vand.u32 %v1233, 2147483648
    %v1246 = vor.u32 1.1754944e-38, %v1245
    %v1247 = vsel %vm1244, %v1246, %v1242
    %v1248 = vmul.f32 1.0, %v1247
    %v1250 = vrot.slane %v1229, 1
    %v1252 = vxor.u32 %v1250, 2147483648
    %v1253 = vmul.f32 %v1252, 1.442695
    %v1254 = vpow.pop %v1253
    %v1255 = vadd.f32 %v1254, 1.0
    %v1256 = vrcp.pop %v1255
    %v1257 = vmul.f32 %v1255, %v1256
    %v1258 = vsub.f32 1.0, %v1257
    %v1259 = vmul.f32 %v1256, %v1258
    %v1260 = vadd.f32 %v1256, %v1259
    %vm1261 = vweird.f32 %v1255
    %vm1262 = vweird.f32 %v1256
    %vm1263 = vmor %vm1261, %vm1262
    %v1264 = vsel %vm1263, %v1256, %v1260
    %v1265 = vand.u32 2147483647, %v1255
    %vm1266 = vcmp.eq.f32.partialorder %v1265, 8.507059e+37
    %v1267 = vand.u32 %v1255, 2147483648
    %v1268 = vor.u32 1.1754944e-38, %v1267
    %v1269 = vsel %vm1266, %v1268, %v1264
    %v1270 = vmul.f32 1.0, %v1269
    %v1271 = vrot.slane %v1229, 2
    %v1273 = vtanh.pop %v1271
    %v1274 = vrot.slane %v1229, 3
    %v1276 = vxor.u32 %v1274, 2147483648
    %v1277 = vmul.f32 %v1276, 1.442695
    %v1278 = vpow.pop %v1277
    %v1279 = vadd.f32 %v1278, 1.0
    %v1280 = vrcp.pop %v1279
    %v1281 = vmul.f32 %v1279, %v1280
    %v1282 = vsub.f32 1.0, %v1281
    %v1283 = vmul.f32 %v1280, %v1282
    %v1284 = vadd.f32 %v1280, %v1283
    %vm1285 = vweird.f32 %v1279
    %vm1286 = vweird.f32 %v1280
    %vm1287 = vmor %vm1285, %vm1286
    %v1288 = vsel %vm1287, %v1280, %v1284
    %v1289 = vand.u32 2147483647, %v1279
    %vm1290 = vcmp.eq.f32.partialorder %v1289, 8.507059e+37
    %v1291 = vand.u32 %v1279, 2147483648
    %v1292 = vor.u32 1.1754944e-38, %v1291
    %v1293 = vsel %vm1290, %v1292, %v1288
    %v1294 = vmul.f32 1.0, %v1293
    %v1295 = vmul.f32 %v1270, %v1003
    %v1296 = vmul.f32 %v1248, %v1273
    %v1297 = vadd.f32 %v1295, %v1296
    %v1298 = vtanh.pop %v1297
    %v1299 = vmul.f32 %v1294, %v1298
    %p1300 = scmp.lt.s32.totalorder %s1005, 8
    %s1301 = scalar_select %p1300, 1, 0
    %v1302 = vstv %s1301
    %vm1303 = vcmp.eq.s32.totalorder %v1302, 1
    %v1304 = vsel %vm1303, %v1299, %v1002
    %v1305 = vsel %vm1303, %v1297, %v1003
    %s1306 = sadd.s32 0, 2
    %s1307 = ssub.s32 5, 0
    %s1308 = sshra.s32 %s1306, 3
    %s1309 = sand.u32 %s1306, 7
    %s1310 = sshra.s32 %s1306, 3
    %s1311 = sand.u32 %s1306, 7
    %s1312 = smul.u32 %s1308, 4
    %s1313 = smul.u32 %s1312, 8
    %s1314 = sadd.s32 %s1313, %s1311
    %s1315 = scalar_lea.vmem [#allocation3], %s1314
    %v1316 = vld [vmem:[%s1315] ss:$8 sm:$0xf]
    %v1317 = vpack.c.bf16 %v1154, %v1154
    %1318 = vmatpush.bf16.msra.mxu0 %v516
    %1319 = vmatpush.bf16.msra.mxu0 %v512
    %1320 = vmatpush.bf16.msra.mxu0 %v508
    %1321 = vmatpush.bf16.msra.mxu0 %v504
    %1322 = vmatpush.bf16.msra.mxu0 %v500
    %1323 = vmatpush.bf16.msra.mxu0 %v496
    %1324 = vmatpush.bf16.msra.mxu0 %v492
    %1325 = vmatpush.bf16.msra.mxu0 %v488
    %1326 = vmatmul.bf16.gmra.mxu0 %v1317
    %v1327 = vpop.f32.mrf.mxu0
    %v1328 = vadd.f32 0.0, %v1327
    %v1329 = vpop.f32.mrf.mxu0
    %1330 = vdwg.mxu0
    %1331 = vmatpush.bf16.msra.mxu0 %v517
    %1332 = vmatpush.bf16.msra.mxu0 %v513
    %1333 = vmatpush.bf16.msra.mxu0 %v509
    %1334 = vmatpush.bf16.msra.mxu0 %v505
    %1335 = vmatpush.bf16.msra.mxu0 %v501
    %1336 = vmatpush.bf16.msra.mxu0 %v497
    %1337 = vmatpush.bf16.msra.mxu0 %v493
    %1338 = vmatpush.bf16.msra.mxu0 %v489
    %1339 = vmatmul.bf16.gmra.mxu0 %v1317
    %v1340 = vpop.f32.mrf.mxu0
    %v1341 = vadd.f32 0.0, %v1340
    %v1342 = vpop.f32.mrf.mxu0
    %1343 = vdwg.mxu0
    %1344 = vmatpush.bf16.msra.mxu0 %v518
    %1345 = vmatpush.bf16.msra.mxu0 %v514
    %1346 = vmatpush.bf16.msra.mxu0 %v510
    %1347 = vmatpush.bf16.msra.mxu0 %v506
    %1348 = vmatpush.bf16.msra.mxu0 %v502
    %1349 = vmatpush.bf16.msra.mxu0 %v498
    %1350 = vmatpush.bf16.msra.mxu0 %v494
    %1351 = vmatpush.bf16.msra.mxu0 %v490
    %1352 = vmatmul.bf16.gmra.mxu0 %v1317
    %v1353 = vpop.f32.mrf.mxu0
    %v1354 = vadd.f32 0.0, %v1353
    %v1355 = vpop.f32.mrf.mxu0
    %1356 = vdwg.mxu0
    %1357 = vmatpush.bf16.msra.mxu0 %v519
    %1358 = vmatpush.bf16.msra.mxu0 %v515
    %1359 = vmatpush.bf16.msra.mxu0 %v511
    %1360 = vmatpush.bf16.msra.mxu0 %v507
    %1361 = vmatpush.bf16.msra.mxu0 %v503
    %1362 = vmatpush.bf16.msra.mxu0 %v499
    %1363 = vmatpush.bf16.msra.mxu0 %v495
    %1364 = vmatpush.bf16.msra.mxu0 %v491
    %1365 = vmatmul.bf16.gmra.mxu0 %v1317
    %v1366 = vpop.f32.mrf.mxu0
    %v1367 = vadd.f32 0.0, %v1366
    %v1368 = vpop.f32.mrf.mxu0
    %1369 = vdwg.mxu0
    %v1374 = vrot.slane %v1341, 7
    %v1375 = vrot.slane %v1354, 6
    %v1376 = vrot.slane %v1367, 5
    %v1377 = vsel %vm611, %v1328, %v1374
    %v1378 = vsel %vm613, %v1375, %v1376
    %v1379 = vsel %vm615, %v1377, %v1378
    %v1381 = vadd.f32 %v1316, %v1379
    %v1382 = vxor.u32 %v1381, 2147483648
    %v1383 = vmul.f32 %v1382, 1.442695
    %v1384 = vpow.pop %v1383
    %v1385 = vadd.f32 %v1384, 1.0
    %v1386 = vrcp.pop %v1385
    %v1387 = vmul.f32 %v1385, %v1386
    %v1388 = vsub.f32 1.0, %v1387
    %v1389 = vmul.f32 %v1386, %v1388
    %v1390 = vadd.f32 %v1386, %v1389
    %vm1391 = vweird.f32 %v1385
    %vm1392 = vweird.f32 %v1386
    %vm1393 = vmor %vm1391, %vm1392
    %v1394 = vsel %vm1393, %v1386, %v1390
    %v1395 = vand.u32 2147483647, %v1385
    %vm1396 = vcmp.eq.f32.partialorder %v1395, 8.507059e+37
    %v1397 = vand.u32 %v1385, 2147483648
    %v1398 = vor.u32 1.1754944e-38, %v1397
    %v1399 = vsel %vm1396, %v1398, %v1394
    %v1400 = vmul.f32 1.0, %v1399
    %v1402 = vrot.slane %v1381, 1
    %v1404 = vxor.u32 %v1402, 2147483648
    %v1405 = vmul.f32 %v1404, 1.442695
    %v1406 = vpow.pop %v1405
    %v1407 = vadd.f32 %v1406, 1.0
    %v1408 = vrcp.pop %v1407
    %v1409 = vmul.f32 %v1407, %v1408
    %v1410 = vsub.f32 1.0, %v1409
    %v1411 = vmul.f32 %v1408, %v1410
    %v1412 = vadd.f32 %v1408, %v1411
    %vm1413 = vweird.f32 %v1407
    %vm1414 = vweird.f32 %v1408
    %vm1415 = vmor %vm1413, %vm1414
    %v1416 = vsel %vm1415, %v1408, %v1412
    %v1417 = vand.u32 2147483647, %v1407
    %vm1418 = vcmp.eq.f32.partialorder %v1417, 8.507059e+37
    %v1419 = vand.u32 %v1407, 2147483648
    %v1420 = vor.u32 1.1754944e-38, %v1419
    %v1421 = vsel %vm1418, %v1420, %v1416
    %v1422 = vmul.f32 1.0, %v1421
    %v1423 = vrot.slane %v1381, 2
    %v1425 = vtanh.pop %v1423
    %v1426 = vrot.slane %v1381, 3
    %v1428 = vxor.u32 %v1426, 2147483648
    %v1429 = vmul.f32 %v1428, 1.442695
    %v1430 = vpow.pop %v1429
    %v1431 = vadd.f32 %v1430, 1.0
    %v1432 = vrcp.pop %v1431
    %v1433 = vmul.f32 %v1431, %v1432
    %v1434 = vsub.f32 1.0, %v1433
    %v1435 = vmul.f32 %v1432, %v1434
    %v1436 = vadd.f32 %v1432, %v1435
    %vm1437 = vweird.f32 %v1431
    %vm1438 = vweird.f32 %v1432
    %vm1439 = vmor %vm1437, %vm1438
    %v1440 = vsel %vm1439, %v1432, %v1436
    %v1441 = vand.u32 2147483647, %v1431
    %vm1442 = vcmp.eq.f32.partialorder %v1441, 8.507059e+37
    %v1443 = vand.u32 %v1431, 2147483648
    %v1444 = vor.u32 1.1754944e-38, %v1443
    %v1445 = vsel %vm1442, %v1444, %v1440
    %v1446 = vmul.f32 1.0, %v1445
    %v1447 = vmul.f32 %v1422, %v1155
    %v1448 = vmul.f32 %v1400, %v1425
    %v1449 = vadd.f32 %v1447, %v1448
    %v1450 = vtanh.pop %v1449
    %v1451 = vmul.f32 %v1446, %v1450
    %p1452 = scmp.lt.s32.totalorder %s1306, 8
    %s1453 = scalar_select %p1452, 1, 0
    %v1454 = vstv %s1453
    %vm1455 = vcmp.eq.s32.totalorder %v1454, 1
    %v1456 = vsel %vm1455, %v1451, %v1154
    %v1457 = vsel %vm1455, %v1449, %v1155
    %s1458 = sshra.s32 %s1307, 3
    %s1459 = sand.u32 %s1307, 7
    %s1460 = sshra.s32 %s1307, 3
    %s1461 = sand.u32 %s1307, 7
    %s1462 = smul.u32 %s1458, 4
    %s1463 = smul.u32 %s1462, 8
    %s1464 = sadd.s32 %s1463, %s1461
    %s1465 = scalar_lea.vmem [#allocation4], %s1464
    %v1466 = vld [vmem:[%s1465] ss:$8 sm:$0xf]
    %v1467 = vpack.c.bf16 %v1304, %v1304
    %1468 = vmatpush.bf16.msra.mxu0 %v828
    %1469 = vmatpush.bf16.msra.mxu0 %v824
    %1470 = vmatpush.bf16.msra.mxu0 %v820
    %1471 = vmatpush.bf16.msra.mxu0 %v816
    %1472 = vmatpush.bf16.msra.mxu0 %v812
    %1473 = vmatpush.bf16.msra.mxu0 %v808
    %1474 = vmatpush.bf16.msra.mxu0 %v804
    %1475 = vmatpush.bf16.msra.mxu0 %v800
    %1476 = vmatmul.bf16.gmra.mxu0 %v1467
    %v1477 = vpop.f32.mrf.mxu0
    %v1478 = vadd.f32 0.0, %v1477
    %v1479 = vpop.f32.mrf.mxu0
    %1480 = vdwg.mxu0
    %1481 = vmatpush.bf16.msra.mxu0 %v829
    %1482 = vmatpush.bf16.msra.mxu0 %v825
    %1483 = vmatpush.bf16.msra.mxu0 %v821
    %1484 = vmatpush.bf16.msra.mxu0 %v817
    %1485 = vmatpush.bf16.msra.mxu0 %v813
    %1486 = vmatpush.bf16.msra.mxu0 %v809
    %1487 = vmatpush.bf16.msra.mxu0 %v805
    %1488 = vmatpush.bf16.msra.mxu0 %v801
    %1489 = vmatmul.bf16.gmra.mxu0 %v1467
    %v1490 = vpop.f32.mrf.mxu0
    %v1491 = vadd.f32 0.0, %v1490
    %v1492 = vpop.f32.mrf.mxu0
    %1493 = vdwg.mxu0
    %1494 = vmatpush.bf16.msra.mxu0 %v830
    %1495 = vmatpush.bf16.msra.mxu0 %v826
    %1496 = vmatpush.bf16.msra.mxu0 %v822
    %1497 = vmatpush.bf16.msra.mxu0 %v818
    %1498 = vmatpush.bf16.msra.mxu0 %v814
    %1499 = vmatpush.bf16.msra.mxu0 %v810
    %1500 = vmatpush.bf16.msra.mxu0 %v806
    %1501 = vmatpush.bf16.msra.mxu0 %v802
    %1502 = vmatmul.bf16.gmra.mxu0 %v1467
    %v1503 = vpop.f32.mrf.mxu0
    %v1504 = vadd.f32 0.0, %v1503
    %v1505 = vpop.f32.mrf.mxu0
    %1506 = vdwg.mxu0
    %1507 = vmatpush.bf16.msra.mxu0 %v831
    %1508 = vmatpush.bf16.msra.mxu0 %v827
    %1509 = vmatpush.bf16.msra.mxu0 %v823
    %1510 = vmatpush.bf16.msra.mxu0 %v819
    %1511 = vmatpush.bf16.msra.mxu0 %v815
    %1512 = vmatpush.bf16.msra.mxu0 %v811
    %1513 = vmatpush.bf16.msra.mxu0 %v807
    %1514 = vmatpush.bf16.msra.mxu0 %v803
    %1515 = vmatmul.bf16.gmra.mxu0 %v1467
    %v1516 = vpop.f32.mrf.mxu0
    %v1517 = vadd.f32 0.0, %v1516
    %v1518 = vpop.f32.mrf.mxu0
    %1519 = vdwg.mxu0
    %v1524 = vrot.slane %v1491, 7
    %v1525 = vrot.slane %v1504, 6
    %v1526 = vrot.slane %v1517, 5
    %v1527 = vsel %vm611, %v1478, %v1524
    %v1528 = vsel %vm613, %v1525, %v1526
    %v1529 = vsel %vm615, %v1527, %v1528
    %v1531 = vadd.f32 %v1466, %v1529
    %v1532 = vxor.u32 %v1531, 2147483648
    %v1533 = vmul.f32 %v1532, 1.442695
    %v1534 = vpow.pop %v1533
    %v1535 = vadd.f32 %v1534, 1.0
    %v1536 = vrcp.pop %v1535
    %v1537 = vmul.f32 %v1535, %v1536
    %v1538 = vsub.f32 1.0, %v1537
    %v1539 = vmul.f32 %v1536, %v1538
    %v1540 = vadd.f32 %v1536, %v1539
    %vm1541 = vweird.f32 %v1535
    %vm1542 = vweird.f32 %v1536
    %vm1543 = vmor %vm1541, %vm1542
    %v1544 = vsel %vm1543, %v1536, %v1540
    %v1545 = vand.u32 2147483647, %v1535
    %vm1546 = vcmp.eq.f32.partialorder %v1545, 8.507059e+37
    %v1547 = vand.u32 %v1535, 2147483648
    %v1548 = vor.u32 1.1754944e-38, %v1547
    %v1549 = vsel %vm1546, %v1548, %v1544
    %v1550 = vmul.f32 1.0, %v1549
    %v1552 = vrot.slane %v1531, 1
    %v1554 = vxor.u32 %v1552, 2147483648
    %v1555 = vmul.f32 %v1554, 1.442695
    %v1556 = vpow.pop %v1555
    %v1557 = vadd.f32 %v1556, 1.0
    %v1558 = vrcp.pop %v1557
    %v1559 = vmul.f32 %v1557, %v1558
    %v1560 = vsub.f32 1.0, %v1559
    %v1561 = vmul.f32 %v1558, %v1560
    %v1562 = vadd.f32 %v1558, %v1561
    %vm1563 = vweird.f32 %v1557
    %vm1564 = vweird.f32 %v1558
    %vm1565 = vmor %vm1563, %vm1564
    %v1566 = vsel %vm1565, %v1558, %v1562
    %v1567 = vand.u32 2147483647, %v1557
    %vm1568 = vcmp.eq.f32.partialorder %v1567, 8.507059e+37
    %v1569 = vand.u32 %v1557, 2147483648
    %v1570 = vor.u32 1.1754944e-38, %v1569
    %v1571 = vsel %vm1568, %v1570, %v1566
    %v1572 = vmul.f32 1.0, %v1571
    %v1573 = vrot.slane %v1531, 2
    %v1575 = vtanh.pop %v1573
    %v1576 = vrot.slane %v1531, 3
    %v1578 = vxor.u32 %v1576, 2147483648
    %v1579 = vmul.f32 %v1578, 1.442695
    %v1580 = vpow.pop %v1579
    %v1581 = vadd.f32 %v1580, 1.0
    %v1582 = vrcp.pop %v1581
    %v1583 = vmul.f32 %v1581, %v1582
    %v1584 = vsub.f32 1.0, %v1583
    %v1585 = vmul.f32 %v1582, %v1584
    %v1586 = vadd.f32 %v1582, %v1585
    %vm1587 = vweird.f32 %v1581
    %vm1588 = vweird.f32 %v1582
    %vm1589 = vmor %vm1587, %vm1588
    %v1590 = vsel %vm1589, %v1582, %v1586
    %v1591 = vand.u32 2147483647, %v1581
    %vm1592 = vcmp.eq.f32.partialorder %v1591, 8.507059e+37
    %v1593 = vand.u32 %v1581, 2147483648
    %v1594 = vor.u32 1.1754944e-38, %v1593
    %v1595 = vsel %vm1592, %v1594, %v1590
    %v1596 = vmul.f32 1.0, %v1595
    %v1597 = vmul.f32 %v1572, %v1305
    %v1598 = vmul.f32 %v1550, %v1575
    %v1599 = vadd.f32 %v1597, %v1598
    %v1600 = vtanh.pop %v1599
    %v1601 = vmul.f32 %v1596, %v1600
    %p1602 = scmp.lt.s32.totalorder %s1307, 8
    %s1603 = scalar_select %p1602, 1, 0
    %v1604 = vstv %s1603
    %vm1605 = vcmp.eq.s32.totalorder %v1604, 1
    %v1606 = vsel %vm1605, %v1601, %v1304
    %v1607 = vsel %vm1605, %v1599, %v1305
    %s1608 = sadd.s32 0, 3
    %s1609 = ssub.s32 4, 0
    %s1610 = sshra.s32 %s1608, 3
    %s1611 = sand.u32 %s1608, 7
    %s1612 = sshra.s32 %s1608, 3
    %s1613 = sand.u32 %s1608, 7
    %s1614 = smul.u32 %s1610, 4
    %s1615 = smul.u32 %s1614, 8
    %s1616 = sadd.s32 %s1615, %s1613
    %s1617 = scalar_lea.vmem [#allocation3], %s1616
    %v1618 = vld [vmem:[%s1617] ss:$8 sm:$0xf]
    %v1619 = vpack.c.bf16 %v1456, %v1456
    %1620 = vmatpush.bf16.msra.mxu0 %v516
    %1621 = vmatpush.bf16.msra.mxu0 %v512
    %1622 = vmatpush.bf16.msra.mxu0 %v508
    %1623 = vmatpush.bf16.msra.mxu0 %v504
    %1624 = vmatpush.bf16.msra.mxu0 %v500
    %1625 = vmatpush.bf16.msra.mxu0 %v496
    %1626 = vmatpush.bf16.msra.mxu0 %v492
    %1627 = vmatpush.bf16.msra.mxu0 %v488
    %1628 = vmatmul.bf16.gmra.mxu0 %v1619
    %v1629 = vpop.f32.mrf.mxu0
    %v1630 = vadd.f32 0.0, %v1629
    %v1631 = vpop.f32.mrf.mxu0
    %1632 = vdwg.mxu0
    %1633 = vmatpush.bf16.msra.mxu0 %v517
    %1634 = vmatpush.bf16.msra.mxu0 %v513
    %1635 = vmatpush.bf16.msra.mxu0 %v509
    %1636 = vmatpush.bf16.msra.mxu0 %v505
    %1637 = vmatpush.bf16.msra.mxu0 %v501
    %1638 = vmatpush.bf16.msra.mxu0 %v497
    %1639 = vmatpush.bf16.msra.mxu0 %v493
    %1640 = vmatpush.bf16.msra.mxu0 %v489
    %1641 = vmatmul.bf16.gmra.mxu0 %v1619
    %v1642 = vpop.f32.mrf.mxu0
    %v1643 = vadd.f32 0.0, %v1642
    %v1644 = vpop.f32.mrf.mxu0
    %1645 = vdwg.mxu0
    %1646 = vmatpush.bf16.msra.mxu0 %v518
    %1647 = vmatpush.bf16.msra.mxu0 %v514
    %1648 = vmatpush.bf16.msra.mxu0 %v510
    %1649 = vmatpush.bf16.msra.mxu0 %v506
    %1650 = vmatpush.bf16.msra.mxu0 %v502
    %1651 = vmatpush.bf16.msra.mxu0 %v498
    %1652 = vmatpush.bf16.msra.mxu0 %v494
    %1653 = vmatpush.bf16.msra.mxu0 %v490
    %1654 = vmatmul.bf16.gmra.mxu0 %v1619
    %v1655 = vpop.f32.mrf.mxu0
    %v1656 = vadd.f32 0.0, %v1655
    %v1657 = vpop.f32.mrf.mxu0
    %1658 = vdwg.mxu0
    %1659 = vmatpush.bf16.msra.mxu0 %v519
    %1660 = vmatpush.bf16.msra.mxu0 %v515
    %1661 = vmatpush.bf16.msra.mxu0 %v511
    %1662 = vmatpush.bf16.msra.mxu0 %v507
    %1663 = vmatpush.bf16.msra.mxu0 %v503
    %1664 = vmatpush.bf16.msra.mxu0 %v499
    %1665 = vmatpush.bf16.msra.mxu0 %v495
    %1666 = vmatpush.bf16.msra.mxu0 %v491
    %1667 = vmatmul.bf16.gmra.mxu0 %v1619
    %v1668 = vpop.f32.mrf.mxu0
    %v1669 = vadd.f32 0.0, %v1668
    %v1670 = vpop.f32.mrf.mxu0
    %1671 = vdwg.mxu0
    %v1676 = vrot.slane %v1643, 7
    %v1677 = vrot.slane %v1656, 6
    %v1678 = vrot.slane %v1669, 5
    %v1679 = vsel %vm611, %v1630, %v1676
    %v1680 = vsel %vm613, %v1677, %v1678
    %v1681 = vsel %vm615, %v1679, %v1680
    %v1683 = vadd.f32 %v1618, %v1681
    %v1684 = vxor.u32 %v1683, 2147483648
    %v1685 = vmul.f32 %v1684, 1.442695
    %v1686 = vpow.pop %v1685
    %v1687 = vadd.f32 %v1686, 1.0
    %v1688 = vrcp.pop %v1687
    %v1689 = vmul.f32 %v1687, %v1688
    %v1690 = vsub.f32 1.0, %v1689
    %v1691 = vmul.f32 %v1688, %v1690
    %v1692 = vadd.f32 %v1688, %v1691
    %vm1693 = vweird.f32 %v1687
    %vm1694 = vweird.f32 %v1688
    %vm1695 = vmor %vm1693, %vm1694
    %v1696 = vsel %vm1695, %v1688, %v1692
    %v1697 = vand.u32 2147483647, %v1687
    %vm1698 = vcmp.eq.f32.partialorder %v1697, 8.507059e+37
    %v1699 = vand.u32 %v1687, 2147483648
    %v1700 = vor.u32 1.1754944e-38, %v1699
    %v1701 = vsel %vm1698, %v1700, %v1696
    %v1702 = vmul.f32 1.0, %v1701
    %v1704 = vrot.slane %v1683, 1
    %v1706 = vxor.u32 %v1704, 2147483648
    %v1707 = vmul.f32 %v1706, 1.442695
    %v1708 = vpow.pop %v1707
    %v1709 = vadd.f32 %v1708, 1.0
    %v1710 = vrcp.pop %v1709
    %v1711 = vmul.f32 %v1709, %v1710
    %v1712 = vsub.f32 1.0, %v1711
    %v1713 = vmul.f32 %v1710, %v1712
    %v1714 = vadd.f32 %v1710, %v1713
    %vm1715 = vweird.f32 %v1709
    %vm1716 = vweird.f32 %v1710
    %vm1717 = vmor %vm1715, %vm1716
    %v1718 = vsel %vm1717, %v1710, %v1714
    %v1719 = vand.u32 2147483647, %v1709
    %vm1720 = vcmp.eq.f32.partialorder %v1719, 8.507059e+37
    %v1721 = vand.u32 %v1709, 2147483648
    %v1722 = vor.u32 1.1754944e-38, %v1721
    %v1723 = vsel %vm1720, %v1722, %v1718
    %v1724 = vmul.f32 1.0, %v1723
    %v1725 = vrot.slane %v1683, 2
    %v1727 = vtanh.pop %v1725
    %v1728 = vrot.slane %v1683, 3
    %v1730 = vxor.u32 %v1728, 2147483648
    %v1731 = vmul.f32 %v1730, 1.442695
    %v1732 = vpow.pop %v1731
    %v1733 = vadd.f32 %v1732, 1.0
    %v1734 = vrcp.pop %v1733
    %v1735 = vmul.f32 %v1733, %v1734
    %v1736 = vsub.f32 1.0, %v1735
    %v1737 = vmul.f32 %v1734, %v1736
    %v1738 = vadd.f32 %v1734, %v1737
    %vm1739 = vweird.f32 %v1733
    %vm1740 = vweird.f32 %v1734
    %vm1741 = vmor %vm1739, %vm1740
    %v1742 = vsel %vm1741, %v1734, %v1738
    %v1743 = vand.u32 2147483647, %v1733
    %vm1744 = vcmp.eq.f32.partialorder %v1743, 8.507059e+37
    %v1745 = vand.u32 %v1733, 2147483648
    %v1746 = vor.u32 1.1754944e-38, %v1745
    %v1747 = vsel %vm1744, %v1746, %v1742
    %v1748 = vmul.f32 1.0, %v1747
    %v1749 = vmul.f32 %v1724, %v1457
    %v1750 = vmul.f32 %v1702, %v1727
    %v1751 = vadd.f32 %v1749, %v1750
    %v1752 = vtanh.pop %v1751
    %v1753 = vmul.f32 %v1748, %v1752
    %p1754 = scmp.lt.s32.totalorder %s1608, 8
    %s1755 = scalar_select %p1754, 1, 0
    %v1756 = vstv %s1755
    %vm1757 = vcmp.eq.s32.totalorder %v1756, 1
    %v1758 = vsel %vm1757, %v1753, %v1456
    %v1759 = vsel %vm1757, %v1751, %v1457
    %s1760 = sshra.s32 %s1609, 3
    %s1761 = sand.u32 %s1609, 7
    %s1762 = sshra.s32 %s1609, 3
    %s1763 = sand.u32 %s1609, 7
    %s1764 = smul.u32 %s1760, 4
    %s1765 = smul.u32 %s1764, 8
    %s1766 = sadd.s32 %s1765, %s1763
    %s1767 = scalar_lea.vmem [#allocation4], %s1766
    %v1768 = vld [vmem:[%s1767] ss:$8 sm:$0xf]
    %v1769 = vpack.c.bf16 %v1606, %v1606
    %1770 = vmatpush.bf16.msra.mxu0 %v828
    %1771 = vmatpush.bf16.msra.mxu0 %v824
    %1772 = vmatpush.bf16.msra.mxu0 %v820
    %1773 = vmatpush.bf16.msra.mxu0 %v816
    %1774 = vmatpush.bf16.msra.mxu0 %v812
    %1775 = vmatpush.bf16.msra.mxu0 %v808
    %1776 = vmatpush.bf16.msra.mxu0 %v804
    %1777 = vmatpush.bf16.msra.mxu0 %v800
    %1778 = vmatmul.bf16.gmra.mxu0 %v1769
    %v1779 = vpop.f32.mrf.mxu0
    %v1780 = vadd.f32 0.0, %v1779
    %v1781 = vpop.f32.mrf.mxu0
    %1782 = vdwg.mxu0
    %1783 = vmatpush.bf16.msra.mxu0 %v829
    %1784 = vmatpush.bf16.msra.mxu0 %v825
    %1785 = vmatpush.bf16.msra.mxu0 %v821
    %1786 = vmatpush.bf16.msra.mxu0 %v817
    %1787 = vmatpush.bf16.msra.mxu0 %v813
    %1788 = vmatpush.bf16.msra.mxu0 %v809
    %1789 = vmatpush.bf16.msra.mxu0 %v805
    %1790 = vmatpush.bf16.msra.mxu0 %v801
    %1791 = vmatmul.bf16.gmra.mxu0 %v1769
    %v1792 = vpop.f32.mrf.mxu0
    %v1793 = vadd.f32 0.0, %v1792
    %v1794 = vpop.f32.mrf.mxu0
    %1795 = vdwg.mxu0
    %1796 = vmatpush.bf16.msra.mxu0 %v830
    %1797 = vmatpush.bf16.msra.mxu0 %v826
    %1798 = vmatpush.bf16.msra.mxu0 %v822
    %1799 = vmatpush.bf16.msra.mxu0 %v818
    %1800 = vmatpush.bf16.msra.mxu0 %v814
    %1801 = vmatpush.bf16.msra.mxu0 %v810
    %1802 = vmatpush.bf16.msra.mxu0 %v806
    %1803 = vmatpush.bf16.msra.mxu0 %v802
    %1804 = vmatmul.bf16.gmra.mxu0 %v1769
    %v1805 = vpop.f32.mrf.mxu0
    %v1806 = vadd.f32 0.0, %v1805
    %v1807 = vpop.f32.mrf.mxu0
    %1808 = vdwg.mxu0
    %1809 = vmatpush.bf16.msra.mxu0 %v831
    %1810 = vmatpush.bf16.msra.mxu0 %v827
    %1811 = vmatpush.bf16.msra.mxu0 %v823
    %1812 = vmatpush.bf16.msra.mxu0 %v819
    %1813 = vmatpush.bf16.msra.mxu0 %v815
    %1814 = vmatpush.bf16.msra.mxu0 %v811
    %1815 = vmatpush.bf16.msra.mxu0 %v807
    %1816 = vmatpush.bf16.msra.mxu0 %v803
    %1817 = vmatmul.bf16.gmra.mxu0 %v1769
    %v1818 = vpop.f32.mrf.mxu0
    %v1819 = vadd.f32 0.0, %v1818
    %v1820 = vpop.f32.mrf.mxu0
    %1821 = vdwg.mxu0
    %v1826 = vrot.slane %v1793, 7
    %v1827 = vrot.slane %v1806, 6
    %v1828 = vrot.slane %v1819, 5
    %v1829 = vsel %vm611, %v1780, %v1826
    %v1830 = vsel %vm613, %v1827, %v1828
    %v1831 = vsel %vm615, %v1829, %v1830
    %v1833 = vadd.f32 %v1768, %v1831
    %v1834 = vxor.u32 %v1833, 2147483648
    %v1835 = vmul.f32 %v1834, 1.442695
    %v1836 = vpow.pop %v1835
    %v1837 = vadd.f32 %v1836, 1.0
    %v1838 = vrcp.pop %v1837
    %v1839 = vmul.f32 %v1837, %v1838
    %v1840 = vsub.f32 1.0, %v1839
    %v1841 = vmul.f32 %v1838, %v1840
    %v1842 = vadd.f32 %v1838, %v1841
    %vm1843 = vweird.f32 %v1837
    %vm1844 = vweird.f32 %v1838
    %vm1845 = vmor %vm1843, %vm1844
    %v1846 = vsel %vm1845, %v1838, %v1842
    %v1847 = vand.u32 2147483647, %v1837
    %vm1848 = vcmp.eq.f32.partialorder %v1847, 8.507059e+37
    %v1849 = vand.u32 %v1837, 2147483648
    %v1850 = vor.u32 1.1754944e-38, %v1849
    %v1851 = vsel %vm1848, %v1850, %v1846
    %v1852 = vmul.f32 1.0, %v1851
    %v1854 = vrot.slane %v1833, 1
    %v1856 = vxor.u32 %v1854, 2147483648
    %v1857 = vmul.f32 %v1856, 1.442695
    %v1858 = vpow.pop %v1857
    %v1859 = vadd.f32 %v1858, 1.0
    %v1860 = vrcp.pop %v1859
    %v1861 = vmul.f32 %v1859, %v1860
    %v1862 = vsub.f32 1.0, %v1861
    %v1863 = vmul.f32 %v1860, %v1862
    %v1864 = vadd.f32 %v1860, %v1863
    %vm1865 = vweird.f32 %v1859
    %vm1866 = vweird.f32 %v1860
    %vm1867 = vmor %vm1865, %vm1866
    %v1868 = vsel %vm1867, %v1860, %v1864
    %v1869 = vand.u32 2147483647, %v1859
    %vm1870 = vcmp.eq.f32.partialorder %v1869, 8.507059e+37
    %v1871 = vand.u32 %v1859, 2147483648
    %v1872 = vor.u32 1.1754944e-38, %v1871
    %v1873 = vsel %vm1870, %v1872, %v1868
    %v1874 = vmul.f32 1.0, %v1873
    %v1875 = vrot.slane %v1833, 2
    %v1877 = vtanh.pop %v1875
    %v1878 = vrot.slane %v1833, 3
    %v1880 = vxor.u32 %v1878, 2147483648
    %v1881 = vmul.f32 %v1880, 1.442695
    %v1882 = vpow.pop %v1881
    %v1883 = vadd.f32 %v1882, 1.0
    %v1884 = vrcp.pop %v1883
    %v1885 = vmul.f32 %v1883, %v1884
    %v1886 = vsub.f32 1.0, %v1885
    %v1887 = vmul.f32 %v1884, %v1886
    %v1888 = vadd.f32 %v1884, %v1887
    %vm1889 = vweird.f32 %v1883
    %vm1890 = vweird.f32 %v1884
    %vm1891 = vmor %vm1889, %vm1890
    %v1892 = vsel %vm1891, %v1884, %v1888
    %v1893 = vand.u32 2147483647, %v1883
    %vm1894 = vcmp.eq.f32.partialorder %v1893, 8.507059e+37
    %v1895 = vand.u32 %v1883, 2147483648
    %v1896 = vor.u32 1.1754944e-38, %v1895
    %v1897 = vsel %vm1894, %v1896, %v1892
    %v1898 = vmul.f32 1.0, %v1897
    %v1899 = vmul.f32 %v1874, %v1607
    %v1900 = vmul.f32 %v1852, %v1877
    %v1901 = vadd.f32 %v1899, %v1900
    %v1902 = vtanh.pop %v1901
    %v1903 = vmul.f32 %v1898, %v1902
    %p1904 = scmp.lt.s32.totalorder %s1609, 8
    %s1905 = scalar_select %p1904, 1, 0
    %v1906 = vstv %s1905
    %vm1907 = vcmp.eq.s32.totalorder %v1906, 1
    %v1908 = vsel %vm1907, %v1903, %v1606
    %v1909 = vsel %vm1907, %v1901, %v1607
    %s1910 = sadd.s32 0, 4
    %s1911 = ssub.s32 3, 0
    %s1912 = sshra.s32 %s1910, 3
    %s1913 = sand.u32 %s1910, 7
    %s1914 = sshra.s32 %s1910, 3
    %s1915 = sand.u32 %s1910, 7
    %s1916 = smul.u32 %s1912, 4
    %s1917 = smul.u32 %s1916, 8
    %s1918 = sadd.s32 %s1917, %s1915
    %s1919 = scalar_lea.vmem [#allocation3], %s1918
    %v1920 = vld [vmem:[%s1919] ss:$8 sm:$0xf]
    %v1921 = vpack.c.bf16 %v1758, %v1758
    %1922 = vmatpush.bf16.msra.mxu0 %v516
    %1923 = vmatpush.bf16.msra.mxu0 %v512
    %1924 = vmatpush.bf16.msra.mxu0 %v508
    %1925 = vmatpush.bf16.msra.mxu0 %v504
    %1926 = vmatpush.bf16.msra.mxu0 %v500
    %1927 = vmatpush.bf16.msra.mxu0 %v496
    %1928 = vmatpush.bf16.msra.mxu0 %v492
    %1929 = vmatpush.bf16.msra.mxu0 %v488
    %1930 = vmatmul.bf16.gmra.mxu0 %v1921
    %v1931 = vpop.f32.mrf.mxu0
    %v1932 = vadd.f32 0.0, %v1931
    %v1933 = vpop.f32.mrf.mxu0
    %1934 = vdwg.mxu0
    %1935 = vmatpush.bf16.msra.mxu0 %v517
    %1936 = vmatpush.bf16.msra.mxu0 %v513
    %1937 = vmatpush.bf16.msra.mxu0 %v509
    %1938 = vmatpush.bf16.msra.mxu0 %v505
    %1939 = vmatpush.bf16.msra.mxu0 %v501
    %1940 = vmatpush.bf16.msra.mxu0 %v497
    %1941 = vmatpush.bf16.msra.mxu0 %v493
    %1942 = vmatpush.bf16.msra.mxu0 %v489
    %1943 = vmatmul.bf16.gmra.mxu0 %v1921
    %v1944 = vpop.f32.mrf.mxu0
    %v1945 = vadd.f32 0.0, %v1944
    %v1946 = vpop.f32.mrf.mxu0
    %1947 = vdwg.mxu0
    %1948 = vmatpush.bf16.msra.mxu0 %v518
    %1949 = vmatpush.bf16.msra.mxu0 %v514
    %1950 = vmatpush.bf16.msra.mxu0 %v510
    %1951 = vmatpush.bf16.msra.mxu0 %v506
    %1952 = vmatpush.bf16.msra.mxu0 %v502
    %1953 = vmatpush.bf16.msra.mxu0 %v498
    %1954 = vmatpush.bf16.msra.mxu0 %v494
    %1955 = vmatpush.bf16.msra.mxu0 %v490
    %1956 = vmatmul.bf16.gmra.mxu0 %v1921
    %v1957 = vpop.f32.mrf.mxu0
    %v1958 = vadd.f32 0.0, %v1957
    %v1959 = vpop.f32.mrf.mxu0
    %1960 = vdwg.mxu0
    %1961 = vmatpush.bf16.msra.mxu0 %v519
    %1962 = vmatpush.bf16.msra.mxu0 %v515
    %1963 = vmatpush.bf16.msra.mxu0 %v511
    %1964 = vmatpush.bf16.msra.mxu0 %v507
    %1965 = vmatpush.bf16.msra.mxu0 %v503
    %1966 = vmatpush.bf16.msra.mxu0 %v499
    %1967 = vmatpush.bf16.msra.mxu0 %v495
    %1968 = vmatpush.bf16.msra.mxu0 %v491
    %1969 = vmatmul.bf16.gmra.mxu0 %v1921
    %v1970 = vpop.f32.mrf.mxu0
    %v1971 = vadd.f32 0.0, %v1970
    %v1972 = vpop.f32.mrf.mxu0
    %1973 = vdwg.mxu0
    %v1978 = vrot.slane %v1945, 7
    %v1979 = vrot.slane %v1958, 6
    %v1980 = vrot.slane %v1971, 5
    %v1981 = vsel %vm611, %v1932, %v1978
    %v1982 = vsel %vm613, %v1979, %v1980
    %v1983 = vsel %vm615, %v1981, %v1982
    %v1985 = vadd.f32 %v1920, %v1983
    %v1986 = vxor.u32 %v1985, 2147483648
    %v1987 = vmul.f32 %v1986, 1.442695
    %v1988 = vpow.pop %v1987
    %v1989 = vadd.f32 %v1988, 1.0
    %v1990 = vrcp.pop %v1989
    %v1991 = vmul.f32 %v1989, %v1990
    %v1992 = vsub.f32 1.0, %v1991
    %v1993 = vmul.f32 %v1990, %v1992
    %v1994 = vadd.f32 %v1990, %v1993
    %vm1995 = vweird.f32 %v1989
    %vm1996 = vweird.f32 %v1990
    %vm1997 = vmor %vm1995, %vm1996
    %v1998 = vsel %vm1997, %v1990, %v1994
    %v1999 = vand.u32 2147483647, %v1989
    %vm2000 = vcmp.eq.f32.partialorder %v1999, 8.507059e+37
    %v2001 = vand.u32 %v1989, 2147483648
    %v2002 = vor.u32 1.1754944e-38, %v2001
    %v2003 = vsel %vm2000, %v2002, %v1998
    %v2004 = vmul.f32 1.0, %v2003
    %v2006 = vrot.slane %v1985, 1
    %v2008 = vxor.u32 %v2006, 2147483648
    %v2009 = vmul.f32 %v2008, 1.442695
    %v2010 = vpow.pop %v2009
    %v2011 = vadd.f32 %v2010, 1.0
    %v2012 = vrcp.pop %v2011
    %v2013 = vmul.f32 %v2011, %v2012
    %v2014 = vsub.f32 1.0, %v2013
    %v2015 = vmul.f32 %v2012, %v2014
    %v2016 = vadd.f32 %v2012, %v2015
    %vm2017 = vweird.f32 %v2011
    %vm2018 = vweird.f32 %v2012
    %vm2019 = vmor %vm2017, %vm2018
    %v2020 = vsel %vm2019, %v2012, %v2016
    %v2021 = vand.u32 2147483647, %v2011
    %vm2022 = vcmp.eq.f32.partialorder %v2021, 8.507059e+37
    %v2023 = vand.u32 %v2011, 2147483648
    %v2024 = vor.u32 1.1754944e-38, %v2023
    %v2025 = vsel %vm2022, %v2024, %v2020
    %v2026 = vmul.f32 1.0, %v2025
    %v2027 = vrot.slane %v1985, 2
    %v2029 = vtanh.pop %v2027
    %v2030 = vrot.slane %v1985, 3
    %v2032 = vxor.u32 %v2030, 2147483648
    %v2033 = vmul.f32 %v2032, 1.442695
    %v2034 = vpow.pop %v2033
    %v2035 = vadd.f32 %v2034, 1.0
    %v2036 = vrcp.pop %v2035
    %v2037 = vmul.f32 %v2035, %v2036
    %v2038 = vsub.f32 1.0, %v2037
    %v2039 = vmul.f32 %v2036, %v2038
    %v2040 = vadd.f32 %v2036, %v2039
    %vm2041 = vweird.f32 %v2035
    %vm2042 = vweird.f32 %v2036
    %vm2043 = vmor %vm2041, %vm2042
    %v2044 = vsel %vm2043, %v2036, %v2040
    %v2045 = vand.u32 2147483647, %v2035
    %vm2046 = vcmp.eq.f32.partialorder %v2045, 8.507059e+37
    %v2047 = vand.u32 %v2035, 2147483648
    %v2048 = vor.u32 1.1754944e-38, %v2047
    %v2049 = vsel %vm2046, %v2048, %v2044
    %v2050 = vmul.f32 1.0, %v2049
    %v2051 = vmul.f32 %v2026, %v1759
    %v2052 = vmul.f32 %v2004, %v2029
    %v2053 = vadd.f32 %v2051, %v2052
    %v2054 = vtanh.pop %v2053
    %v2055 = vmul.f32 %v2050, %v2054
    %p2056 = scmp.lt.s32.totalorder %s1910, 8
    %s2057 = scalar_select %p2056, 1, 0
    %v2058 = vstv %s2057
    %vm2059 = vcmp.eq.s32.totalorder %v2058, 1
    %v2060 = vsel %vm2059, %v2055, %v1758
    %v2061 = vsel %vm2059, %v2053, %v1759
    %s2062 = sshra.s32 %s1911, 3
    %s2063 = sand.u32 %s1911, 7
    %s2064 = sshra.s32 %s1911, 3
    %s2065 = sand.u32 %s1911, 7
    %s2066 = smul.u32 %s2062, 4
    %s2067 = smul.u32 %s2066, 8
    %s2068 = sadd.s32 %s2067, %s2065
    %s2069 = scalar_lea.vmem [#allocation4], %s2068
    %v2070 = vld [vmem:[%s2069] ss:$8 sm:$0xf]
    %v2071 = vpack.c.bf16 %v1908, %v1908
    %2072 = vmatpush.bf16.msra.mxu0 %v828
    %2073 = vmatpush.bf16.msra.mxu0 %v824
    %2074 = vmatpush.bf16.msra.mxu0 %v820
    %2075 = vmatpush.bf16.msra.mxu0 %v816
    %2076 = vmatpush.bf16.msra.mxu0 %v812
    %2077 = vmatpush.bf16.msra.mxu0 %v808
    %2078 = vmatpush.bf16.msra.mxu0 %v804
    %2079 = vmatpush.bf16.msra.mxu0 %v800
    %2080 = vmatmul.bf16.gmra.mxu0 %v2071
    %v2081 = vpop.f32.mrf.mxu0
    %v2082 = vadd.f32 0.0, %v2081
    %v2083 = vpop.f32.mrf.mxu0
    %2084 = vdwg.mxu0
    %2085 = vmatpush.bf16.msra.mxu0 %v829
    %2086 = vmatpush.bf16.msra.mxu0 %v825
    %2087 = vmatpush.bf16.msra.mxu0 %v821
    %2088 = vmatpush.bf16.msra.mxu0 %v817
    %2089 = vmatpush.bf16.msra.mxu0 %v813
    %2090 = vmatpush.bf16.msra.mxu0 %v809
    %2091 = vmatpush.bf16.msra.mxu0 %v805
    %2092 = vmatpush.bf16.msra.mxu0 %v801
    %2093 = vmatmul.bf16.gmra.mxu0 %v2071
    %v2094 = vpop.f32.mrf.mxu0
    %v2095 = vadd.f32 0.0, %v2094
    %v2096 = vpop.f32.mrf.mxu0
    %2097 = vdwg.mxu0
    %2098 = vmatpush.bf16.msra.mxu0 %v830
    %2099 = vmatpush.bf16.msra.mxu0 %v826
    %2100 = vmatpush.bf16.msra.mxu0 %v822
    %2101 = vmatpush.bf16.msra.mxu0 %v818
    %2102 = vmatpush.bf16.msra.mxu0 %v814
    %2103 = vmatpush.bf16.msra.mxu0 %v810
    %2104 = vmatpush.bf16.msra.mxu0 %v806
    %2105 = vmatpush.bf16.msra.mxu0 %v802
    %2106 = vmatmul.bf16.gmra.mxu0 %v2071
    %v2107 = vpop.f32.mrf.mxu0
    %v2108 = vadd.f32 0.0, %v2107
    %v2109 = vpop.f32.mrf.mxu0
    %2110 = vdwg.mxu0
    %2111 = vmatpush.bf16.msra.mxu0 %v831
    %2112 = vmatpush.bf16.msra.mxu0 %v827
    %2113 = vmatpush.bf16.msra.mxu0 %v823
    %2114 = vmatpush.bf16.msra.mxu0 %v819
    %2115 = vmatpush.bf16.msra.mxu0 %v815
    %2116 = vmatpush.bf16.msra.mxu0 %v811
    %2117 = vmatpush.bf16.msra.mxu0 %v807
    %2118 = vmatpush.bf16.msra.mxu0 %v803
    %2119 = vmatmul.bf16.gmra.mxu0 %v2071
    %v2120 = vpop.f32.mrf.mxu0
    %v2121 = vadd.f32 0.0, %v2120
    %v2122 = vpop.f32.mrf.mxu0
    %2123 = vdwg.mxu0
    %v2128 = vrot.slane %v2095, 7
    %v2129 = vrot.slane %v2108, 6
    %v2130 = vrot.slane %v2121, 5
    %v2131 = vsel %vm611, %v2082, %v2128
    %v2132 = vsel %vm613, %v2129, %v2130
    %v2133 = vsel %vm615, %v2131, %v2132
    %v2135 = vadd.f32 %v2070, %v2133
    %v2136 = vxor.u32 %v2135, 2147483648
    %v2137 = vmul.f32 %v2136, 1.442695
    %v2138 = vpow.pop %v2137
    %v2139 = vadd.f32 %v2138, 1.0
    %v2140 = vrcp.pop %v2139
    %v2141 = vmul.f32 %v2139, %v2140
    %v2142 = vsub.f32 1.0, %v2141
    %v2143 = vmul.f32 %v2140, %v2142
    %v2144 = vadd.f32 %v2140, %v2143
    %vm2145 = vweird.f32 %v2139
    %vm2146 = vweird.f32 %v2140
    %vm2147 = vmor %vm2145, %vm2146
    %v2148 = vsel %vm2147, %v2140, %v2144
    %v2149 = vand.u32 2147483647, %v2139
    %vm2150 = vcmp.eq.f32.partialorder %v2149, 8.507059e+37
    %v2151 = vand.u32 %v2139, 2147483648
    %v2152 = vor.u32 1.1754944e-38, %v2151
    %v2153 = vsel %vm2150, %v2152, %v2148
    %v2154 = vmul.f32 1.0, %v2153
    %v2156 = vrot.slane %v2135, 1
    %v2158 = vxor.u32 %v2156, 2147483648
    %v2159 = vmul.f32 %v2158, 1.442695
    %v2160 = vpow.pop %v2159
    %v2161 = vadd.f32 %v2160, 1.0
    %v2162 = vrcp.pop %v2161
    %v2163 = vmul.f32 %v2161, %v2162
    %v2164 = vsub.f32 1.0, %v2163
    %v2165 = vmul.f32 %v2162, %v2164
    %v2166 = vadd.f32 %v2162, %v2165
    %vm2167 = vweird.f32 %v2161
    %vm2168 = vweird.f32 %v2162
    %vm2169 = vmor %vm2167, %vm2168
    %v2170 = vsel %vm2169, %v2162, %v2166
    %v2171 = vand.u32 2147483647, %v2161
    %vm2172 = vcmp.eq.f32.partialorder %v2171, 8.507059e+37
    %v2173 = vand.u32 %v2161, 2147483648
    %v2174 = vor.u32 1.1754944e-38, %v2173
    %v2175 = vsel %vm2172, %v2174, %v2170
    %v2176 = vmul.f32 1.0, %v2175
    %v2177 = vrot.slane %v2135, 2
    %v2179 = vtanh.pop %v2177
    %v2180 = vrot.slane %v2135, 3
    %v2182 = vxor.u32 %v2180, 2147483648
    %v2183 = vmul.f32 %v2182, 1.442695
    %v2184 = vpow.pop %v2183
    %v2185 = vadd.f32 %v2184, 1.0
    %v2186 = vrcp.pop %v2185
    %v2187 = vmul.f32 %v2185, %v2186
    %v2188 = vsub.f32 1.0, %v2187
    %v2189 = vmul.f32 %v2186, %v2188
    %v2190 = vadd.f32 %v2186, %v2189
    %vm2191 = vweird.f32 %v2185
    %vm2192 = vweird.f32 %v2186
    %vm2193 = vmor %vm2191, %vm2192
    %v2194 = vsel %vm2193, %v2186, %v2190
    %v2195 = vand.u32 2147483647, %v2185
    %vm2196 = vcmp.eq.f32.partialorder %v2195, 8.507059e+37
    %v2197 = vand.u32 %v2185, 2147483648
    %v2198 = vor.u32 1.1754944e-38, %v2197
    %v2199 = vsel %vm2196, %v2198, %v2194
    %v2200 = vmul.f32 1.0, %v2199
    %v2201 = vmul.f32 %v2176, %v1909
    %v2202 = vmul.f32 %v2154, %v2179
    %v2203 = vadd.f32 %v2201, %v2202
    %v2204 = vtanh.pop %v2203
    %v2205 = vmul.f32 %v2200, %v2204
    %p2206 = scmp.lt.s32.totalorder %s1911, 8
    %s2207 = scalar_select %p2206, 1, 0
    %v2208 = vstv %s2207
    %vm2209 = vcmp.eq.s32.totalorder %v2208, 1
    %v2210 = vsel %vm2209, %v2205, %v1908
    %v2211 = vsel %vm2209, %v2203, %v1909
    %s2212 = sadd.s32 0, 5
    %s2213 = ssub.s32 2, 0
    %s2214 = sshra.s32 %s2212, 3
    %s2215 = sand.u32 %s2212, 7
    %s2216 = sshra.s32 %s2212, 3
    %s2217 = sand.u32 %s2212, 7
    %s2218 = smul.u32 %s2214, 4
    %s2219 = smul.u32 %s2218, 8
    %s2220 = sadd.s32 %s2219, %s2217
    %s2221 = scalar_lea.vmem [#allocation3], %s2220
    %v2222 = vld [vmem:[%s2221] ss:$8 sm:$0xf]
    %v2223 = vpack.c.bf16 %v2060, %v2060
    %2224 = vmatpush.bf16.msra.mxu0 %v516
    %2225 = vmatpush.bf16.msra.mxu0 %v512
    %2226 = vmatpush.bf16.msra.mxu0 %v508
    %2227 = vmatpush.bf16.msra.mxu0 %v504
    %2228 = vmatpush.bf16.msra.mxu0 %v500
    %2229 = vmatpush.bf16.msra.mxu0 %v496
    %2230 = vmatpush.bf16.msra.mxu0 %v492
    %2231 = vmatpush.bf16.msra.mxu0 %v488
    %2232 = vmatmul.bf16.gmra.mxu0 %v2223
    %v2233 = vpop.f32.mrf.mxu0
    %v2234 = vadd.f32 0.0, %v2233
    %v2235 = vpop.f32.mrf.mxu0
    %2236 = vdwg.mxu0
    %2237 = vmatpush.bf16.msra.mxu0 %v517
    %2238 = vmatpush.bf16.msra.mxu0 %v513
    %2239 = vmatpush.bf16.msra.mxu0 %v509
    %2240 = vmatpush.bf16.msra.mxu0 %v505
    %2241 = vmatpush.bf16.msra.mxu0 %v501
    %2242 = vmatpush.bf16.msra.mxu0 %v497
    %2243 = vmatpush.bf16.msra.mxu0 %v493
    %2244 = vmatpush.bf16.msra.mxu0 %v489
    %2245 = vmatmul.bf16.gmra.mxu0 %v2223
    %v2246 = vpop.f32.mrf.mxu0
    %v2247 = vadd.f32 0.0, %v2246
    %v2248 = vpop.f32.mrf.mxu0
    %2249 = vdwg.mxu0
    %2250 = vmatpush.bf16.msra.mxu0 %v518
    %2251 = vmatpush.bf16.msra.mxu0 %v514
    %2252 = vmatpush.bf16.msra.mxu0 %v510
    %2253 = vmatpush.bf16.msra.mxu0 %v506
    %2254 = vmatpush.bf16.msra.mxu0 %v502
    %2255 = vmatpush.bf16.msra.mxu0 %v498
    %2256 = vmatpush.bf16.msra.mxu0 %v494
    %2257 = vmatpush.bf16.msra.mxu0 %v490
    %2258 = vmatmul.bf16.gmra.mxu0 %v2223
    %v2259 = vpop.f32.mrf.mxu0
    %v2260 = vadd.f32 0.0, %v2259
    %v2261 = vpop.f32.mrf.mxu0
    %2262 = vdwg.mxu0
    %2263 = vmatpush.bf16.msra.mxu0 %v519
    %2264 = vmatpush.bf16.msra.mxu0 %v515
    %2265 = vmatpush.bf16.msra.mxu0 %v511
    %2266 = vmatpush.bf16.msra.mxu0 %v507
    %2267 = vmatpush.bf16.msra.mxu0 %v503
    %2268 = vmatpush.bf16.msra.mxu0 %v499
    %2269 = vmatpush.bf16.msra.mxu0 %v495
    %2270 = vmatpush.bf16.msra.mxu0 %v491
    %2271 = vmatmul.bf16.gmra.mxu0 %v2223
    %v2272 = vpop.f32.mrf.mxu0
    %v2273 = vadd.f32 0.0, %v2272
    %v2274 = vpop.f32.mrf.mxu0
    %2275 = vdwg.mxu0
    %v2280 = vrot.slane %v2247, 7
    %v2281 = vrot.slane %v2260, 6
    %v2282 = vrot.slane %v2273, 5
    %v2283 = vsel %vm611, %v2234, %v2280
    %v2284 = vsel %vm613, %v2281, %v2282
    %v2285 = vsel %vm615, %v2283, %v2284
    %v2287 = vadd.f32 %v2222, %v2285
    %v2288 = vxor.u32 %v2287, 2147483648
    %v2289 = vmul.f32 %v2288, 1.442695
    %v2290 = vpow.pop %v2289
    %v2291 = vadd.f32 %v2290, 1.0
    %v2292 = vrcp.pop %v2291
    %v2293 = vmul.f32 %v2291, %v2292
    %v2294 = vsub.f32 1.0, %v2293
    %v2295 = vmul.f32 %v2292, %v2294
    %v2296 = vadd.f32 %v2292, %v2295
    %vm2297 = vweird.f32 %v2291
    %vm2298 = vweird.f32 %v2292
    %vm2299 = vmor %vm2297, %vm2298
    %v2300 = vsel %vm2299, %v2292, %v2296
    %v2301 = vand.u32 2147483647, %v2291
    %vm2302 = vcmp.eq.f32.partialorder %v2301, 8.507059e+37
    %v2303 = vand.u32 %v2291, 2147483648
    %v2304 = vor.u32 1.1754944e-38, %v2303
    %v2305 = vsel %vm2302, %v2304, %v2300
    %v2306 = vmul.f32 1.0, %v2305
    %v2308 = vrot.slane %v2287, 1
    %v2310 = vxor.u32 %v2308, 2147483648
    %v2311 = vmul.f32 %v2310, 1.442695
    %v2312 = vpow.pop %v2311
    %v2313 = vadd.f32 %v2312, 1.0
    %v2314 = vrcp.pop %v2313
    %v2315 = vmul.f32 %v2313, %v2314
    %v2316 = vsub.f32 1.0, %v2315
    %v2317 = vmul.f32 %v2314, %v2316
    %v2318 = vadd.f32 %v2314, %v2317
    %vm2319 = vweird.f32 %v2313
    %vm2320 = vweird.f32 %v2314
    %vm2321 = vmor %vm2319, %vm2320
    %v2322 = vsel %vm2321, %v2314, %v2318
    %v2323 = vand.u32 2147483647, %v2313
    %vm2324 = vcmp.eq.f32.partialorder %v2323, 8.507059e+37
    %v2325 = vand.u32 %v2313, 2147483648
    %v2326 = vor.u32 1.1754944e-38, %v2325
    %v2327 = vsel %vm2324, %v2326, %v2322
    %v2328 = vmul.f32 1.0, %v2327
    %v2329 = vrot.slane %v2287, 2
    %v2331 = vtanh.pop %v2329
    %v2332 = vrot.slane %v2287, 3
    %v2334 = vxor.u32 %v2332, 2147483648
    %v2335 = vmul.f32 %v2334, 1.442695
    %v2336 = vpow.pop %v2335
    %v2337 = vadd.f32 %v2336, 1.0
    %v2338 = vrcp.pop %v2337
    %v2339 = vmul.f32 %v2337, %v2338
    %v2340 = vsub.f32 1.0, %v2339
    %v2341 = vmul.f32 %v2338, %v2340
    %v2342 = vadd.f32 %v2338, %v2341
    %vm2343 = vweird.f32 %v2337
    %vm2344 = vweird.f32 %v2338
    %vm2345 = vmor %vm2343, %vm2344
    %v2346 = vsel %vm2345, %v2338, %v2342
    %v2347 = vand.u32 2147483647, %v2337
    %vm2348 = vcmp.eq.f32.partialorder %v2347, 8.507059e+37
    %v2349 = vand.u32 %v2337, 2147483648
    %v2350 = vor.u32 1.1754944e-38, %v2349
    %v2351 = vsel %vm2348, %v2350, %v2346
    %v2352 = vmul.f32 1.0, %v2351
    %v2353 = vmul.f32 %v2328, %v2061
    %v2354 = vmul.f32 %v2306, %v2331
    %v2355 = vadd.f32 %v2353, %v2354
    %v2356 = vtanh.pop %v2355
    %v2357 = vmul.f32 %v2352, %v2356
    %p2358 = scmp.lt.s32.totalorder %s2212, 8
    %s2359 = scalar_select %p2358, 1, 0
    %v2360 = vstv %s2359
    %vm2361 = vcmp.eq.s32.totalorder %v2360, 1
    %v2362 = vsel %vm2361, %v2357, %v2060
    %v2363 = vsel %vm2361, %v2355, %v2061
    %s2364 = sshra.s32 %s2213, 3
    %s2365 = sand.u32 %s2213, 7
    %s2366 = sshra.s32 %s2213, 3
    %s2367 = sand.u32 %s2213, 7
    %s2368 = smul.u32 %s2364, 4
    %s2369 = smul.u32 %s2368, 8
    %s2370 = sadd.s32 %s2369, %s2367
    %s2371 = scalar_lea.vmem [#allocation4], %s2370
    %v2372 = vld [vmem:[%s2371] ss:$8 sm:$0xf]
    %v2373 = vpack.c.bf16 %v2210, %v2210
    %2374 = vmatpush.bf16.msra.mxu0 %v828
    %2375 = vmatpush.bf16.msra.mxu0 %v824
    %2376 = vmatpush.bf16.msra.mxu0 %v820
    %2377 = vmatpush.bf16.msra.mxu0 %v816
    %2378 = vmatpush.bf16.msra.mxu0 %v812
    %2379 = vmatpush.bf16.msra.mxu0 %v808
    %2380 = vmatpush.bf16.msra.mxu0 %v804
    %2381 = vmatpush.bf16.msra.mxu0 %v800
    %2382 = vmatmul.bf16.gmra.mxu0 %v2373
    %v2383 = vpop.f32.mrf.mxu0
    %v2384 = vadd.f32 0.0, %v2383
    %v2385 = vpop.f32.mrf.mxu0
    %2386 = vdwg.mxu0
    %2387 = vmatpush.bf16.msra.mxu0 %v829
    %2388 = vmatpush.bf16.msra.mxu0 %v825
    %2389 = vmatpush.bf16.msra.mxu0 %v821
    %2390 = vmatpush.bf16.msra.mxu0 %v817
    %2391 = vmatpush.bf16.msra.mxu0 %v813
    %2392 = vmatpush.bf16.msra.mxu0 %v809
    %2393 = vmatpush.bf16.msra.mxu0 %v805
    %2394 = vmatpush.bf16.msra.mxu0 %v801
    %2395 = vmatmul.bf16.gmra.mxu0 %v2373
    %v2396 = vpop.f32.mrf.mxu0
    %v2397 = vadd.f32 0.0, %v2396
    %v2398 = vpop.f32.mrf.mxu0
    %2399 = vdwg.mxu0
    %2400 = vmatpush.bf16.msra.mxu0 %v830
    %2401 = vmatpush.bf16.msra.mxu0 %v826
    %2402 = vmatpush.bf16.msra.mxu0 %v822
    %2403 = vmatpush.bf16.msra.mxu0 %v818
    %2404 = vmatpush.bf16.msra.mxu0 %v814
    %2405 = vmatpush.bf16.msra.mxu0 %v810
    %2406 = vmatpush.bf16.msra.mxu0 %v806
    %2407 = vmatpush.bf16.msra.mxu0 %v802
    %2408 = vmatmul.bf16.gmra.mxu0 %v2373
    %v2409 = vpop.f32.mrf.mxu0
    %v2410 = vadd.f32 0.0, %v2409
    %v2411 = vpop.f32.mrf.mxu0
    %2412 = vdwg.mxu0
    %2413 = vmatpush.bf16.msra.mxu0 %v831
    %2414 = vmatpush.bf16.msra.mxu0 %v827
    %2415 = vmatpush.bf16.msra.mxu0 %v823
    %2416 = vmatpush.bf16.msra.mxu0 %v819
    %2417 = vmatpush.bf16.msra.mxu0 %v815
    %2418 = vmatpush.bf16.msra.mxu0 %v811
    %2419 = vmatpush.bf16.msra.mxu0 %v807
    %2420 = vmatpush.bf16.msra.mxu0 %v803
    %2421 = vmatmul.bf16.gmra.mxu0 %v2373
    %v2422 = vpop.f32.mrf.mxu0
    %v2423 = vadd.f32 0.0, %v2422
    %v2424 = vpop.f32.mrf.mxu0
    %2425 = vdwg.mxu0
    %v2430 = vrot.slane %v2397, 7
    %v2431 = vrot.slane %v2410, 6
    %v2432 = vrot.slane %v2423, 5
    %v2433 = vsel %vm611, %v2384, %v2430
    %v2434 = vsel %vm613, %v2431, %v2432
    %v2435 = vsel %vm615, %v2433, %v2434
    %v2437 = vadd.f32 %v2372, %v2435
    %v2438 = vxor.u32 %v2437, 2147483648
    %v2439 = vmul.f32 %v2438, 1.442695
    %v2440 = vpow.pop %v2439
    %v2441 = vadd.f32 %v2440, 1.0
    %v2442 = vrcp.pop %v2441
    %v2443 = vmul.f32 %v2441, %v2442
    %v2444 = vsub.f32 1.0, %v2443
    %v2445 = vmul.f32 %v2442, %v2444
    %v2446 = vadd.f32 %v2442, %v2445
    %vm2447 = vweird.f32 %v2441
    %vm2448 = vweird.f32 %v2442
    %vm2449 = vmor %vm2447, %vm2448
    %v2450 = vsel %vm2449, %v2442, %v2446
    %v2451 = vand.u32 2147483647, %v2441
    %vm2452 = vcmp.eq.f32.partialorder %v2451, 8.507059e+37
    %v2453 = vand.u32 %v2441, 2147483648
    %v2454 = vor.u32 1.1754944e-38, %v2453
    %v2455 = vsel %vm2452, %v2454, %v2450
    %v2456 = vmul.f32 1.0, %v2455
    %v2458 = vrot.slane %v2437, 1
    %v2460 = vxor.u32 %v2458, 2147483648
    %v2461 = vmul.f32 %v2460, 1.442695
    %v2462 = vpow.pop %v2461
    %v2463 = vadd.f32 %v2462, 1.0
    %v2464 = vrcp.pop %v2463
    %v2465 = vmul.f32 %v2463, %v2464
    %v2466 = vsub.f32 1.0, %v2465
    %v2467 = vmul.f32 %v2464, %v2466
    %v2468 = vadd.f32 %v2464, %v2467
    %vm2469 = vweird.f32 %v2463
    %vm2470 = vweird.f32 %v2464
    %vm2471 = vmor %vm2469, %vm2470
    %v2472 = vsel %vm2471, %v2464, %v2468
    %v2473 = vand.u32 2147483647, %v2463
    %vm2474 = vcmp.eq.f32.partialorder %v2473, 8.507059e+37
    %v2475 = vand.u32 %v2463, 2147483648
    %v2476 = vor.u32 1.1754944e-38, %v2475
    %v2477 = vsel %vm2474, %v2476, %v2472
    %v2478 = vmul.f32 1.0, %v2477
    %v2479 = vrot.slane %v2437, 2
    %v2481 = vtanh.pop %v2479
    %v2482 = vrot.slane %v2437, 3
    %v2484 = vxor.u32 %v2482, 2147483648
    %v2485 = vmul.f32 %v2484, 1.442695
    %v2486 = vpow.pop %v2485
    %v2487 = vadd.f32 %v2486, 1.0
    %v2488 = vrcp.pop %v2487
    %v2489 = vmul.f32 %v2487, %v2488
    %v2490 = vsub.f32 1.0, %v2489
    %v2491 = vmul.f32 %v2488, %v2490
    %v2492 = vadd.f32 %v2488, %v2491
    %vm2493 = vweird.f32 %v2487
    %vm2494 = vweird.f32 %v2488
    %vm2495 = vmor %vm2493, %vm2494
    %v2496 = vsel %vm2495, %v2488, %v2492
    %v2497 = vand.u32 2147483647, %v2487
    %vm2498 = vcmp.eq.f32.partialorder %v2497, 8.507059e+37
    %v2499 = vand.u32 %v2487, 2147483648
    %v2500 = vor.u32 1.1754944e-38, %v2499
    %v2501 = vsel %vm2498, %v2500, %v2496
    %v2502 = vmul.f32 1.0, %v2501
    %v2503 = vmul.f32 %v2478, %v2211
    %v2504 = vmul.f32 %v2456, %v2481
    %v2505 = vadd.f32 %v2503, %v2504
    %v2506 = vtanh.pop %v2505
    %v2507 = vmul.f32 %v2502, %v2506
    %p2508 = scmp.lt.s32.totalorder %s2213, 8
    %s2509 = scalar_select %p2508, 1, 0
    %v2510 = vstv %s2509
    %vm2511 = vcmp.eq.s32.totalorder %v2510, 1
    %v2512 = vsel %vm2511, %v2507, %v2210
    %v2513 = vsel %vm2511, %v2505, %v2211
    %s2514 = sadd.s32 0, 6
    %s2515 = ssub.s32 1, 0
    %s2516 = sshra.s32 %s2514, 3
    %s2517 = sand.u32 %s2514, 7
    %s2518 = sshra.s32 %s2514, 3
    %s2519 = sand.u32 %s2514, 7
    %s2520 = smul.u32 %s2516, 4
    %s2521 = smul.u32 %s2520, 8
    %s2522 = sadd.s32 %s2521, %s2519
    %s2523 = scalar_lea.vmem [#allocation3], %s2522
    %v2524 = vld [vmem:[%s2523] ss:$8 sm:$0xf]
    %v2525 = vpack.c.bf16 %v2362, %v2362
    %2526 = vmatpush.bf16.msra.mxu0 %v516
    %2527 = vmatpush.bf16.msra.mxu0 %v512
    %2528 = vmatpush.bf16.msra.mxu0 %v508
    %2529 = vmatpush.bf16.msra.mxu0 %v504
    %2530 = vmatpush.bf16.msra.mxu0 %v500
    %2531 = vmatpush.bf16.msra.mxu0 %v496
    %2532 = vmatpush.bf16.msra.mxu0 %v492
    %2533 = vmatpush.bf16.msra.mxu0 %v488
    %2534 = vmatmul.bf16.gmra.mxu0 %v2525
    %v2535 = vpop.f32.mrf.mxu0
    %v2536 = vadd.f32 0.0, %v2535
    %v2537 = vpop.f32.mrf.mxu0
    %2538 = vdwg.mxu0
    %2539 = vmatpush.bf16.msra.mxu0 %v517
    %2540 = vmatpush.bf16.msra.mxu0 %v513
    %2541 = vmatpush.bf16.msra.mxu0 %v509
    %2542 = vmatpush.bf16.msra.mxu0 %v505
    %2543 = vmatpush.bf16.msra.mxu0 %v501
    %2544 = vmatpush.bf16.msra.mxu0 %v497
    %2545 = vmatpush.bf16.msra.mxu0 %v493
    %2546 = vmatpush.bf16.msra.mxu0 %v489
    %2547 = vmatmul.bf16.gmra.mxu0 %v2525
    %v2548 = vpop.f32.mrf.mxu0
    %v2549 = vadd.f32 0.0, %v2548
    %v2550 = vpop.f32.mrf.mxu0
    %2551 = vdwg.mxu0
    %2552 = vmatpush.bf16.msra.mxu0 %v518
    %2553 = vmatpush.bf16.msra.mxu0 %v514
    %2554 = vmatpush.bf16.msra.mxu0 %v510
    %2555 = vmatpush.bf16.msra.mxu0 %v506
    %2556 = vmatpush.bf16.msra.mxu0 %v502
    %2557 = vmatpush.bf16.msra.mxu0 %v498
    %2558 = vmatpush.bf16.msra.mxu0 %v494
    %2559 = vmatpush.bf16.msra.mxu0 %v490
    %2560 = vmatmul.bf16.gmra.mxu0 %v2525
    %v2561 = vpop.f32.mrf.mxu0
    %v2562 = vadd.f32 0.0, %v2561
    %v2563 = vpop.f32.mrf.mxu0
    %2564 = vdwg.mxu0
    %2565 = vmatpush.bf16.msra.mxu0 %v519
    %2566 = vmatpush.bf16.msra.mxu0 %v515
    %2567 = vmatpush.bf16.msra.mxu0 %v511
    %2568 = vmatpush.bf16.msra.mxu0 %v507
    %2569 = vmatpush.bf16.msra.mxu0 %v503
    %2570 = vmatpush.bf16.msra.mxu0 %v499
    %2571 = vmatpush.bf16.msra.mxu0 %v495
    %2572 = vmatpush.bf16.msra.mxu0 %v491
    %2573 = vmatmul.bf16.gmra.mxu0 %v2525
    %v2574 = vpop.f32.mrf.mxu0
    %v2575 = vadd.f32 0.0, %v2574
    %v2576 = vpop.f32.mrf.mxu0
    %2577 = vdwg.mxu0
    %v2582 = vrot.slane %v2549, 7
    %v2583 = vrot.slane %v2562, 6
    %v2584 = vrot.slane %v2575, 5
    %v2585 = vsel %vm611, %v2536, %v2582
    %v2586 = vsel %vm613, %v2583, %v2584
    %v2587 = vsel %vm615, %v2585, %v2586
    %v2589 = vadd.f32 %v2524, %v2587
    %v2590 = vxor.u32 %v2589, 2147483648
    %v2591 = vmul.f32 %v2590, 1.442695
    %v2592 = vpow.pop %v2591
    %v2593 = vadd.f32 %v2592, 1.0
    %v2594 = vrcp.pop %v2593
    %v2595 = vmul.f32 %v2593, %v2594
    %v2596 = vsub.f32 1.0, %v2595
    %v2597 = vmul.f32 %v2594, %v2596
    %v2598 = vadd.f32 %v2594, %v2597
    %vm2599 = vweird.f32 %v2593
    %vm2600 = vweird.f32 %v2594
    %vm2601 = vmor %vm2599, %vm2600
    %v2602 = vsel %vm2601, %v2594, %v2598
    %v2603 = vand.u32 2147483647, %v2593
    %vm2604 = vcmp.eq.f32.partialorder %v2603, 8.507059e+37
    %v2605 = vand.u32 %v2593, 2147483648
    %v2606 = vor.u32 1.1754944e-38, %v2605
    %v2607 = vsel %vm2604, %v2606, %v2602
    %v2608 = vmul.f32 1.0, %v2607
    %v2610 = vrot.slane %v2589, 1
    %v2612 = vxor.u32 %v2610, 2147483648
    %v2613 = vmul.f32 %v2612, 1.442695
    %v2614 = vpow.pop %v2613
    %v2615 = vadd.f32 %v2614, 1.0
    %v2616 = vrcp.pop %v2615
    %v2617 = vmul.f32 %v2615, %v2616
    %v2618 = vsub.f32 1.0, %v2617
    %v2619 = vmul.f32 %v2616, %v2618
    %v2620 = vadd.f32 %v2616, %v2619
    %vm2621 = vweird.f32 %v2615
    %vm2622 = vweird.f32 %v2616
    %vm2623 = vmor %vm2621, %vm2622
    %v2624 = vsel %vm2623, %v2616, %v2620
    %v2625 = vand.u32 2147483647, %v2615
    %vm2626 = vcmp.eq.f32.partialorder %v2625, 8.507059e+37
    %v2627 = vand.u32 %v2615, 2147483648
    %v2628 = vor.u32 1.1754944e-38, %v2627
    %v2629 = vsel %vm2626, %v2628, %v2624
    %v2630 = vmul.f32 1.0, %v2629
    %v2631 = vrot.slane %v2589, 2
    %v2633 = vtanh.pop %v2631
    %v2634 = vrot.slane %v2589, 3
    %v2636 = vxor.u32 %v2634, 2147483648
    %v2637 = vmul.f32 %v2636, 1.442695
    %v2638 = vpow.pop %v2637
    %v2639 = vadd.f32 %v2638, 1.0
    %v2640 = vrcp.pop %v2639
    %v2641 = vmul.f32 %v2639, %v2640
    %v2642 = vsub.f32 1.0, %v2641
    %v2643 = vmul.f32 %v2640, %v2642
    %v2644 = vadd.f32 %v2640, %v2643
    %vm2645 = vweird.f32 %v2639
    %vm2646 = vweird.f32 %v2640
    %vm2647 = vmor %vm2645, %vm2646
    %v2648 = vsel %vm2647, %v2640, %v2644
    %v2649 = vand.u32 2147483647, %v2639
    %vm2650 = vcmp.eq.f32.partialorder %v2649, 8.507059e+37
    %v2651 = vand.u32 %v2639, 2147483648
    %v2652 = vor.u32 1.1754944e-38, %v2651
    %v2653 = vsel %vm2650, %v2652, %v2648
    %v2654 = vmul.f32 1.0, %v2653
    %v2655 = vmul.f32 %v2630, %v2363
    %v2656 = vmul.f32 %v2608, %v2633
    %v2657 = vadd.f32 %v2655, %v2656
    %v2658 = vtanh.pop %v2657
    %v2659 = vmul.f32 %v2654, %v2658
    %p2660 = scmp.lt.s32.totalorder %s2514, 8
    %s2661 = scalar_select %p2660, 1, 0
    %v2662 = vstv %s2661
    %vm2663 = vcmp.eq.s32.totalorder %v2662, 1
    %v2664 = vsel %vm2663, %v2659, %v2362
    %v2665 = vsel %vm2663, %v2657, %v2363
    %s2666 = sshra.s32 %s2515, 3
    %s2667 = sand.u32 %s2515, 7
    %s2668 = sshra.s32 %s2515, 3
    %s2669 = sand.u32 %s2515, 7
    %s2670 = smul.u32 %s2666, 4
    %s2671 = smul.u32 %s2670, 8
    %s2672 = sadd.s32 %s2671, %s2669
    %s2673 = scalar_lea.vmem [#allocation4], %s2672
    %v2674 = vld [vmem:[%s2673] ss:$8 sm:$0xf]
    %v2675 = vpack.c.bf16 %v2512, %v2512
    %2676 = vmatpush.bf16.msra.mxu0 %v828
    %2677 = vmatpush.bf16.msra.mxu0 %v824
    %2678 = vmatpush.bf16.msra.mxu0 %v820
    %2679 = vmatpush.bf16.msra.mxu0 %v816
    %2680 = vmatpush.bf16.msra.mxu0 %v812
    %2681 = vmatpush.bf16.msra.mxu0 %v808
    %2682 = vmatpush.bf16.msra.mxu0 %v804
    %2683 = vmatpush.bf16.msra.mxu0 %v800
    %2684 = vmatmul.bf16.gmra.mxu0 %v2675
    %v2685 = vpop.f32.mrf.mxu0
    %v2686 = vadd.f32 0.0, %v2685
    %v2687 = vpop.f32.mrf.mxu0
    %2688 = vdwg.mxu0
    %2689 = vmatpush.bf16.msra.mxu0 %v829
    %2690 = vmatpush.bf16.msra.mxu0 %v825
    %2691 = vmatpush.bf16.msra.mxu0 %v821
    %2692 = vmatpush.bf16.msra.mxu0 %v817
    %2693 = vmatpush.bf16.msra.mxu0 %v813
    %2694 = vmatpush.bf16.msra.mxu0 %v809
    %2695 = vmatpush.bf16.msra.mxu0 %v805
    %2696 = vmatpush.bf16.msra.mxu0 %v801
    %2697 = vmatmul.bf16.gmra.mxu0 %v2675
    %v2698 = vpop.f32.mrf.mxu0
    %v2699 = vadd.f32 0.0, %v2698
    %v2700 = vpop.f32.mrf.mxu0
    %2701 = vdwg.mxu0
    %2702 = vmatpush.bf16.msra.mxu0 %v830
    %2703 = vmatpush.bf16.msra.mxu0 %v826
    %2704 = vmatpush.bf16.msra.mxu0 %v822
    %2705 = vmatpush.bf16.msra.mxu0 %v818
    %2706 = vmatpush.bf16.msra.mxu0 %v814
    %2707 = vmatpush.bf16.msra.mxu0 %v810
    %2708 = vmatpush.bf16.msra.mxu0 %v806
    %2709 = vmatpush.bf16.msra.mxu0 %v802
    %2710 = vmatmul.bf16.gmra.mxu0 %v2675
    %v2711 = vpop.f32.mrf.mxu0
    %v2712 = vadd.f32 0.0, %v2711
    %v2713 = vpop.f32.mrf.mxu0
    %2714 = vdwg.mxu0
    %2715 = vmatpush.bf16.msra.mxu0 %v831
    %2716 = vmatpush.bf16.msra.mxu0 %v827
    %2717 = vmatpush.bf16.msra.mxu0 %v823
    %2718 = vmatpush.bf16.msra.mxu0 %v819
    %2719 = vmatpush.bf16.msra.mxu0 %v815
    %2720 = vmatpush.bf16.msra.mxu0 %v811
    %2721 = vmatpush.bf16.msra.mxu0 %v807
    %2722 = vmatpush.bf16.msra.mxu0 %v803
    %2723 = vmatmul.bf16.gmra.mxu0 %v2675
    %v2724 = vpop.f32.mrf.mxu0
    %v2725 = vadd.f32 0.0, %v2724
    %v2726 = vpop.f32.mrf.mxu0
    %2727 = vdwg.mxu0
    %v2732 = vrot.slane %v2699, 7
    %v2733 = vrot.slane %v2712, 6
    %v2734 = vrot.slane %v2725, 5
    %v2735 = vsel %vm611, %v2686, %v2732
    %v2736 = vsel %vm613, %v2733, %v2734
    %v2737 = vsel %vm615, %v2735, %v2736
    %v2739 = vadd.f32 %v2674, %v2737
    %v2740 = vxor.u32 %v2739, 2147483648
    %v2741 = vmul.f32 %v2740, 1.442695
    %v2742 = vpow.pop %v2741
    %v2743 = vadd.f32 %v2742, 1.0
    %v2744 = vrcp.pop %v2743
    %v2745 = vmul.f32 %v2743, %v2744
    %v2746 = vsub.f32 1.0, %v2745
    %v2747 = vmul.f32 %v2744, %v2746
    %v2748 = vadd.f32 %v2744, %v2747
    %vm2749 = vweird.f32 %v2743
    %vm2750 = vweird.f32 %v2744
    %vm2751 = vmor %vm2749, %vm2750
    %v2752 = vsel %vm2751, %v2744, %v2748
    %v2753 = vand.u32 2147483647, %v2743
    %vm2754 = vcmp.eq.f32.partialorder %v2753, 8.507059e+37
    %v2755 = vand.u32 %v2743, 2147483648
    %v2756 = vor.u32 1.1754944e-38, %v2755
    %v2757 = vsel %vm2754, %v2756, %v2752
    %v2758 = vmul.f32 1.0, %v2757
    %v2760 = vrot.slane %v2739, 1
    %v2762 = vxor.u32 %v2760, 2147483648
    %v2763 = vmul.f32 %v2762, 1.442695
    %v2764 = vpow.pop %v2763
    %v2765 = vadd.f32 %v2764, 1.0
    %v2766 = vrcp.pop %v2765
    %v2767 = vmul.f32 %v2765, %v2766
    %v2768 = vsub.f32 1.0, %v2767
    %v2769 = vmul.f32 %v2766, %v2768
    %v2770 = vadd.f32 %v2766, %v2769
    %vm2771 = vweird.f32 %v2765
    %vm2772 = vweird.f32 %v2766
    %vm2773 = vmor %vm2771, %vm2772
    %v2774 = vsel %vm2773, %v2766, %v2770
    %v2775 = vand.u32 2147483647, %v2765
    %vm2776 = vcmp.eq.f32.partialorder %v2775, 8.507059e+37
    %v2777 = vand.u32 %v2765, 2147483648
    %v2778 = vor.u32 1.1754944e-38, %v2777
    %v2779 = vsel %vm2776, %v2778, %v2774
    %v2780 = vmul.f32 1.0, %v2779
    %v2781 = vrot.slane %v2739, 2
    %v2783 = vtanh.pop %v2781
    %v2784 = vrot.slane %v2739, 3
    %v2786 = vxor.u32 %v2784, 2147483648
    %v2787 = vmul.f32 %v2786, 1.442695
    %v2788 = vpow.pop %v2787
    %v2789 = vadd.f32 %v2788, 1.0
    %v2790 = vrcp.pop %v2789
    %v2791 = vmul.f32 %v2789, %v2790
    %v2792 = vsub.f32 1.0, %v2791
    %v2793 = vmul.f32 %v2790, %v2792
    %v2794 = vadd.f32 %v2790, %v2793
    %vm2795 = vweird.f32 %v2789
    %vm2796 = vweird.f32 %v2790
    %vm2797 = vmor %vm2795, %vm2796
    %v2798 = vsel %vm2797, %v2790, %v2794
    %v2799 = vand.u32 2147483647, %v2789
    %vm2800 = vcmp.eq.f32.partialorder %v2799, 8.507059e+37
    %v2801 = vand.u32 %v2789, 2147483648
    %v2802 = vor.u32 1.1754944e-38, %v2801
    %v2803 = vsel %vm2800, %v2802, %v2798
    %v2804 = vmul.f32 1.0, %v2803
    %v2805 = vmul.f32 %v2780, %v2513
    %v2806 = vmul.f32 %v2758, %v2783
    %v2807 = vadd.f32 %v2805, %v2806
    %v2808 = vtanh.pop %v2807
    %v2809 = vmul.f32 %v2804, %v2808
    %p2810 = scmp.lt.s32.totalorder %s2515, 8
    %s2811 = scalar_select %p2810, 1, 0
    %v2812 = vstv %s2811
    %vm2813 = vcmp.eq.s32.totalorder %v2812, 1
    %v2814 = vsel %vm2813, %v2809, %v2512
    %v2815 = vsel %vm2813, %v2807, %v2513
    %s2816 = sadd.s32 0, 7
    %s2817 = ssub.s32 0, 0
    %s2818 = sshra.s32 %s2816, 3
    %s2819 = sand.u32 %s2816, 7
    %s2820 = sshra.s32 %s2816, 3
    %s2821 = sand.u32 %s2816, 7
    %s2822 = smul.u32 %s2818, 4
    %s2823 = smul.u32 %s2822, 8
    %s2824 = sadd.s32 %s2823, %s2821
    %s2825 = scalar_lea.vmem [#allocation3], %s2824
    %v2826 = vld [vmem:[%s2825] ss:$8 sm:$0xf]
    %v2827 = vpack.c.bf16 %v2664, %v2664
    %2828 = vmatpush.bf16.msra.mxu0 %v516
    %2829 = vmatpush.bf16.msra.mxu0 %v512
    %2830 = vmatpush.bf16.msra.mxu0 %v508
    %2831 = vmatpush.bf16.msra.mxu0 %v504
    %2832 = vmatpush.bf16.msra.mxu0 %v500
    %2833 = vmatpush.bf16.msra.mxu0 %v496
    %2834 = vmatpush.bf16.msra.mxu0 %v492
    %2835 = vmatpush.bf16.msra.mxu0 %v488
    %2836 = vmatmul.bf16.gmra.mxu0 %v2827
    %v2837 = vpop.f32.mrf.mxu0
    %v2838 = vadd.f32 0.0, %v2837
    %v2839 = vpop.f32.mrf.mxu0
    %2840 = vdwg.mxu0
    %2841 = vmatpush.bf16.msra.mxu0 %v517
    %2842 = vmatpush.bf16.msra.mxu0 %v513
    %2843 = vmatpush.bf16.msra.mxu0 %v509
    %2844 = vmatpush.bf16.msra.mxu0 %v505
    %2845 = vmatpush.bf16.msra.mxu0 %v501
    %2846 = vmatpush.bf16.msra.mxu0 %v497
    %2847 = vmatpush.bf16.msra.mxu0 %v493
    %2848 = vmatpush.bf16.msra.mxu0 %v489
    %2849 = vmatmul.bf16.gmra.mxu0 %v2827
    %v2850 = vpop.f32.mrf.mxu0
    %v2851 = vadd.f32 0.0, %v2850
    %v2852 = vpop.f32.mrf.mxu0
    %2853 = vdwg.mxu0
    %2854 = vmatpush.bf16.msra.mxu0 %v518
    %2855 = vmatpush.bf16.msra.mxu0 %v514
    %2856 = vmatpush.bf16.msra.mxu0 %v510
    %2857 = vmatpush.bf16.msra.mxu0 %v506
    %2858 = vmatpush.bf16.msra.mxu0 %v502
    %2859 = vmatpush.bf16.msra.mxu0 %v498
    %2860 = vmatpush.bf16.msra.mxu0 %v494
    %2861 = vmatpush.bf16.msra.mxu0 %v490
    %2862 = vmatmul.bf16.gmra.mxu0 %v2827
    %v2863 = vpop.f32.mrf.mxu0
    %v2864 = vadd.f32 0.0, %v2863
    %v2865 = vpop.f32.mrf.mxu0
    %2866 = vdwg.mxu0
    %2867 = vmatpush.bf16.msra.mxu0 %v519
    %2868 = vmatpush.bf16.msra.mxu0 %v515
    %2869 = vmatpush.bf16.msra.mxu0 %v511
    %2870 = vmatpush.bf16.msra.mxu0 %v507
    %2871 = vmatpush.bf16.msra.mxu0 %v503
    %2872 = vmatpush.bf16.msra.mxu0 %v499
    %2873 = vmatpush.bf16.msra.mxu0 %v495
    %2874 = vmatpush.bf16.msra.mxu0 %v491
    %2875 = vmatmul.bf16.gmra.mxu0 %v2827
    %v2876 = vpop.f32.mrf.mxu0
    %v2877 = vadd.f32 0.0, %v2876
    %v2878 = vpop.f32.mrf.mxu0
    %2879 = vdwg.mxu0
    %v2884 = vrot.slane %v2851, 7
    %v2885 = vrot.slane %v2864, 6
    %v2886 = vrot.slane %v2877, 5
    %v2887 = vsel %vm611, %v2838, %v2884
    %v2888 = vsel %vm613, %v2885, %v2886
    %v2889 = vsel %vm615, %v2887, %v2888
    %v2891 = vadd.f32 %v2826, %v2889
    %v2892 = vxor.u32 %v2891, 2147483648
    %v2893 = vmul.f32 %v2892, 1.442695
    %v2894 = vpow.pop %v2893
    %v2895 = vadd.f32 %v2894, 1.0
    %v2896 = vrcp.pop %v2895
    %v2897 = vmul.f32 %v2895, %v2896
    %v2898 = vsub.f32 1.0, %v2897
    %v2899 = vmul.f32 %v2896, %v2898
    %v2900 = vadd.f32 %v2896, %v2899
    %vm2901 = vweird.f32 %v2895
    %vm2902 = vweird.f32 %v2896
    %vm2903 = vmor %vm2901, %vm2902
    %v2904 = vsel %vm2903, %v2896, %v2900
    %v2905 = vand.u32 2147483647, %v2895
    %vm2906 = vcmp.eq.f32.partialorder %v2905, 8.507059e+37
    %v2907 = vand.u32 %v2895, 2147483648
    %v2908 = vor.u32 1.1754944e-38, %v2907
    %v2909 = vsel %vm2906, %v2908, %v2904
    %v2910 = vmul.f32 1.0, %v2909
    %v2912 = vrot.slane %v2891, 1
    %v2914 = vxor.u32 %v2912, 2147483648
    %v2915 = vmul.f32 %v2914, 1.442695
    %v2916 = vpow.pop %v2915
    %v2917 = vadd.f32 %v2916, 1.0
    %v2918 = vrcp.pop %v2917
    %v2919 = vmul.f32 %v2917, %v2918
    %v2920 = vsub.f32 1.0, %v2919
    %v2921 = vmul.f32 %v2918, %v2920
    %v2922 = vadd.f32 %v2918, %v2921
    %vm2923 = vweird.f32 %v2917
    %vm2924 = vweird.f32 %v2918
    %vm2925 = vmor %vm2923, %vm2924
    %v2926 = vsel %vm2925, %v2918, %v2922
    %v2927 = vand.u32 2147483647, %v2917
    %vm2928 = vcmp.eq.f32.partialorder %v2927, 8.507059e+37
    %v2929 = vand.u32 %v2917, 2147483648
    %v2930 = vor.u32 1.1754944e-38, %v2929
    %v2931 = vsel %vm2928, %v2930, %v2926
    %v2932 = vmul.f32 1.0, %v2931
    %v2933 = vrot.slane %v2891, 2
    %v2935 = vtanh.pop %v2933
    %v2936 = vrot.slane %v2891, 3
    %v2938 = vxor.u32 %v2936, 2147483648
    %v2939 = vmul.f32 %v2938, 1.442695
    %v2940 = vpow.pop %v2939
    %v2941 = vadd.f32 %v2940, 1.0
    %v2942 = vrcp.pop %v2941
    %v2943 = vmul.f32 %v2941, %v2942
    %v2944 = vsub.f32 1.0, %v2943
    %v2945 = vmul.f32 %v2942, %v2944
    %v2946 = vadd.f32 %v2942, %v2945
    %vm2947 = vweird.f32 %v2941
    %vm2948 = vweird.f32 %v2942
    %vm2949 = vmor %vm2947, %vm2948
    %v2950 = vsel %vm2949, %v2942, %v2946
    %v2951 = vand.u32 2147483647, %v2941
    %vm2952 = vcmp.eq.f32.partialorder %v2951, 8.507059e+37
    %v2953 = vand.u32 %v2941, 2147483648
    %v2954 = vor.u32 1.1754944e-38, %v2953
    %v2955 = vsel %vm2952, %v2954, %v2950
    %v2956 = vmul.f32 1.0, %v2955
    %v2957 = vmul.f32 %v2932, %v2665
    %v2958 = vmul.f32 %v2910, %v2935
    %v2959 = vadd.f32 %v2957, %v2958
    %v2960 = vtanh.pop %v2959
    %v2961 = vmul.f32 %v2956, %v2960
    %p2962 = scmp.lt.s32.totalorder %s2816, 8
    %s2963 = scalar_select %p2962, 1, 0
    %v2964 = vstv %s2963
    %vm2965 = vcmp.eq.s32.totalorder %v2964, 1
    %v2966 = vsel %vm2965, %v2961, %v2664
    %s2967 = sshra.s32 %s2817, 3
    %s2968 = sand.u32 %s2817, 7
    %s2969 = smul.u32 %s2967, 4
    %s2970 = smul.addr %s2969, 8
    %s2971 = scalar_lea.vmem [#allocation4], %s2970
    %v2972 = vld [vmem:[%s2971] ss:$8 sm:$0xf]
    %v2973 = vpack.c.bf16 %v2814, %v2814
    %2974 = vmatpush.bf16.msra.mxu0 %v828
    %2975 = vmatpush.bf16.msra.mxu0 %v824
    %2976 = vmatpush.bf16.msra.mxu0 %v820
    %2977 = vmatpush.bf16.msra.mxu0 %v816
    %2978 = vmatpush.bf16.msra.mxu0 %v812
    %2979 = vmatpush.bf16.msra.mxu0 %v808
    %2980 = vmatpush.bf16.msra.mxu0 %v804
    %2981 = vmatpush.bf16.msra.mxu0 %v800
    %2982 = vmatmul.bf16.gmra.mxu0 %v2973
    %v2983 = vpop.f32.mrf.mxu0
    %v2984 = vadd.f32 0.0, %v2983
    %v2985 = vpop.f32.mrf.mxu0
    %2986 = vdwg.mxu0
    %2987 = vmatpush.bf16.msra.mxu0 %v829
    %2988 = vmatpush.bf16.msra.mxu0 %v825
    %2989 = vmatpush.bf16.msra.mxu0 %v821
    %2990 = vmatpush.bf16.msra.mxu0 %v817
    %2991 = vmatpush.bf16.msra.mxu0 %v813
    %2992 = vmatpush.bf16.msra.mxu0 %v809
    %2993 = vmatpush.bf16.msra.mxu0 %v805
    %2994 = vmatpush.bf16.msra.mxu0 %v801
    %2995 = vmatmul.bf16.gmra.mxu0 %v2973
    %v2996 = vpop.f32.mrf.mxu0
    %v2997 = vadd.f32 0.0, %v2996
    %v2998 = vpop.f32.mrf.mxu0
    %2999 = vdwg.mxu0
    %3000 = vmatpush.bf16.msra.mxu0 %v830
    %3001 = vmatpush.bf16.msra.mxu0 %v826
    %3002 = vmatpush.bf16.msra.mxu0 %v822
    %3003 = vmatpush.bf16.msra.mxu0 %v818
    %3004 = vmatpush.bf16.msra.mxu0 %v814
    %3005 = vmatpush.bf16.msra.mxu0 %v810
    %3006 = vmatpush.bf16.msra.mxu0 %v806
    %3007 = vmatpush.bf16.msra.mxu0 %v802
    %3008 = vmatmul.bf16.gmra.mxu0 %v2973
    %v3009 = vpop.f32.mrf.mxu0
    %v3010 = vadd.f32 0.0, %v3009
    %v3011 = vpop.f32.mrf.mxu0
    %3012 = vdwg.mxu0
    %3013 = vmatpush.bf16.msra.mxu0 %v831
    %3014 = vmatpush.bf16.msra.mxu0 %v827
    %3015 = vmatpush.bf16.msra.mxu0 %v823
    %3016 = vmatpush.bf16.msra.mxu0 %v819
    %3017 = vmatpush.bf16.msra.mxu0 %v815
    %3018 = vmatpush.bf16.msra.mxu0 %v811
    %3019 = vmatpush.bf16.msra.mxu0 %v807
    %3020 = vmatpush.bf16.msra.mxu0 %v803
    %3021 = vmatmul.bf16.gmra.mxu0 %v2973
    %v3022 = vpop.f32.mrf.mxu0
    %v3023 = vadd.f32 0.0, %v3022
    %v3024 = vpop.f32.mrf.mxu0
    %3025 = vdwg.mxu0
    %v3030 = vrot.slane %v2997, 7
    %v3031 = vrot.slane %v3010, 6
    %v3032 = vrot.slane %v3023, 5
    %v3033 = vsel %vm611, %v2984, %v3030
    %v3034 = vsel %vm613, %v3031, %v3032
    %v3035 = vsel %vm615, %v3033, %v3034
    %v3037 = vadd.f32 %v2972, %v3035
    %v3038 = vxor.u32 %v3037, 2147483648
    %v3039 = vmul.f32 %v3038, 1.442695
    %v3040 = vpow.pop %v3039
    %v3041 = vadd.f32 %v3040, 1.0
    %v3042 = vrcp.pop %v3041
    %v3043 = vmul.f32 %v3041, %v3042
    %v3044 = vsub.f32 1.0, %v3043
    %v3045 = vmul.f32 %v3042, %v3044
    %v3046 = vadd.f32 %v3042, %v3045
    %vm3047 = vweird.f32 %v3041
    %vm3048 = vweird.f32 %v3042
    %vm3049 = vmor %vm3047, %vm3048
    %v3050 = vsel %vm3049, %v3042, %v3046
    %v3051 = vand.u32 2147483647, %v3041
    %vm3052 = vcmp.eq.f32.partialorder %v3051, 8.507059e+37
    %v3053 = vand.u32 %v3041, 2147483648
    %v3054 = vor.u32 1.1754944e-38, %v3053
    %v3055 = vsel %vm3052, %v3054, %v3050
    %v3056 = vmul.f32 1.0, %v3055
    %v3058 = vrot.slane %v3037, 1
    %v3060 = vxor.u32 %v3058, 2147483648
    %v3061 = vmul.f32 %v3060, 1.442695
    %v3062 = vpow.pop %v3061
    %v3063 = vadd.f32 %v3062, 1.0
    %v3064 = vrcp.pop %v3063
    %v3065 = vmul.f32 %v3063, %v3064
    %v3066 = vsub.f32 1.0, %v3065
    %v3067 = vmul.f32 %v3064, %v3066
    %v3068 = vadd.f32 %v3064, %v3067
    %vm3069 = vweird.f32 %v3063
    %vm3070 = vweird.f32 %v3064
    %vm3071 = vmor %vm3069, %vm3070
    %v3072 = vsel %vm3071, %v3064, %v3068
    %v3073 = vand.u32 2147483647, %v3063
    %vm3074 = vcmp.eq.f32.partialorder %v3073, 8.507059e+37
    %v3075 = vand.u32 %v3063, 2147483648
    %v3076 = vor.u32 1.1754944e-38, %v3075
    %v3077 = vsel %vm3074, %v3076, %v3072
    %v3078 = vmul.f32 1.0, %v3077
    %v3079 = vrot.slane %v3037, 2
    %v3081 = vtanh.pop %v3079
    %v3082 = vrot.slane %v3037, 3
    %v3084 = vxor.u32 %v3082, 2147483648
    %v3085 = vmul.f32 %v3084, 1.442695
    %v3086 = vpow.pop %v3085
    %v3087 = vadd.f32 %v3086, 1.0
    %v3088 = vrcp.pop %v3087
    %v3089 = vmul.f32 %v3087, %v3088
    %v3090 = vsub.f32 1.0, %v3089
    %v3091 = vmul.f32 %v3088, %v3090
    %v3092 = vadd.f32 %v3088, %v3091
    %vm3093 = vweird.f32 %v3087
    %vm3094 = vweird.f32 %v3088
    %vm3095 = vmor %vm3093, %vm3094
    %v3096 = vsel %vm3095, %v3088, %v3092
    %v3097 = vand.u32 2147483647, %v3087
    %vm3098 = vcmp.eq.f32.partialorder %v3097, 8.507059e+37
    %v3099 = vand.u32 %v3087, 2147483648
    %v3100 = vor.u32 1.1754944e-38, %v3099
    %v3101 = vsel %vm3098, %v3100, %v3096
    %v3102 = vmul.f32 1.0, %v3101
    %v3103 = vmul.f32 %v3078, %v2815
    %v3104 = vmul.f32 %v3056, %v3081
    %v3105 = vadd.f32 %v3103, %v3104
    %v3106 = vtanh.pop %v3105
    %v3107 = vmul.f32 %v3102, %v3106
    %p3108 = scmp.lt.s32.totalorder %s2817, 8
    %s3109 = scalar_select %p3108, 1, 0
    %v3110 = vstv %s3109
    %vm3111 = vcmp.eq.s32.totalorder %v3110, 1
    %v3112 = vsel %vm3111, %v3107, %v2814
    %v3114 = vperm.slane %v1154, 0
    %v3117 = vperm.slane %v1456, 0
    %v3120 = vperm.slane %v1758, 0
    %v3123 = vperm.slane %v2060, 0
    %v3126 = vperm.slane %v2362, 0
    %v3129 = vperm.slane %v2664, 0
    %v3132 = vperm.slane %v2966, 0
    %v3134 = vsel %vm611, %v693, %v3114
    %v3135 = vsel %vm615, %v3134, %v3117
    %vm3136 = vcmask 1042432
    %v3137 = vsel %vm3136, %v3135, %v3120
    %v3138 = vsel %vm140, %v3137, %v3123
    %vm3139 = vcmask 1044480
    %v3140 = vsel %vm3139, %v3138, %v3126
    %vm3141 = vcmask 1045504
    %v3142 = vsel %vm3141, %v3140, %v3129
    %vm3143 = vcmask 1046528
    %v3144 = vsel %vm3143, %v3142, %v3132
    %s3145 = smul.u32 0, 2
    %s3146 = smul.addr %s3145, 8
    %s3147 = scalar_lea.vmem [#allocation2], %s3146
    %3148 = vst [vmem:[%s3147] sm:$0xff] %v3144
    %v3150 = vperm.slane %v2814, 0
    %v3153 = vperm.slane %v2512, 0
    %v3156 = vperm.slane %v2210, 0
    %v3159 = vperm.slane %v1908, 0
    %v3162 = vperm.slane %v1606, 0
    %v3165 = vperm.slane %v1304, 0
    %v3168 = vperm.slane %v1002, 0
    %v3170 = vsel %vm611, %v3112, %v3150
    %v3171 = vsel %vm615, %v3170, %v3153
    %v3172 = vsel %vm3136, %v3171, %v3156
    %v3173 = vsel %vm140, %v3172, %v3159
    %v3174 = vsel %vm3139, %v3173, %v3162
    %v3175 = vsel %vm3141, %v3174, %v3165
    %v3176 = vsel %vm3143, %v3175, %v3168
    %s3177 = sshra.s32 %s2817, 3
    %s3178 = sand.u32 %s2817, 7
    %s3179 = smul.u32 %s3177, 2
    %s3180 = smul.addr %s3179, 8
    %s3181 = scalar_lea.vmem [#allocation2], %s3180
    %3182 = vst [vmem:[%s3181 + $0x8] sm:$0xff] %v3176
    %v3183 = vld [vmem:[#allocation2] sm:$0xff]
    %v3184 = vld [vmem:[#allocation2 + $0x8] sm:$0xff]
    %v3185 = vpack.c.bf16 %v3183, %v3183
    %v3186 = vpack.c.bf16 %v3184, %v3184
    %v3187 = vld [vmem:[%s7] sm:$0xf]
    %v3188 = vld [vmem:[%s7 + $0x4] sm:$0xf]
    %v3189 = vld [vmem:[%s7 + $0x8] sm:$0xf]
    %v3190 = vld [vmem:[%s7 + $0xc] sm:$0xf]
    %v3191 = vld [vmem:[%s7 + $0x10] sm:$0xf]
    %v3192 = vld [vmem:[%s7 + $0x14] sm:$0xf]
    %v3193 = vld [vmem:[%s7 + $0x18] sm:$0xf]
    %v3194 = vld [vmem:[%s7 + $0x1c] sm:$0xf]
    %v3195 = vld [vmem:[%s7 + $0x20] sm:$0xf]
    %v3196 = vld [vmem:[%s7 + $0x24] sm:$0xf]
    %v3197 = vld [vmem:[%s7 + $0x28] sm:$0xf]
    %v3198 = vld [vmem:[%s7 + $0x2c] sm:$0xf]
    %v3199 = vld [vmem:[%s7 + $0x30] sm:$0xf]
    %v3200 = vld [vmem:[%s7 + $0x34] sm:$0xf]
    %v3201 = vld [vmem:[%s7 + $0x38] sm:$0xf]
    %v3202 = vld [vmem:[%s7 + $0x3c] sm:$0xf]
    %v3203 = vld [vmem:[%s7 + $0x40] sm:$0xf]
    %v3204 = vld [vmem:[%s7 + $0x44] sm:$0xf]
    %v3205 = vld [vmem:[%s7 + $0x48] sm:$0xf]
    %v3206 = vld [vmem:[%s7 + $0x4c] sm:$0xf]
    %v3207 = vld [vmem:[%s7 + $0x50] sm:$0xf]
    %v3208 = vld [vmem:[%s7 + $0x54] sm:$0xf]
    %v3209 = vld [vmem:[%s7 + $0x58] sm:$0xf]
    %v3210 = vld [vmem:[%s7 + $0x5c] sm:$0xf]
    %v3211 = vld [vmem:[%s7 + $0x60] sm:$0xf]
    %v3212 = vld [vmem:[%s7 + $0x64] sm:$0xf]
    %v3213 = vld [vmem:[%s7 + $0x68] sm:$0xf]
    %v3214 = vld [vmem:[%s7 + $0x6c] sm:$0xf]
    %v3215 = vld [vmem:[%s7 + $0x70] sm:$0xf]
    %v3216 = vld [vmem:[%s7 + $0x74] sm:$0xf]
    %v3217 = vld [vmem:[%s7 + $0x78] sm:$0xf]
    %v3218 = vld [vmem:[%s7 + $0x7c] sm:$0xf]
    %v3219 = vld [vmem:[%s9] sm:$0x1]
    %v3221 = vperm.slane %v3219, 0
    %v3255 = vunpack.c.l.b16 %v3187
    %v3256 = vunpack.c.l.b16 %v3188
    %v3257 = vunpack.c.l.b16 %v3189
    %v3258 = vunpack.c.l.b16 %v3190
    %v3259 = vunpack.c.l.b16 %v3191
    %v3260 = vunpack.c.l.b16 %v3192
    %v3261 = vunpack.c.l.b16 %v3193
    %v3262 = vunpack.c.l.b16 %v3194
    %v3263 = vunpack.c.l.b16 %v3195
    %v3264 = vunpack.c.l.b16 %v3196
    %v3265 = vunpack.c.l.b16 %v3197
    %v3266 = vunpack.c.l.b16 %v3198
    %v3267 = vunpack.c.l.b16 %v3199
    %v3268 = vunpack.c.l.b16 %v3200
    %v3269 = vunpack.c.l.b16 %v3201
    %v3270 = vunpack.c.l.b16 %v3202
    %v3271 = vunpack.c.l.b16 %v3203
    %v3272 = vunpack.c.l.b16 %v3204
    %v3273 = vunpack.c.l.b16 %v3205
    %v3274 = vunpack.c.l.b16 %v3206
    %v3275 = vunpack.c.l.b16 %v3207
    %v3276 = vunpack.c.l.b16 %v3208
    %v3277 = vunpack.c.l.b16 %v3209
    %v3278 = vunpack.c.l.b16 %v3210
    %v3279 = vunpack.c.l.b16 %v3211
    %v3280 = vunpack.c.l.b16 %v3212
    %v3281 = vunpack.c.l.b16 %v3213
    %v3282 = vunpack.c.l.b16 %v3214
    %v3283 = vunpack.c.l.b16 %v3215
    %v3284 = vunpack.c.l.b16 %v3216
    %v3285 = vunpack.c.l.b16 %v3217
    %v3286 = vunpack.c.l.b16 %v3218
    %v3287 = vpack.c.b16 %v3256, %v3255
    %v3288 = vpack.c.b16 %v3258, %v3257
    %v3289 = vpack.c.b16 %v3260, %v3259
    %v3290 = vpack.c.b16 %v3262, %v3261
    %v3291 = vpack.c.b16 %v3264, %v3263
    %v3292 = vpack.c.b16 %v3266, %v3265
    %v3293 = vpack.c.b16 %v3268, %v3267
    %v3294 = vpack.c.b16 %v3270, %v3269
    %v3295 = vpack.c.b16 %v3272, %v3271
    %v3296 = vpack.c.b16 %v3274, %v3273
    %v3297 = vpack.c.b16 %v3276, %v3275
    %v3298 = vpack.c.b16 %v3278, %v3277
    %v3299 = vpack.c.b16 %v3280, %v3279
    %v3300 = vpack.c.b16 %v3282, %v3281
    %v3301 = vpack.c.b16 %v3284, %v3283
    %v3302 = vpack.c.b16 %v3286, %v3285
    %3319 = vmatpush.bf16.msra.mxu0 %v3294
    %3320 = vmatpush.bf16.msra.mxu0 %v3293
    %3321 = vmatpush.bf16.msra.mxu0 %v3292
    %3322 = vmatpush.bf16.msra.mxu0 %v3291
    %3323 = vmatpush.bf16.msra.mxu0 %v3290
    %3324 = vmatpush.bf16.msra.mxu0 %v3289
    %3325 = vmatpush.bf16.msra.mxu0 %v3288
    %3326 = vmatpush.bf16.msra.mxu0 %v3287
    %3327 = vmatmul.bf16.gmra.mxu0 %v3185
    %v3328 = vpop.f32.mrf.mxu0
    %v3329 = vadd.f32 %v3221, %v3328
    %v3330 = vpop.f32.mrf.mxu0
    %3331 = vdwg.mxu0
    %3332 = vmatpush.bf16.msra.mxu0 %v3302
    %3333 = vmatpush.bf16.msra.mxu0 %v3301
    %3334 = vmatpush.bf16.msra.mxu0 %v3300
    %3335 = vmatpush.bf16.msra.mxu0 %v3299
    %3336 = vmatpush.bf16.msra.mxu0 %v3298
    %3337 = vmatpush.bf16.msra.mxu0 %v3297
    %3338 = vmatpush.bf16.msra.mxu0 %v3296
    %3339 = vmatpush.bf16.msra.mxu0 %v3295
    %3340 = vmatmul.bf16.gmra.mxu0 %v3186
    %v3341 = vpop.f32.mrf.mxu0
    %v3342 = vadd.f32 %v3329, %v3341
    %v3343 = vpop.f32.mrf.mxu0
    %3344 = vdwg.mxu0
    %3345 = vst [vmem:[#allocation5] sm:$0xff] 0.0
    %3346 = vst [vmem:[#allocation5 + $0x8] sm:$0xff] 0.0
    %3347 = vst [vmem:[#allocation5 + $0x10] sm:$0xff] 0.0
    %3348 = vst [vmem:[#allocation5 + $0x18] sm:$0xff] 0.0
    %v3349 = vld [vmem:[%s8] sm:$0xff]
    %v3350 = vld [vmem:[%s8 + $0x8] sm:$0xff]
    %v3351 = vld [vmem:[%s8 + $0x10] sm:$0xff]
    %v3352 = vld [vmem:[%s8 + $0x18] sm:$0xff]
    %v3357 = vunpack.c.l.b16 %v3349
    %v3358 = vunpack.c.h.b16 %v3349
    %v3359 = vunpack.c.l.b16 %v3350
    %v3360 = vunpack.c.h.b16 %v3350
    %v3361 = vunpack.c.l.b16 %v3351
    %v3362 = vunpack.c.h.b16 %v3351
    %v3363 = vunpack.c.l.b16 %v3352
    %v3364 = vunpack.c.h.b16 %v3352
    %v3365 = vpack.c.b16 %v3359, %v3357
    %v3366 = vpack.c.b16 %v3360, %v3358
    %v3367 = vpack.c.b16 %v3363, %v3361
    %v3368 = vpack.c.b16 %v3364, %v3362
    %3373 = vmatpush.bf16.xpose.msra.mxu0 0
    %3374 = vmatpush.bf16.xpose.msra.mxu0 0
    %3375 = vmatpush.bf16.xpose.msra.mxu0 0
    %3376 = vmatpush.bf16.xpose.msra.mxu0 0
    %3377 = vmatpush.bf16.xpose.msra.mxu0 0
    %3378 = vmatpush.bf16.xpose.msra.mxu0 0
    %3379 = vmatpush.bf16.xpose.msra.mxu0 0
    %3380 = vmatpush.bf16.xpose.msra.mxu0 %v3185
    %3381 = vmatmul.bf16.gmra.mxu0 %v3365
    %v3382 = vpop.f32.mrf.mxu0
    %v3383 = vadd.f32 0.0, %v3382
    %v3384 = vpop.f32.mrf.mxu0
    %v3385 = vadd.f32 0.0, %v3384
    %3386 = vmatmul.bf16.gmra.mxu0 %v3367
    %v3387 = vpop.f32.mrf.mxu0
    %v3388 = vadd.f32 0.0, %v3387
    %v3389 = vpop.f32.mrf.mxu0
    %v3390 = vadd.f32 0.0, %v3389
    %3391 = vdwg.mxu0
    %3392 = vmatpush.bf16.xpose.msra.mxu0 0
    %3393 = vmatpush.bf16.xpose.msra.mxu0 0
    %3394 = vmatpush.bf16.xpose.msra.mxu0 0
    %3395 = vmatpush.bf16.xpose.msra.mxu0 0
    %3396 = vmatpush.bf16.xpose.msra.mxu0 0
    %3397 = vmatpush.bf16.xpose.msra.mxu0 0
    %3398 = vmatpush.bf16.xpose.msra.mxu0 0
    %3399 = vmatpush.bf16.xpose.msra.mxu0 %v3186
    %3400 = vmatmul.bf16.gmra.mxu0 %v3366
    %v3401 = vpop.f32.mrf.mxu0
    %v3402 = vadd.f32 %v3383, %v3401
    %v3403 = vpop.f32.mrf.mxu0
    %v3404 = vadd.f32 %v3385, %v3403
    %3405 = vmatmul.bf16.gmra.mxu0 %v3368
    %v3406 = vpop.f32.mrf.mxu0
    %v3407 = vadd.f32 %v3388, %v3406
    %v3408 = vpop.f32.mrf.mxu0
    %v3409 = vadd.f32 %v3390, %v3408
    %3410 = vdwg.mxu0
    %vm3411 = vcmask 64512
    %3412 = vst.msk [vmem:[#allocation5] sm:$0xff] %vm3411, %v3402
    %3413 = vst.msk [vmem:[#allocation5 + $0x8] sm:$0xff] %vm3411, %v3404
    %3414 = vst.msk [vmem:[#allocation5 + $0x10] sm:$0xff] %vm3411, %v3407
    %3415 = vst.msk [vmem:[#allocation5 + $0x18] sm:$0xff] %vm3411, %v3409
    %s3416 = sld [smem:[#allocation12]]
    %s3417 = sld [smem:[#allocation12 + $0x1]]
    %s3418 = sld [smem:[#allocation12 + $0x2]]
    %s3419 = sld [smem:[#allocation12 + $0x3]]
    %s3420 = sld [smem:[#allocation12 + $0x4]]
    %s3421 = sld [smem:[#allocation12 + $0x5]]
    %s3422 = sld [smem:[#allocation12 + $0x6]]
    %s3423 = sld [smem:[#allocation12 + $0x7]]
    %s3424 = sld [smem:[#allocation12 + $0x8]]
    %s3425 = sld [smem:[#allocation12 + $0x9]]
    %s3426 = sld [smem:[#allocation12 + $0xa]]
    %s3427 = sld [smem:[#allocation12 + $0xb]]
    %s3428 = sld [smem:[#allocation12 + $0xc]]
    %s3429 = sld [smem:[#allocation12 + $0xd]]
    %s3430 = sld [smem:[#allocation12 + $0xe]]
    %s3431 = sld [smem:[#allocation12 + $0xf]]
    %s3432 = sld [smem:[#allocation12 + $0x10]]
    %s3433 = sld [smem:[#allocation12 + $0x11]]
    %s3434 = sld [smem:[#allocation12 + $0x12]]
    %s3435 = sld [smem:[#allocation12 + $0x13]]
    %s3436 = sld [smem:[#allocation12 + $0x14]]
    %s3437 = sld [smem:[#allocation12 + $0x15]]
    %s3438 = sld [smem:[#allocation12 + $0x16]]
    %s3439 = sld [smem:[#allocation12 + $0x17]]
    %s3440 = sld [smem:[#allocation12 + $0x18]]
    %s3441 = sld [smem:[#allocation12 + $0x19]]
    %s3442 = sld [smem:[#allocation12 + $0x1a]]
    %s3443 = sld [smem:[#allocation12 + $0x1b]]
    %s3444 = sld [smem:[#allocation12 + $0x1c]]
    %s3445 = sld [smem:[#allocation12 + $0x1d]]
    %s3446 = sld [smem:[#allocation12 + $0x1e]]
    %s3447 = sld [smem:[#allocation12 + $0x1f]]
    %s3448 = sld [smem:[#allocation6]]
    %v3449 = vld [vmem:[#allocation5] sm:$0xff]
    %v3450 = vld [vmem:[#allocation5 + $0x8] sm:$0xff]
    %v3451 = vld [vmem:[#allocation5 + $0x10] sm:$0xff]
    %v3452 = vld [vmem:[#allocation5 + $0x18] sm:$0xff]
    %3454 = vset.pattern.permute.xlu0 0
    %3455 = vperm.xlu0 %3454, %v3342
    %v3456 = vpop.permute.xlu0 %3455
    %v3458 = vperm.slane %v3449, 0
    %v3459 = vadd.f32 %v3456, %v3458
    %v3460 = vtanh.pop %v3459
    %v3461 = vstv %s3416
    %v3462 = vmul.f32 %v3461, %v3460
    %v3463 = vadd.f32 %v3462, 0.0
    %3464 = vset.pattern.permute.xlu0 1
    %3465 = vperm.xlu0 %3464, %v3342
    %v3466 = vpop.permute.xlu0 %3465
    %v3468 = vperm.slane %v3449, 1
    %v3469 = vadd.f32 %v3466, %v3468
    %v3470 = vtanh.pop %v3469
    %v3471 = vstv %s3417
    %v3472 = vmul.f32 %v3471, %v3470
    %v3473 = vadd.f32 %v3463, %v3472
    %3474 = vset.pattern.permute.xlu0 2
    %3475 = vperm.xlu0 %3474, %v3342
    %v3476 = vpop.permute.xlu0 %3475
    %v3478 = vperm.slane %v3449, 2
    %v3479 = vadd.f32 %v3476, %v3478
    %v3480 = vtanh.pop %v3479
    %v3481 = vstv %s3418
    %v3482 = vmul.f32 %v3481, %v3480
    %v3483 = vadd.f32 %v3473, %v3482
    %3484 = vset.pattern.permute.xlu0 3
    %3485 = vperm.xlu0 %3484, %v3342
    %v3486 = vpop.permute.xlu0 %3485
    %v3488 = vperm.slane %v3449, 3
    %v3489 = vadd.f32 %v3486, %v3488
    %v3490 = vtanh.pop %v3489
    %v3491 = vstv %s3419
    %v3492 = vmul.f32 %v3491, %v3490
    %v3493 = vadd.f32 %v3483, %v3492
    %3494 = vset.pattern.permute.xlu0 4
    %3495 = vperm.xlu0 %3494, %v3342
    %v3496 = vpop.permute.xlu0 %3495
    %v3498 = vperm.slane %v3449, 4
    %v3499 = vadd.f32 %v3496, %v3498
    %v3500 = vtanh.pop %v3499
    %v3501 = vstv %s3420
    %v3502 = vmul.f32 %v3501, %v3500
    %v3503 = vadd.f32 %v3493, %v3502
    %3504 = vset.pattern.permute.xlu0 5
    %3505 = vperm.xlu0 %3504, %v3342
    %v3506 = vpop.permute.xlu0 %3505
    %v3508 = vperm.slane %v3449, 5
    %v3509 = vadd.f32 %v3506, %v3508
    %v3510 = vtanh.pop %v3509
    %v3511 = vstv %s3421
    %v3512 = vmul.f32 %v3511, %v3510
    %v3513 = vadd.f32 %v3503, %v3512
    %3514 = vset.pattern.permute.xlu0 6
    %3515 = vperm.xlu0 %3514, %v3342
    %v3516 = vpop.permute.xlu0 %3515
    %v3518 = vperm.slane %v3449, 6
    %v3519 = vadd.f32 %v3516, %v3518
    %v3520 = vtanh.pop %v3519
    %v3521 = vstv %s3422
    %v3522 = vmul.f32 %v3521, %v3520
    %v3523 = vadd.f32 %v3513, %v3522
    %3524 = vset.pattern.permute.xlu0 7
    %3525 = vperm.xlu0 %3524, %v3342
    %v3526 = vpop.permute.xlu0 %3525
    %v3528 = vperm.slane %v3449, 7
    %v3529 = vadd.f32 %v3526, %v3528
    %v3530 = vtanh.pop %v3529
    %v3531 = vstv %s3423
    %v3532 = vmul.f32 %v3531, %v3530
    %v3533 = vadd.f32 %v3523, %v3532
    %3534 = vset.pattern.permute.xlu0 8
    %3535 = vperm.xlu0 %3534, %v3342
    %v3536 = vpop.permute.xlu0 %3535
    %v3538 = vperm.slane %v3450, 0
    %v3539 = vadd.f32 %v3536, %v3538
    %v3540 = vtanh.pop %v3539
    %v3541 = vstv %s3424
    %v3542 = vmul.f32 %v3541, %v3540
    %v3543 = vadd.f32 %v3533, %v3542
    %3544 = vset.pattern.permute.xlu0 9
    %3545 = vperm.xlu0 %3544, %v3342
    %v3546 = vpop.permute.xlu0 %3545
    %v3548 = vperm.slane %v3450, 1
    %v3549 = vadd.f32 %v3546, %v3548
    %v3550 = vtanh.pop %v3549
    %v3551 = vstv %s3425
    %v3552 = vmul.f32 %v3551, %v3550
    %v3553 = vadd.f32 %v3543, %v3552
    %3554 = vset.pattern.permute.xlu0 10
    %3555 = vperm.xlu0 %3554, %v3342
    %v3556 = vpop.permute.xlu0 %3555
    %v3558 = vperm.slane %v3450, 2
    %v3559 = vadd.f32 %v3556, %v3558
    %v3560 = vtanh.pop %v3559
    %v3561 = vstv %s3426
    %v3562 = vmul.f32 %v3561, %v3560
    %v3563 = vadd.f32 %v3553, %v3562
    %3564 = vset.pattern.permute.xlu0 11
    %3565 = vperm.xlu0 %3564, %v3342
    %v3566 = vpop.permute.xlu0 %3565
    %v3568 = vperm.slane %v3450, 3
    %v3569 = vadd.f32 %v3566, %v3568
    %v3570 = vtanh.pop %v3569
    %v3571 = vstv %s3427
    %v3572 = vmul.f32 %v3571, %v3570
    %v3573 = vadd.f32 %v3563, %v3572
    %3574 = vset.pattern.permute.xlu0 12
    %3575 = vperm.xlu0 %3574, %v3342
    %v3576 = vpop.permute.xlu0 %3575
    %v3578 = vperm.slane %v3450, 4
    %v3579 = vadd.f32 %v3576, %v3578
    %v3580 = vtanh.pop %v3579
    %v3581 = vstv %s3428
    %v3582 = vmul.f32 %v3581, %v3580
    %v3583 = vadd.f32 %v3573, %v3582
    %3584 = vset.pattern.permute.xlu0 13
    %3585 = vperm.xlu0 %3584, %v3342
    %v3586 = vpop.permute.xlu0 %3585
    %v3588 = vperm.slane %v3450, 5
    %v3589 = vadd.f32 %v3586, %v3588
    %v3590 = vtanh.pop %v3589
    %v3591 = vstv %s3429
    %v3592 = vmul.f32 %v3591, %v3590
    %v3593 = vadd.f32 %v3583, %v3592
    %3594 = vset.pattern.permute.xlu0 14
    %3595 = vperm.xlu0 %3594, %v3342
    %v3596 = vpop.permute.xlu0 %3595
    %v3598 = vperm.slane %v3450, 6
    %v3599 = vadd.f32 %v3596, %v3598
    %v3600 = vtanh.pop %v3599
    %v3601 = vstv %s3430
    %v3602 = vmul.f32 %v3601, %v3600
    %v3603 = vadd.f32 %v3593, %v3602
    %3604 = vset.pattern.permute.xlu0 15
    %3605 = vperm.xlu0 %3604, %v3342
    %v3606 = vpop.permute.xlu0 %3605
    %v3608 = vperm.slane %v3450, 7
    %v3609 = vadd.f32 %v3606, %v3608
    %v3610 = vtanh.pop %v3609
    %v3611 = vstv %s3431
    %v3612 = vmul.f32 %v3611, %v3610
    %v3613 = vadd.f32 %v3603, %v3612
    %3614 = vset.pattern.permute.xlu0 16
    %3615 = vperm.xlu0 %3614, %v3342
    %v3616 = vpop.permute.xlu0 %3615
    %v3618 = vperm.slane %v3451, 0
    %v3619 = vadd.f32 %v3616, %v3618
    %v3620 = vtanh.pop %v3619
    %v3621 = vstv %s3432
    %v3622 = vmul.f32 %v3621, %v3620
    %v3623 = vadd.f32 %v3613, %v3622
    %3624 = vset.pattern.permute.xlu0 17
    %3625 = vperm.xlu0 %3624, %v3342
    %v3626 = vpop.permute.xlu0 %3625
    %v3628 = vperm.slane %v3451, 1
    %v3629 = vadd.f32 %v3626, %v3628
    %v3630 = vtanh.pop %v3629
    %v3631 = vstv %s3433
    %v3632 = vmul.f32 %v3631, %v3630
    %v3633 = vadd.f32 %v3623, %v3632
    %3634 = vset.pattern.permute.xlu0 18
    %3635 = vperm.xlu0 %3634, %v3342
    %v3636 = vpop.permute.xlu0 %3635
    %v3638 = vperm.slane %v3451, 2
    %v3639 = vadd.f32 %v3636, %v3638
    %v3640 = vtanh.pop %v3639
    %v3641 = vstv %s3434
    %v3642 = vmul.f32 %v3641, %v3640
    %v3643 = vadd.f32 %v3633, %v3642
    %3644 = vset.pattern.permute.xlu0 19
    %3645 = vperm.xlu0 %3644, %v3342
    %v3646 = vpop.permute.xlu0 %3645
    %v3648 = vperm.slane %v3451, 3
    %v3649 = vadd.f32 %v3646, %v3648
    %v3650 = vtanh.pop %v3649
    %v3651 = vstv %s3435
    %v3652 = vmul.f32 %v3651, %v3650
    %v3653 = vadd.f32 %v3643, %v3652
    %3654 = vset.pattern.permute.xlu0 20
    %3655 = vperm.xlu0 %3654, %v3342
    %v3656 = vpop.permute.xlu0 %3655
    %v3658 = vperm.slane %v3451, 4
    %v3659 = vadd.f32 %v3656, %v3658
    %v3660 = vtanh.pop %v3659
    %v3661 = vstv %s3436
    %v3662 = vmul.f32 %v3661, %v3660
    %v3663 = vadd.f32 %v3653, %v3662
    %3664 = vset.pattern.permute.xlu0 21
    %3665 = vperm.xlu0 %3664, %v3342
    %v3666 = vpop.permute.xlu0 %3665
    %v3668 = vperm.slane %v3451, 5
    %v3669 = vadd.f32 %v3666, %v3668
    %v3670 = vtanh.pop %v3669
    %v3671 = vstv %s3437
    %v3672 = vmul.f32 %v3671, %v3670
    %v3673 = vadd.f32 %v3663, %v3672
    %3674 = vset.pattern.permute.xlu0 22
    %3675 = vperm.xlu0 %3674, %v3342
    %v3676 = vpop.permute.xlu0 %3675
    %v3678 = vperm.slane %v3451, 6
    %v3679 = vadd.f32 %v3676, %v3678
    %v3680 = vtanh.pop %v3679
    %v3681 = vstv %s3438
    %v3682 = vmul.f32 %v3681, %v3680
    %v3683 = vadd.f32 %v3673, %v3682
    %3684 = vset.pattern.permute.xlu0 23
    %3685 = vperm.xlu0 %3684, %v3342
    %v3686 = vpop.permute.xlu0 %3685
    %v3688 = vperm.slane %v3451, 7
    %v3689 = vadd.f32 %v3686, %v3688
    %v3690 = vtanh.pop %v3689
    %v3691 = vstv %s3439
    %v3692 = vmul.f32 %v3691, %v3690
    %v3693 = vadd.f32 %v3683, %v3692
    %3694 = vset.pattern.permute.xlu0 24
    %3695 = vperm.xlu0 %3694, %v3342
    %v3696 = vpop.permute.xlu0 %3695
    %v3698 = vperm.slane %v3452, 0
    %v3699 = vadd.f32 %v3696, %v3698
    %v3700 = vtanh.pop %v3699
    %v3701 = vstv %s3440
    %v3702 = vmul.f32 %v3701, %v3700
    %v3703 = vadd.f32 %v3693, %v3702
    %3704 = vset.pattern.permute.xlu0 25
    %3705 = vperm.xlu0 %3704, %v3342
    %v3706 = vpop.permute.xlu0 %3705
    %v3708 = vperm.slane %v3452, 1
    %v3709 = vadd.f32 %v3706, %v3708
    %v3710 = vtanh.pop %v3709
    %v3711 = vstv %s3441
    %v3712 = vmul.f32 %v3711, %v3710
    %v3713 = vadd.f32 %v3703, %v3712
    %3714 = vset.pattern.permute.xlu0 26
    %3715 = vperm.xlu0 %3714, %v3342
    %v3716 = vpop.permute.xlu0 %3715
    %v3718 = vperm.slane %v3452, 2
    %v3719 = vadd.f32 %v3716, %v3718
    %v3720 = vtanh.pop %v3719
    %v3721 = vstv %s3442
    %v3722 = vmul.f32 %v3721, %v3720
    %v3723 = vadd.f32 %v3713, %v3722
    %3724 = vset.pattern.permute.xlu0 27
    %3725 = vperm.xlu0 %3724, %v3342
    %v3726 = vpop.permute.xlu0 %3725
    %v3728 = vperm.slane %v3452, 3
    %v3729 = vadd.f32 %v3726, %v3728
    %v3730 = vtanh.pop %v3729
    %v3731 = vstv %s3443
    %v3732 = vmul.f32 %v3731, %v3730
    %v3733 = vadd.f32 %v3723, %v3732
    %3734 = vset.pattern.permute.xlu0 28
    %3735 = vperm.xlu0 %3734, %v3342
    %v3736 = vpop.permute.xlu0 %3735
    %v3738 = vperm.slane %v3452, 4
    %v3739 = vadd.f32 %v3736, %v3738
    %v3740 = vtanh.pop %v3739
    %v3741 = vstv %s3444
    %v3742 = vmul.f32 %v3741, %v3740
    %v3743 = vadd.f32 %v3733, %v3742
    %3744 = vset.pattern.permute.xlu0 29
    %3745 = vperm.xlu0 %3744, %v3342
    %v3746 = vpop.permute.xlu0 %3745
    %v3748 = vperm.slane %v3452, 5
    %v3749 = vadd.f32 %v3746, %v3748
    %v3750 = vtanh.pop %v3749
    %v3751 = vstv %s3445
    %v3752 = vmul.f32 %v3751, %v3750
    %v3753 = vadd.f32 %v3743, %v3752
    %3754 = vset.pattern.permute.xlu0 30
    %3755 = vperm.xlu0 %3754, %v3342
    %v3756 = vpop.permute.xlu0 %3755
    %v3758 = vperm.slane %v3452, 6
    %v3759 = vadd.f32 %v3756, %v3758
    %v3760 = vtanh.pop %v3759
    %v3761 = vstv %s3446
    %v3762 = vmul.f32 %v3761, %v3760
    %v3763 = vadd.f32 %v3753, %v3762
    %3764 = vset.pattern.permute.xlu0 31
    %3765 = vperm.xlu0 %3764, %v3342
    %v3766 = vpop.permute.xlu0 %3765
    %v3768 = vperm.slane %v3452, 7
    %v3769 = vadd.f32 %v3766, %v3768
    %v3770 = vtanh.pop %v3769
    %v3771 = vstv %s3447
    %v3772 = vmul.f32 %v3771, %v3770
    %v3773 = vadd.f32 %v3763, %v3772
    %v3774 = vstv %s3448
    %v3775 = vadd.f32 %v3773, %v3774
    %3776 = vst [vmem:[%s12] sm:$0xff] %v3775
    // Predicated region
    $region62: #{forward.1} parent=1 // pred_check
      _
    $region63: #{forward.1} parent=1 // pred_check_branch
      %3778 = sbr.rel (0) target = $region65
    $region64: #{forward.1} parent=1 // pred_region
      _
    $region65: #{forward.1} parent=1 // pred_fallthru
      _
    // Predicated region
    $region66: #{forward.1} parent=1 // pred_check
      _
    $region67: #{forward.1} parent=1 // pred_check_branch
      %3780 = sbr.rel (0) target = $region69
    $region68: #{forward.1} parent=1 // pred_region
      _
    $region69: #{forward.1} parent=1 // pred_fallthru
      _
    %3781 = vsyncpa [#allocation8], 1
    %3782 = vsyncpa [#allocation11], 1
    %3783 = vsyncpa [#allocation9], 1

</llo_original>
